<compile_context>
chip_gen: v5e
topology: v5e:2x2
jax: 0.10.0
libtpu: 0.0.40
codegen_flags: <defaults>
</compile_context>

<pallas_src>
import jax
import jax.numpy as jnp
from jax.experimental import pallas as pl
from jax.experimental.pallas import tpu as pltpu


_SQRT_2_OVER_PI = 0.7978845608028654


def _gelu_tanh(x):
    # TODO(synk): PyTorch nn.GELU() default is the exact erf form; erf has no
    # clean Mosaic lowering, so the tanh approximation is used here and in the
    # reference (max deviation ~1e-3).
    return 0.5 * x * (1.0 + jnp.tanh(_SQRT_2_OVER_PI * (x + 0.044715 * x * x * x)))


def _parity_odd(v_int32):
    """Elementwise (v % 2 == 1) for non-negative int32 using only f32 ops."""
    vf = v_int32.astype(jnp.float32)                 # exact for v < 2**24
    return (vf - 2.0 * jnp.floor(vf * 0.5)) > 0.5


def _make_fused_upblock_kernel(c_out, out_h, out_w):
    """Fused [ConvT(2,2) -> cat(skip) -> Conv3x3 -> GELU] per-batch kernel."""
    P, Q = out_h, out_w
    M = P * Q
    taps = [(dp, dq) for dp in (-1, 0, 1) for dq in (-1, 0, 1)]

    def kernel(xnn_ref, skip_ref, wup_ref, bup_ref, wall_ref, bc_ref, o_ref,
               u_scr, y_scr, z_scr):
        # xnn_ref : (1, Cin, M)    bf16  nearest-neighbour-upsampled x
        # skip_ref: (1, Cout, M)   f32
        # wup_ref : (4*Cout, Cin)  bf16  phase-packed ConvTranspose2d weight
        # bup_ref : (Cout, 1)      f32
        # wall_ref: (Cout, 18Cout) bf16  tap-packed Conv2d weight
        # bc_ref  : (Cout, 1)      f32
        # o_ref   : (1, Cout, M)   f32
        # u_scr   : (4*Cout, M)    f32   4 phase planes at output resolution
        # y_scr   : (Cout, M)      f32   upsampled activation y
        # z_scr   : (18*Cout, M)   bf16  staged rolled+masked [y, skip] taps

        # ---- Lane coordinates (generated in-kernel, nothing streamed from HBM).
        lane = jax.lax.broadcasted_iota(jnp.int32, (1, M), 1)
        # Row index p = lane // Q via comparison accumulation (avoids relying on
        # integer div/mod lowering inside Mosaic).
        # TODO(synk): for very large P switch to wrapper-provided coordinate
        # planes (or integer division) instead of the O(P) compare chain.
        p = jnp.zeros((1, M), jnp.int32)
        for r in range(1, P):
            p = p + jnp.where(lane >= r * Q, 1, 0)
        q = lane - Q * p
        pp_odd = _parity_odd(p)                      # output-row parity (ki)
        pq_odd = _parity_odd(q)                      # output-col parity (kj)

        # ---- Stage 1: 4-phase transposed-conv matmul at output resolution.
        u_scr[...] = jnp.dot(wup_ref[...], xnn_ref[0],
                             preferred_element_type=jnp.float32)

        # Depth-to-space == lane-wise select of the phase matching (p%2, q%2).
        u00 = u_scr[0 * c_out:1 * c_out, :]
        u01 = u_scr[1 * c_out:2 * c_out, :]
        u10 = u_scr[2 * c_out:3 * c_out, :]
        u11 = u_scr[3 * c_out:4 * c_out, :]
        y = jnp.where(pp_odd,
                      jnp.where(pq_odd, u11, u10),
                      jnp.where(pq_odd, u01, u00))
        y_scr[...] = y + bup_ref[...]

        # ---- Stage 2: stage 9 rolled + zero-pad-masked copies of [y, skip].
        for t, (dp, dq) in enumerate(taps):
            conds = []
            if dp == -1:
                conds.append(lane >= Q)              # p - 1 >= 0
            elif dp == 1:
                conds.append(lane < M - Q)           # p + 1 <= P - 1
            if dq == -1:
                conds.append(q >= 1)                 # q - 1 >= 0
            elif dq == 1:
                conds.append(q <= Q - 2)             # q + 1 <= Q - 1
            valid = None
            for cnd in conds:
                valid = cnd if valid is None else jnp.logical_and(valid, cnd)

            off = dp * Q + dq                        # flat-lane neighbour offset
            sh = (-off) % M                          # rolled[m] = z[m + off]
            yv = y_scr[...]
            sv = skip_ref[0]
            if sh:
                yv = pltpu.roll(yv, sh, axis=1)
                sv = pltpu.roll(sv, sh, axis=1)
            if valid is not None:
                yv = jnp.where(valid, yv, 0.0)
                sv = jnp.where(valid, sv, 0.0)
            r0 = t * 2 * c_out
            z_scr[r0:r0 + c_out, :] = yv.astype(jnp.bfloat16)
            z_scr[r0 + c_out:r0 + 2 * c_out, :] = sv.astype(jnp.bfloat16)

        # ---- One fat MXU matmul over all 9 taps and both channel groups.
        acc = jnp.dot(wall_ref[...], z_scr[...],
                      preferred_element_type=jnp.float32)
        o_ref[0] = _gelu_tanh(acc + bc_ref[...]).astype(o_ref.dtype)

    return kernel


def upblock_forward(x, skip, w_up, b_up, w_c, b_c):
    """Fused Pallas forward of UpBlock.

    x:    (B, Cin, H, W)         f32
    skip: (B, Cout, 2H, 2W)      f32
    w_up: (Cin, Cout, 2, 2)      f32  (PyTorch ConvTranspose2d weight layout)
    b_up: (Cout,)                f32
    w_c:  (Cout, 2*Cout, 3, 3)   f32  (PyTorch Conv2d weight layout)
    b_c:  (Cout,)                f32
    returns (B, Cout, 2H, 2W)    f32
    """
    B, Cin, H, W = x.shape
    Cout = w_up.shape[1]
    P, Q = 2 * H, 2 * W
    M = P * Q

    assert M % 128 == 0, "flattened output spatial dim must be lane-aligned"
    assert Cin % 8 == 0 and Cout % 8 == 0, "channel dims must be sublane-aligned"
    # TODO(synk): pad non-conforming shapes instead of asserting.

    # Nearest-neighbour upsample of the SMALLEST tensor (x) in the wrapper
    # (a cheap broadcast, fused with the bf16 cast); inside the kernel the
    # depth-to-space interleave then becomes a pure parity select.
    x_nn = jnp.broadcast_to(x[:, :, :, None, :, None],
                            (B, Cin, H, 2, W, 2)).reshape(B, Cin, M)
    x_nn = x_nn.astype(jnp.bfloat16)

    # Phase-packed ConvTranspose2d weight: row (2*ki+kj)*Cout + o <- w_up[c,o,ki,kj].
    w_up_r = jnp.transpose(w_up, (2, 3, 1, 0)).reshape(4 * Cout, Cin)
    w_up_r = w_up_r.astype(jnp.bfloat16)
    b_up_r = b_up.reshape(Cout, 1).astype(jnp.float32)

    # Tap-packed Conv2d weight: col t*2*Cout + c <- w_c[o, c, kh, kw], t = kh*3+kw.
    w_all = jnp.transpose(w_c, (0, 2, 3, 1)).reshape(Cout, 18 * Cout)
    w_all = w_all.astype(jnp.bfloat16)
    b_c_r = b_c.reshape(Cout, 1).astype(jnp.float32)

    skip2 = skip.reshape(B, Cout, M)                 # free (bitcast)

    out2 = pl.pallas_call(
        _make_fused_upblock_kernel(Cout, P, Q),
        out_shape=jax.ShapeDtypeStruct((B, Cout, M), jnp.float32),
        grid_spec=pltpu.PrefetchScalarGridSpec(
            num_scalar_prefetch=0,
            grid=(B,),
            in_specs=[
                pl.BlockSpec((1, Cin, M), lambda b: (b, 0, 0)),
                pl.BlockSpec((1, Cout, M), lambda b: (b, 0, 0)),
                pl.BlockSpec((4 * Cout, Cin), lambda b: (0, 0)),
                pl.BlockSpec((Cout, 1), lambda b: (0, 0)),
                pl.BlockSpec((Cout, 18 * Cout), lambda b: (0, 0)),
                pl.BlockSpec((Cout, 1), lambda b: (0, 0)),
            ],
            out_specs=pl.BlockSpec((1, Cout, M), lambda b: (b, 0, 0)),
            scratch_shapes=[
                pltpu.VMEM((4 * Cout, M), jnp.float32),
                pltpu.VMEM((Cout, M), jnp.float32),
                pltpu.VMEM((18 * Cout, M), jnp.bfloat16),
            ],
        ),
        compiler_params=pltpu.CompilerParams(
            dimension_semantics=("parallel",),
            # A few MiB used per step; cap comfortably inside every
            # generation's budget (v5e/v6e scoped defaults 16/32 MiB,
            # v7x physical 64 MiB).
            vmem_limit_bytes=32 * 1024 * 1024,
        ),
    )(x_nn, skip2, w_up_r, b_up_r, w_all, b_c_r)

    # TODO(synk): for large feature maps add a spatial row-tile grid axis with
    # halo rows (also keeps both v7x TensorCores busy when B == 1).
    return out2.reshape(B, Cout, P, Q)


# ---------------------------------------------------------------------------
# Pure-JAX reference (same semantics as the PyTorch forward, tanh-GELU).
# ---------------------------------------------------------------------------
def upblock_reference(x, skip, w_up, b_up, w_c, b_c):
    B, Cin, H, W = x.shape
    Cout = w_up.shape[1]
    P, Q = 2 * H, 2 * W
    hi = jax.lax.Precision.HIGHEST
    u = jnp.einsum("bcij,coxy->boixjy", x, w_up, precision=hi)
    y = u.reshape(B, Cout, P, Q) + b_up[None, :, None, None]
    z = jnp.concatenate([y, skip], axis=1)
    zp = jnp.pad(z, ((0, 0), (0, 0), (1, 1), (1, 1)))
    out = jnp.zeros((B, Cout, P, Q), jnp.float32) + b_c[None, :, None, None]
    for kh in range(3):
        for kw in range(3):
            out = out + jnp.einsum("bcpq,oc->bopq",
                                   zp[:, :, kh:kh + P, kw:kw + Q],
                                   w_c[:, :, kh, kw], precision=hi)
    return _gelu_tanh(out)


if __name__ == "__main__":
    # Small UpBlock-like shapes: in_ch=32 -> out_ch=16, spatial 16x16 -> 32x32.
    B, Cin, Cout, H, W = 2, 32, 16, 16, 16

    key = jax.random.PRNGKey(0)
    kx, ks, k1, k2, k3, k4 = jax.random.split(key, 6)

    x = jax.random.normal(kx, (B, Cin, H, W), dtype=jnp.float32)
    skip = jax.random.normal(ks, (B, Cout, 2 * H, 2 * W), dtype=jnp.float32)

    bnd_up = 1.0 / (Cin * 2 * 2) ** 0.5
    w_up = jax.random.uniform(k1, (Cin, Cout, 2, 2), minval=-bnd_up,
                              maxval=bnd_up, dtype=jnp.float32)
    b_up = jax.random.uniform(k2, (Cout,), minval=-bnd_up, maxval=bnd_up,
                              dtype=jnp.float32)
    bnd_c = 1.0 / (2 * Cout * 3 * 3) ** 0.5
    w_c = jax.random.uniform(k3, (Cout, 2 * Cout, 3, 3), minval=-bnd_c,
                             maxval=bnd_c, dtype=jnp.float32)
    b_c = jax.random.uniform(k4, (Cout,), minval=-bnd_c, maxval=bnd_c,
                             dtype=jnp.float32)

    fwd = jax.jit(upblock_forward)
    out = fwd(x, skip, w_up, b_up, w_c, b_c)
    jax.block_until_ready(out)

    ref = upblock_reference(x, skip, w_up, b_up, w_c, b_c)
    assert out.shape == (B, Cout, 2 * H, 2 * W)
    # Tolerance accommodates bf16 MXU operands (expected max abs err ~1e-3);
    # structural errors (wrong tap/shift/mask/phase) would be O(0.1-1).
    err = float(jnp.max(jnp.abs(out - ref)))
    assert err < 2e-2, f"max abs error {err}"
    print("KERNEL_OK")
</pallas_src>

<mosaic_0001>
module attributes {stable_mosaic.version = 11 : i64} {
  func.func @kernel(%arg0: i32, %arg1: memref<1x32x1024xbf16, #tpu.memory_space<vmem>>, %arg2: memref<1x16x1024xf32, #tpu.memory_space<vmem>>, %arg3: memref<64x32xbf16, #tpu.memory_space<vmem>>, %arg4: memref<16x1xf32, #tpu.memory_space<vmem>>, %arg5: memref<16x288xbf16, #tpu.memory_space<vmem>>, %arg6: memref<16x1xf32, #tpu.memory_space<vmem>>, %arg7: memref<1x16x1024xf32, #tpu.memory_space<vmem>>, %arg8: memref<64x1024xf32, #tpu.memory_space<vmem>>, %arg9: memref<16x1024xf32, #tpu.memory_space<vmem>>, %arg10: memref<288x1024xbf16, #tpu.memory_space<vmem>>) attributes {dimension_semantics = [#tpu.dimension_semantics<parallel>], iteration_bounds = array<i64: 2>, scalar_prefetch = 0 : i64, scratch_operands = 3 : i64, tpu.core_type = #tpu.core_type<tc>, window_params = [{transform_indices = @transform_0, window_bounds = array<i64: 1, 32, 1024>}, {transform_indices = @transform_1, window_bounds = array<i64: 1, 16, 1024>}, {pipeline_mode = #tpu.pipeline_mode<synchronous>, transform_indices = @transform_2, window_bounds = array<i64: 64, 32>}, {pipeline_mode = #tpu.pipeline_mode<synchronous>, transform_indices = @transform_3, window_bounds = array<i64: 16, 1>}, {pipeline_mode = #tpu.pipeline_mode<synchronous>, transform_indices = @transform_4, window_bounds = array<i64: 16, 288>}, {pipeline_mode = #tpu.pipeline_mode<synchronous>, transform_indices = @transform_5, window_bounds = array<i64: 16, 1>}, {transform_indices = @transform_6, window_bounds = array<i64: 1, 16, 1024>}]} {
    %0 = tpu.iota {dimensions = array<i32: 1>} : vector<1x1024xi32>
    %c0_i32 = arith.constant 0 : i32
    %1 = vector.broadcast %c0_i32 : i32 to vector<1x1024xi32>
    %c32_i32 = arith.constant 32 : i32
    %2 = vector.broadcast %c32_i32 : i32 to vector<1x1024xi32>
    %3 = arith.cmpi sge, %0, %2 : vector<1x1024xi32>
    %c1_i32 = arith.constant 1 : i32
    %c0_i32_0 = arith.constant 0 : i32
    %4 = vector.broadcast %c1_i32 : i32 to vector<1x1024xi32>
    %5 = vector.broadcast %c0_i32_0 : i32 to vector<1x1024xi32>
    %6 = arith.select %3, %4, %5 : vector<1x1024xi1>, vector<1x1024xi32>
    %7 = arith.addi %1, %6 : vector<1x1024xi32>
    %c64_i32 = arith.constant 64 : i32
    %8 = vector.broadcast %c64_i32 : i32 to vector<1x1024xi32>
    %9 = arith.cmpi sge, %0, %8 : vector<1x1024xi32>
    %c1_i32_1 = arith.constant 1 : i32
    %c0_i32_2 = arith.constant 0 : i32
    %10 = vector.broadcast %c1_i32_1 : i32 to vector<1x1024xi32>
    %11 = vector.broadcast %c0_i32_2 : i32 to vector<1x1024xi32>
    %12 = arith.select %9, %10, %11 : vector<1x1024xi1>, vector<1x1024xi32>
    %13 = arith.addi %7, %12 : vector<1x1024xi32>
    %c96_i32 = arith.constant 96 : i32
    %14 = vector.broadcast %c96_i32 : i32 to vector<1x1024xi32>
    %15 = arith.cmpi sge, %0, %14 : vector<1x1024xi32>
    %c1_i32_3 = arith.constant 1 : i32
    %c0_i32_4 = arith.constant 0 : i32
    %16 = vector.broadcast %c1_i32_3 : i32 to vector<1x1024xi32>
    %17 = vector.broadcast %c0_i32_4 : i32 to vector<1x1024xi32>
    %18 = arith.select %15, %16, %17 : vector<1x1024xi1>, vector<1x1024xi32>
    %19 = arith.addi %13, %18 : vector<1x1024xi32>
    %c128_i32 = arith.constant 128 : i32
    %20 = vector.broadcast %c128_i32 : i32 to vector<1x1024xi32>
    %21 = arith.cmpi sge, %0, %20 : vector<1x1024xi32>
    %c1_i32_5 = arith.constant 1 : i32
    %c0_i32_6 = arith.constant 0 : i32
    %22 = vector.broadcast %c1_i32_5 : i32 to vector<1x1024xi32>
    %23 = vector.broadcast %c0_i32_6 : i32 to vector<1x1024xi32>
    %24 = arith.select %21, %22, %23 : vector<1x1024xi1>, vector<1x1024xi32>
    %25 = arith.addi %19, %24 : vector<1x1024xi32>
    %c160_i32 = arith.constant 160 : i32
    %26 = vector.broadcast %c160_i32 : i32 to vector<1x1024xi32>
    %27 = arith.cmpi sge, %0, %26 : vector<1x1024xi32>
    %c1_i32_7 = arith.constant 1 : i32
    %c0_i32_8 = arith.constant 0 : i32
    %28 = vector.broadcast %c1_i32_7 : i32 to vector<1x1024xi32>
    %29 = vector.broadcast %c0_i32_8 : i32 to vector<1x1024xi32>
    %30 = arith.select %27, %28, %29 : vector<1x1024xi1>, vector<1x1024xi32>
    %31 = arith.addi %25, %30 : vector<1x1024xi32>
    %c192_i32 = arith.constant 192 : i32
    %32 = vector.broadcast %c192_i32 : i32 to vector<1x1024xi32>
    %33 = arith.cmpi sge, %0, %32 : vector<1x1024xi32>
    %c1_i32_9 = arith.constant 1 : i32
    %c0_i32_10 = arith.constant 0 : i32
    %34 = vector.broadcast %c1_i32_9 : i32 to vector<1x1024xi32>
    %35 = vector.broadcast %c0_i32_10 : i32 to vector<1x1024xi32>
    %36 = arith.select %33, %34, %35 : vector<1x1024xi1>, vector<1x1024xi32>
    %37 = arith.addi %31, %36 : vector<1x1024xi32>
    %c224_i32 = arith.constant 224 : i32
    %38 = vector.broadcast %c224_i32 : i32 to vector<1x1024xi32>
    %39 = arith.cmpi sge, %0, %38 : vector<1x1024xi32>
    %c1_i32_11 = arith.constant 1 : i32
    %c0_i32_12 = arith.constant 0 : i32
    %40 = vector.broadcast %c1_i32_11 : i32 to vector<1x1024xi32>
    %41 = vector.broadcast %c0_i32_12 : i32 to vector<1x1024xi32>
    %42 = arith.select %39, %40, %41 : vector<1x1024xi1>, vector<1x1024xi32>
    %43 = arith.addi %37, %42 : vector<1x1024xi32>
    %c256_i32 = arith.constant 256 : i32
    %44 = vector.broadcast %c256_i32 : i32 to vector<1x1024xi32>
    %45 = arith.cmpi sge, %0, %44 : vector<1x1024xi32>
    %c1_i32_13 = arith.constant 1 : i32
    %c0_i32_14 = arith.constant 0 : i32
    %46 = vector.broadcast %c1_i32_13 : i32 to vector<1x1024xi32>
    %47 = vector.broadcast %c0_i32_14 : i32 to vector<1x1024xi32>
    %48 = arith.select %45, %46, %47 : vector<1x1024xi1>, vector<1x1024xi32>
    %49 = arith.addi %43, %48 : vector<1x1024xi32>
    %c288_i32 = arith.constant 288 : i32
    %50 = vector.broadcast %c288_i32 : i32 to vector<1x1024xi32>
    %51 = arith.cmpi sge, %0, %50 : vector<1x1024xi32>
    %c1_i32_15 = arith.constant 1 : i32
    %c0_i32_16 = arith.constant 0 : i32
    %52 = vector.broadcast %c1_i32_15 : i32 to vector<1x1024xi32>
    %53 = vector.broadcast %c0_i32_16 : i32 to vector<1x1024xi32>
    %54 = arith.select %51, %52, %53 : vector<1x1024xi1>, vector<1x1024xi32>
    %55 = arith.addi %49, %54 : vector<1x1024xi32>
    %c320_i32 = arith.constant 320 : i32
    %56 = vector.broadcast %c320_i32 : i32 to vector<1x1024xi32>
    %57 = arith.cmpi sge, %0, %56 : vector<1x1024xi32>
    %c1_i32_17 = arith.constant 1 : i32
    %c0_i32_18 = arith.constant 0 : i32
    %58 = vector.broadcast %c1_i32_17 : i32 to vector<1x1024xi32>
    %59 = vector.broadcast %c0_i32_18 : i32 to vector<1x1024xi32>
    %60 = arith.select %57, %58, %59 : vector<1x1024xi1>, vector<1x1024xi32>
    %61 = arith.addi %55, %60 : vector<1x1024xi32>
    %c352_i32 = arith.constant 352 : i32
    %62 = vector.broadcast %c352_i32 : i32 to vector<1x1024xi32>
    %63 = arith.cmpi sge, %0, %62 : vector<1x1024xi32>
    %c1_i32_19 = arith.constant 1 : i32
    %c0_i32_20 = arith.constant 0 : i32
    %64 = vector.broadcast %c1_i32_19 : i32 to vector<1x1024xi32>
    %65 = vector.broadcast %c0_i32_20 : i32 to vector<1x1024xi32>
    %66 = arith.select %63, %64, %65 : vector<1x1024xi1>, vector<1x1024xi32>
    %67 = arith.addi %61, %66 : vector<1x1024xi32>
    %c384_i32 = arith.constant 384 : i32
    %68 = vector.broadcast %c384_i32 : i32 to vector<1x1024xi32>
    %69 = arith.cmpi sge, %0, %68 : vector<1x1024xi32>
    %c1_i32_21 = arith.constant 1 : i32
    %c0_i32_22 = arith.constant 0 : i32
    %70 = vector.broadcast %c1_i32_21 : i32 to vector<1x1024xi32>
    %71 = vector.broadcast %c0_i32_22 : i32 to vector<1x1024xi32>
    %72 = arith.select %69, %70, %71 : vector<1x1024xi1>, vector<1x1024xi32>
    %73 = arith.addi %67, %72 : vector<1x1024xi32>
    %c416_i32 = arith.constant 416 : i32
    %74 = vector.broadcast %c416_i32 : i32 to vector<1x1024xi32>
    %75 = arith.cmpi sge, %0, %74 : vector<1x1024xi32>
    %c1_i32_23 = arith.constant 1 : i32
    %c0_i32_24 = arith.constant 0 : i32
    %76 = vector.broadcast %c1_i32_23 : i32 to vector<1x1024xi32>
    %77 = vector.broadcast %c0_i32_24 : i32 to vector<1x1024xi32>
    %78 = arith.select %75, %76, %77 : vector<1x1024xi1>, vector<1x1024xi32>
    %79 = arith.addi %73, %78 : vector<1x1024xi32>
    %c448_i32 = arith.constant 448 : i32
    %80 = vector.broadcast %c448_i32 : i32 to vector<1x1024xi32>
    %81 = arith.cmpi sge, %0, %80 : vector<1x1024xi32>
    %c1_i32_25 = arith.constant 1 : i32
    %c0_i32_26 = arith.constant 0 : i32
    %82 = vector.broadcast %c1_i32_25 : i32 to vector<1x1024xi32>
    %83 = vector.broadcast %c0_i32_26 : i32 to vector<1x1024xi32>
    %84 = arith.select %81, %82, %83 : vector<1x1024xi1>, vector<1x1024xi32>
    %85 = arith.addi %79, %84 : vector<1x1024xi32>
    %c480_i32 = arith.constant 480 : i32
    %86 = vector.broadcast %c480_i32 : i32 to vector<1x1024xi32>
    %87 = arith.cmpi sge, %0, %86 : vector<1x1024xi32>
    %c1_i32_27 = arith.constant 1 : i32
    %c0_i32_28 = arith.constant 0 : i32
    %88 = vector.broadcast %c1_i32_27 : i32 to vector<1x1024xi32>
    %89 = vector.broadcast %c0_i32_28 : i32 to vector<1x1024xi32>
    %90 = arith.select %87, %88, %89 : vector<1x1024xi1>, vector<1x1024xi32>
    %91 = arith.addi %85, %90 : vector<1x1024xi32>
    %c512_i32 = arith.constant 512 : i32
    %92 = vector.broadcast %c512_i32 : i32 to vector<1x1024xi32>
    %93 = arith.cmpi sge, %0, %92 : vector<1x1024xi32>
    %c1_i32_29 = arith.constant 1 : i32
    %c0_i32_30 = arith.constant 0 : i32
    %94 = vector.broadcast %c1_i32_29 : i32 to vector<1x1024xi32>
    %95 = vector.broadcast %c0_i32_30 : i32 to vector<1x1024xi32>
    %96 = arith.select %93, %94, %95 : vector<1x1024xi1>, vector<1x1024xi32>
    %97 = arith.addi %91, %96 : vector<1x1024xi32>
    %c544_i32 = arith.constant 544 : i32
    %98 = vector.broadcast %c544_i32 : i32 to vector<1x1024xi32>
    %99 = arith.cmpi sge, %0, %98 : vector<1x1024xi32>
    %c1_i32_31 = arith.constant 1 : i32
    %c0_i32_32 = arith.constant 0 : i32
    %100 = vector.broadcast %c1_i32_31 : i32 to vector<1x1024xi32>
    %101 = vector.broadcast %c0_i32_32 : i32 to vector<1x1024xi32>
    %102 = arith.select %99, %100, %101 : vector<1x1024xi1>, vector<1x1024xi32>
    %103 = arith.addi %97, %102 : vector<1x1024xi32>
    %c576_i32 = arith.constant 576 : i32
    %104 = vector.broadcast %c576_i32 : i32 to vector<1x1024xi32>
    %105 = arith.cmpi sge, %0, %104 : vector<1x1024xi32>
    %c1_i32_33 = arith.constant 1 : i32
    %c0_i32_34 = arith.constant 0 : i32
    %106 = vector.broadcast %c1_i32_33 : i32 to vector<1x1024xi32>
    %107 = vector.broadcast %c0_i32_34 : i32 to vector<1x1024xi32>
    %108 = arith.select %105, %106, %107 : vector<1x1024xi1>, vector<1x1024xi32>
    %109 = arith.addi %103, %108 : vector<1x1024xi32>
    %c608_i32 = arith.constant 608 : i32
    %110 = vector.broadcast %c608_i32 : i32 to vector<1x1024xi32>
    %111 = arith.cmpi sge, %0, %110 : vector<1x1024xi32>
    %c1_i32_35 = arith.constant 1 : i32
    %c0_i32_36 = arith.constant 0 : i32
    %112 = vector.broadcast %c1_i32_35 : i32 to vector<1x1024xi32>
    %113 = vector.broadcast %c0_i32_36 : i32 to vector<1x1024xi32>
    %114 = arith.select %111, %112, %113 : vector<1x1024xi1>, vector<1x1024xi32>
    %115 = arith.addi %109, %114 : vector<1x1024xi32>
    %c640_i32 = arith.constant 640 : i32
    %116 = vector.broadcast %c640_i32 : i32 to vector<1x1024xi32>
    %117 = arith.cmpi sge, %0, %116 : vector<1x1024xi32>
    %c1_i32_37 = arith.constant 1 : i32
    %c0_i32_38 = arith.constant 0 : i32
    %118 = vector.broadcast %c1_i32_37 : i32 to vector<1x1024xi32>
    %119 = vector.broadcast %c0_i32_38 : i32 to vector<1x1024xi32>
    %120 = arith.select %117, %118, %119 : vector<1x1024xi1>, vector<1x1024xi32>
    %121 = arith.addi %115, %120 : vector<1x1024xi32>
    %c672_i32 = arith.constant 672 : i32
    %122 = vector.broadcast %c672_i32 : i32 to vector<1x1024xi32>
    %123 = arith.cmpi sge, %0, %122 : vector<1x1024xi32>
    %c1_i32_39 = arith.constant 1 : i32
    %c0_i32_40 = arith.constant 0 : i32
    %124 = vector.broadcast %c1_i32_39 : i32 to vector<1x1024xi32>
    %125 = vector.broadcast %c0_i32_40 : i32 to vector<1x1024xi32>
    %126 = arith.select %123, %124, %125 : vector<1x1024xi1>, vector<1x1024xi32>
    %127 = arith.addi %121, %126 : vector<1x1024xi32>
    %c704_i32 = arith.constant 704 : i32
    %128 = vector.broadcast %c704_i32 : i32 to vector<1x1024xi32>
    %129 = arith.cmpi sge, %0, %128 : vector<1x1024xi32>
    %c1_i32_41 = arith.constant 1 : i32
    %c0_i32_42 = arith.constant 0 : i32
    %130 = vector.broadcast %c1_i32_41 : i32 to vector<1x1024xi32>
    %131 = vector.broadcast %c0_i32_42 : i32 to vector<1x1024xi32>
    %132 = arith.select %129, %130, %131 : vector<1x1024xi1>, vector<1x1024xi32>
    %133 = arith.addi %127, %132 : vector<1x1024xi32>
    %c736_i32 = arith.constant 736 : i32
    %134 = vector.broadcast %c736_i32 : i32 to vector<1x1024xi32>
    %135 = arith.cmpi sge, %0, %134 : vector<1x1024xi32>
    %c1_i32_43 = arith.constant 1 : i32
    %c0_i32_44 = arith.constant 0 : i32
    %136 = vector.broadcast %c1_i32_43 : i32 to vector<1x1024xi32>
    %137 = vector.broadcast %c0_i32_44 : i32 to vector<1x1024xi32>
    %138 = arith.select %135, %136, %137 : vector<1x1024xi1>, vector<1x1024xi32>
    %139 = arith.addi %133, %138 : vector<1x1024xi32>
    %c768_i32 = arith.constant 768 : i32
    %140 = vector.broadcast %c768_i32 : i32 to vector<1x1024xi32>
    %141 = arith.cmpi sge, %0, %140 : vector<1x1024xi32>
    %c1_i32_45 = arith.constant 1 : i32
    %c0_i32_46 = arith.constant 0 : i32
    %142 = vector.broadcast %c1_i32_45 : i32 to vector<1x1024xi32>
    %143 = vector.broadcast %c0_i32_46 : i32 to vector<1x1024xi32>
    %144 = arith.select %141, %142, %143 : vector<1x1024xi1>, vector<1x1024xi32>
    %145 = arith.addi %139, %144 : vector<1x1024xi32>
    %c800_i32 = arith.constant 800 : i32
    %146 = vector.broadcast %c800_i32 : i32 to vector<1x1024xi32>
    %147 = arith.cmpi sge, %0, %146 : vector<1x1024xi32>
    %c1_i32_47 = arith.constant 1 : i32
    %c0_i32_48 = arith.constant 0 : i32
    %148 = vector.broadcast %c1_i32_47 : i32 to vector<1x1024xi32>
    %149 = vector.broadcast %c0_i32_48 : i32 to vector<1x1024xi32>
    %150 = arith.select %147, %148, %149 : vector<1x1024xi1>, vector<1x1024xi32>
    %151 = arith.addi %145, %150 : vector<1x1024xi32>
    %c832_i32 = arith.constant 832 : i32
    %152 = vector.broadcast %c832_i32 : i32 to vector<1x1024xi32>
    %153 = arith.cmpi sge, %0, %152 : vector<1x1024xi32>
    %c1_i32_49 = arith.constant 1 : i32
    %c0_i32_50 = arith.constant 0 : i32
    %154 = vector.broadcast %c1_i32_49 : i32 to vector<1x1024xi32>
    %155 = vector.broadcast %c0_i32_50 : i32 to vector<1x1024xi32>
    %156 = arith.select %153, %154, %155 : vector<1x1024xi1>, vector<1x1024xi32>
    %157 = arith.addi %151, %156 : vector<1x1024xi32>
    %c864_i32 = arith.constant 864 : i32
    %158 = vector.broadcast %c864_i32 : i32 to vector<1x1024xi32>
    %159 = arith.cmpi sge, %0, %158 : vector<1x1024xi32>
    %c1_i32_51 = arith.constant 1 : i32
    %c0_i32_52 = arith.constant 0 : i32
    %160 = vector.broadcast %c1_i32_51 : i32 to vector<1x1024xi32>
    %161 = vector.broadcast %c0_i32_52 : i32 to vector<1x1024xi32>
    %162 = arith.select %159, %160, %161 : vector<1x1024xi1>, vector<1x1024xi32>
    %163 = arith.addi %157, %162 : vector<1x1024xi32>
    %c896_i32 = arith.constant 896 : i32
    %164 = vector.broadcast %c896_i32 : i32 to vector<1x1024xi32>
    %165 = arith.cmpi sge, %0, %164 : vector<1x1024xi32>
    %c1_i32_53 = arith.constant 1 : i32
    %c0_i32_54 = arith.constant 0 : i32
    %166 = vector.broadcast %c1_i32_53 : i32 to vector<1x1024xi32>
    %167 = vector.broadcast %c0_i32_54 : i32 to vector<1x1024xi32>
    %168 = arith.select %165, %166, %167 : vector<1x1024xi1>, vector<1x1024xi32>
    %169 = arith.addi %163, %168 : vector<1x1024xi32>
    %c928_i32 = arith.constant 928 : i32
    %170 = vector.broadcast %c928_i32 : i32 to vector<1x1024xi32>
    %171 = arith.cmpi sge, %0, %170 : vector<1x1024xi32>
    %c1_i32_55 = arith.constant 1 : i32
    %c0_i32_56 = arith.constant 0 : i32
    %172 = vector.broadcast %c1_i32_55 : i32 to vector<1x1024xi32>
    %173 = vector.broadcast %c0_i32_56 : i32 to vector<1x1024xi32>
    %174 = arith.select %171, %172, %173 : vector<1x1024xi1>, vector<1x1024xi32>
    %175 = arith.addi %169, %174 : vector<1x1024xi32>
    %c960_i32 = arith.constant 960 : i32
    %176 = vector.broadcast %c960_i32 : i32 to vector<1x1024xi32>
    %177 = arith.cmpi sge, %0, %176 : vector<1x1024xi32>
    %c1_i32_57 = arith.constant 1 : i32
    %c0_i32_58 = arith.constant 0 : i32
    %178 = vector.broadcast %c1_i32_57 : i32 to vector<1x1024xi32>
    %179 = vector.broadcast %c0_i32_58 : i32 to vector<1x1024xi32>
    %180 = arith.select %177, %178, %179 : vector<1x1024xi1>, vector<1x1024xi32>
    %181 = arith.addi %175, %180 : vector<1x1024xi32>
    %c992_i32 = arith.constant 992 : i32
    %182 = vector.broadcast %c992_i32 : i32 to vector<1x1024xi32>
    %183 = arith.cmpi sge, %0, %182 : vector<1x1024xi32>
    %c1_i32_59 = arith.constant 1 : i32
    %c0_i32_60 = arith.constant 0 : i32
    %184 = vector.broadcast %c1_i32_59 : i32 to vector<1x1024xi32>
    %185 = vector.broadcast %c0_i32_60 : i32 to vector<1x1024xi32>
    %186 = arith.select %183, %184, %185 : vector<1x1024xi1>, vector<1x1024xi32>
    %187 = arith.addi %181, %186 : vector<1x1024xi32>
    %c32_i32_61 = arith.constant 32 : i32
    %188 = vector.broadcast %c32_i32_61 : i32 to vector<1x1024xi32>
    %189 = arith.muli %188, %187 : vector<1x1024xi32>
    %190 = arith.subi %0, %189 : vector<1x1024xi32>
    %191 = arith.sitofp %187 : vector<1x1024xi32> to vector<1x1024xf32>
    %cst = arith.constant 5.000000e-01 : f32
    %192 = vector.broadcast %cst : f32 to vector<1x1024xf32>
    %193 = arith.mulf %191, %192 : vector<1x1024xf32>
    %194 = math.floor %193 : vector<1x1024xf32>
    %cst_62 = arith.constant 2.000000e+00 : f32
    %195 = vector.broadcast %cst_62 : f32 to vector<1x1024xf32>
    %196 = arith.mulf %195, %194 : vector<1x1024xf32>
    %197 = arith.subf %191, %196 : vector<1x1024xf32>
    %cst_63 = arith.constant 5.000000e-01 : f32
    %198 = vector.broadcast %cst_63 : f32 to vector<1x1024xf32>
    %199 = arith.cmpf ogt, %197, %198 : vector<1x1024xf32>
    %200 = arith.sitofp %190 : vector<1x1024xi32> to vector<1x1024xf32>
    %cst_64 = arith.constant 5.000000e-01 : f32
    %201 = vector.broadcast %cst_64 : f32 to vector<1x1024xf32>
    %202 = arith.mulf %200, %201 : vector<1x1024xf32>
    %203 = math.floor %202 : vector<1x1024xf32>
    %cst_65 = arith.constant 2.000000e+00 : f32
    %204 = vector.broadcast %cst_65 : f32 to vector<1x1024xf32>
    %205 = arith.mulf %204, %203 : vector<1x1024xf32>
    %206 = arith.subf %200, %205 : vector<1x1024xf32>
    %cst_66 = arith.constant 5.000000e-01 : f32
    %207 = vector.broadcast %cst_66 : f32 to vector<1x1024xf32>
    %208 = arith.cmpf ogt, %206, %207 : vector<1x1024xf32>
    %c0 = arith.constant 0 : index
    %c0_67 = arith.constant 0 : index
    %209 = vector.load %arg3[%c0, %c0_67] : memref<64x32xbf16, #tpu.memory_space<vmem>>, vector<64x32xbf16>
    %c0_68 = arith.constant 0 : index
    %c0_69 = arith.constant 0 : index
    %c0_70 = arith.constant 0 : index
    %210 = vector.load %arg1[%c0_68, %c0_69, %c0_70] : memref<1x32x1024xbf16, #tpu.memory_space<vmem>>, vector<1x32x1024xbf16>
    %211 = vector.shape_cast %210 : vector<1x32x1024xbf16> to vector<32x1024xbf16>
    %cst_71 = arith.constant dense<0.000000e+00> : vector<64x1024xf32>
    %212 = tpu.matmul %209, %211, %cst_71 {dimension_numbers = #tpu.dot_dimension_numbers<[1], [0], [0], [1], [0, 0, 1, 1], [], []>} : vector<64x32xbf16>, vector<32x1024xbf16>, vector<64x1024xf32> -> vector<64x1024xf32>
    %c0_72 = arith.constant 0 : index
    %c0_73 = arith.constant 0 : index
    %213 = vector.load %arg8[%c0_72, %c0_73] : memref<64x1024xf32, #tpu.memory_space<vmem>>, vector<64x1024xf32>
    tpu.vector_store %arg8[%c0_72, %c0_73], %212 {strides = array<i32>} : memref<64x1024xf32, #tpu.memory_space<vmem>>, vector<64x1024xf32>,
    %c0_74 = arith.constant 0 : index
    %c0_75 = arith.constant 0 : index
    %214 = vector.load %arg8[%c0_74, %c0_75] : memref<64x1024xf32, #tpu.memory_space<vmem>>, vector<16x1024xf32>
    %c16 = arith.constant 16 : index
    %c0_76 = arith.constant 0 : index
    %215 = vector.load %arg8[%c16, %c0_76] : memref<64x1024xf32, #tpu.memory_space<vmem>>, vector<16x1024xf32>
    %c32 = arith.constant 32 : index
    %c0_77 = arith.constant 0 : index
    %216 = vector.load %arg8[%c32, %c0_77] : memref<64x1024xf32, #tpu.memory_space<vmem>>, vector<16x1024xf32>
    %c48 = arith.constant 48 : index
    %c0_78 = arith.constant 0 : index
    %217 = vector.load %arg8[%c48, %c0_78] : memref<64x1024xf32, #tpu.memory_space<vmem>>, vector<16x1024xf32>
    %218 = vector.shape_cast %208 : vector<1x1024xi1> to vector<1x1024xi1>
    %219 = vector.broadcast %218 : vector<1x1024xi1> to vector<16x1024xi1>
    %220 = arith.select %219, %217, %216 : vector<16x1024xi1>, vector<16x1024xf32>
    %221 = vector.shape_cast %208 : vector<1x1024xi1> to vector<1x1024xi1>
    %222 = vector.broadcast %221 : vector<1x1024xi1> to vector<16x1024xi1>
    %223 = arith.select %222, %215, %214 : vector<16x1024xi1>, vector<16x1024xf32>
    %224 = vector.shape_cast %199 : vector<1x1024xi1> to vector<1x1024xi1>
    %225 = vector.broadcast %224 : vector<1x1024xi1> to vector<16x1024xi1>
    %226 = arith.select %225, %220, %223 : vector<16x1024xi1>, vector<16x1024xf32>
    %c0_79 = arith.constant 0 : index
    %c0_80 = arith.constant 0 : index
    %227 = vector.load %arg4[%c0_79, %c0_80] : memref<16x1xf32, #tpu.memory_space<vmem>>, vector<16x1xf32>
    %228 = vector.broadcast %227 : vector<16x1xf32> to vector<16x1024xf32>
    %229 = arith.addf %226, %228 : vector<16x1024xf32>
    %c0_81 = arith.constant 0 : index
    %c0_82 = arith.constant 0 : index
    %230 = vector.load %arg9[%c0_81, %c0_82] : memref<16x1024xf32, #tpu.memory_space<vmem>>, vector<16x1024xf32>
    tpu.vector_store %arg9[%c0_81, %c0_82], %229 {strides = array<i32>} : memref<16x1024xf32, #tpu.memory_space<vmem>>, vector<16x1024xf32>,
    %c32_i32_83 = arith.constant 32 : i32
    %231 = vector.broadcast %c32_i32_83 : i32 to vector<1x1024xi32>
    %232 = arith.cmpi sge, %0, %231 : vector<1x1024xi32>
    %c1_i32_84 = arith.constant 1 : i32
    %233 = vector.broadcast %c1_i32_84 : i32 to vector<1x1024xi32>
    %234 = arith.cmpi sge, %190, %233 : vector<1x1024xi32>
    %235 = arith.andi %232, %234 : vector<1x1024xi1>
    %c0_85 = arith.constant 0 : index
    %c0_86 = arith.constant 0 : index
    %236 = vector.load %arg9[%c0_85, %c0_86] : memref<16x1024xf32, #tpu.memory_space<vmem>>, vector<16x1024xf32>
    %c0_87 = arith.constant 0 : index
    %c0_88 = arith.constant 0 : index
    %c0_89 = arith.constant 0 : index
    %237 = vector.load %arg2[%c0_87, %c0_88, %c0_89] : memref<1x16x1024xf32, #tpu.memory_space<vmem>>, vector<1x16x1024xf32>
    %238 = vector.shape_cast %237 : vector<1x16x1024xf32> to vector<16x1024xf32>
    %c33_i32 = arith.constant 33 : i32
    %239 = tpu.dynamic_rotate %236 by %c33_i32 dim 1 : vector<16x1024xf32>, i32 -> vector<16x1024xf32>
    %c33_i32_90 = arith.constant 33 : i32
    %240 = tpu.dynamic_rotate %238 by %c33_i32_90 dim 1 : vector<16x1024xf32>, i32 -> vector<16x1024xf32>
    %cst_91 = arith.constant 0.000000e+00 : f32
    %241 = vector.shape_cast %235 : vector<1x1024xi1> to vector<1x1024xi1>
    %242 = vector.broadcast %241 : vector<1x1024xi1> to vector<16x1024xi1>
    %243 = vector.broadcast %cst_91 : f32 to vector<16x1024xf32>
    %244 = arith.select %242, %239, %243 : vector<16x1024xi1>, vector<16x1024xf32>
    %cst_92 = arith.constant 0.000000e+00 : f32
    %245 = vector.shape_cast %235 : vector<1x1024xi1> to vector<1x1024xi1>
    %246 = vector.broadcast %245 : vector<1x1024xi1> to vector<16x1024xi1>
    %247 = vector.broadcast %cst_92 : f32 to vector<16x1024xf32>
    %248 = arith.select %246, %240, %247 : vector<16x1024xi1>, vector<16x1024xf32>
    %249 = arith.truncf %244 : vector<16x1024xf32> to vector<16x1024xbf16>
    %c0_93 = arith.constant 0 : index
    %c0_94 = arith.constant 0 : index
    %250 = vector.load %arg10[%c0_93, %c0_94] : memref<288x1024xbf16, #tpu.memory_space<vmem>>, vector<16x1024xbf16>
    tpu.vector_store %arg10[%c0_93, %c0_94], %249 {strides = array<i32>} : memref<288x1024xbf16, #tpu.memory_space<vmem>>, vector<16x1024xbf16>,
    %251 = arith.truncf %248 : vector<16x1024xf32> to vector<16x1024xbf16>
    %c16_95 = arith.constant 16 : index
    %c0_96 = arith.constant 0 : index
    %252 = vector.load %arg10[%c16_95, %c0_96] : memref<288x1024xbf16, #tpu.memory_space<vmem>>, vector<16x1024xbf16>
    tpu.vector_store %arg10[%c16_95, %c0_96], %251 {strides = array<i32>} : memref<288x1024xbf16, #tpu.memory_space<vmem>>, vector<16x1024xbf16>,
    %c32_i32_97 = arith.constant 32 : i32
    %253 = vector.broadcast %c32_i32_97 : i32 to vector<1x1024xi32>
    %254 = arith.cmpi sge, %0, %253 : vector<1x1024xi32>
    %c0_98 = arith.constant 0 : index
    %c0_99 = arith.constant 0 : index
    %255 = vector.load %arg9[%c0_98, %c0_99] : memref<16x1024xf32, #tpu.memory_space<vmem>>, vector<16x1024xf32>
    %c0_100 = arith.constant 0 : index
    %c0_101 = arith.constant 0 : index
    %c0_102 = arith.constant 0 : index
    %256 = vector.load %arg2[%c0_100, %c0_101, %c0_102] : memref<1x16x1024xf32, #tpu.memory_space<vmem>>, vector<1x16x1024xf32>
    %257 = vector.shape_cast %256 : vector<1x16x1024xf32> to vector<16x1024xf32>
    %c32_i32_103 = arith.constant 32 : i32
    %258 = tpu.dynamic_rotate %255 by %c32_i32_103 dim 1 : vector<16x1024xf32>, i32 -> vector<16x1024xf32>
    %c32_i32_104 = arith.constant 32 : i32
    %259 = tpu.dynamic_rotate %257 by %c32_i32_104 dim 1 : vector<16x1024xf32>, i32 -> vector<16x1024xf32>
    %cst_105 = arith.constant 0.000000e+00 : f32
    %260 = vector.shape_cast %254 : vector<1x1024xi1> to vector<1x1024xi1>
    %261 = vector.broadcast %260 : vector<1x1024xi1> to vector<16x1024xi1>
    %262 = vector.broadcast %cst_105 : f32 to vector<16x1024xf32>
    %263 = arith.select %261, %258, %262 : vector<16x1024xi1>, vector<16x1024xf32>
    %cst_106 = arith.constant 0.000000e+00 : f32
    %264 = vector.shape_cast %254 : vector<1x1024xi1> to vector<1x1024xi1>
    %265 = vector.broadcast %264 : vector<1x1024xi1> to vector<16x1024xi1>
    %266 = vector.broadcast %cst_106 : f32 to vector<16x1024xf32>
    %267 = arith.select %265, %259, %266 : vector<16x1024xi1>, vector<16x1024xf32>
    %268 = arith.truncf %263 : vector<16x1024xf32> to vector<16x1024xbf16>
    %c32_107 = arith.constant 32 : index
    %c0_108 = arith.constant 0 : index
    %269 = vector.load %arg10[%c32_107, %c0_108] : memref<288x1024xbf16, #tpu.memory_space<vmem>>, vector<16x1024xbf16>
    tpu.vector_store %arg10[%c32_107, %c0_108], %268 {strides = array<i32>} : memref<288x1024xbf16, #tpu.memory_space<vmem>>, vector<16x1024xbf16>,
    %270 = arith.truncf %267 : vector<16x1024xf32> to vector<16x1024xbf16>
    %c48_109 = arith.constant 48 : index
    %c0_110 = arith.constant 0 : index
    %271 = vector.load %arg10[%c48_109, %c0_110] : memref<288x1024xbf16, #tpu.memory_space<vmem>>, vector<16x1024xbf16>
    tpu.vector_store %arg10[%c48_109, %c0_110], %270 {strides = array<i32>} : memref<288x1024xbf16, #tpu.memory_space<vmem>>, vector<16x1024xbf16>,
    %c32_i32_111 = arith.constant 32 : i32
    %272 = vector.broadcast %c32_i32_111 : i32 to vector<1x1024xi32>
    %273 = arith.cmpi sge, %0, %272 : vector<1x1024xi32>
    %c30_i32 = arith.constant 30 : i32
    %274 = vector.broadcast %c30_i32 : i32 to vector<1x1024xi32>
    %275 = arith.cmpi sle, %190, %274 : vector<1x1024xi32>
    %276 = arith.andi %273, %275 : vector<1x1024xi1>
    %c0_112 = arith.constant 0 : index
    %c0_113 = arith.constant 0 : index
    %277 = vector.load %arg9[%c0_112, %c0_113] : memref<16x1024xf32, #tpu.memory_space<vmem>>, vector<16x1024xf32>
    %c0_114 = arith.constant 0 : index
    %c0_115 = arith.constant 0 : index
    %c0_116 = arith.constant 0 : index
    %278 = vector.load %arg2[%c0_114, %c0_115, %c0_116] : memref<1x16x1024xf32, #tpu.memory_space<vmem>>, vector<1x16x1024xf32>
    %279 = vector.shape_cast %278 : vector<1x16x1024xf32> to vector<16x1024xf32>
    %c31_i32 = arith.constant 31 : i32
    %280 = tpu.dynamic_rotate %277 by %c31_i32 dim 1 : vector<16x1024xf32>, i32 -> vector<16x1024xf32>
    %c31_i32_117 = arith.constant 31 : i32
    %281 = tpu.dynamic_rotate %279 by %c31_i32_117 dim 1 : vector<16x1024xf32>, i32 -> vector<16x1024xf32>
    %cst_118 = arith.constant 0.000000e+00 : f32
    %282 = vector.shape_cast %276 : vector<1x1024xi1> to vector<1x1024xi1>
    %283 = vector.broadcast %282 : vector<1x1024xi1> to vector<16x1024xi1>
    %284 = vector.broadcast %cst_118 : f32 to vector<16x1024xf32>
    %285 = arith.select %283, %280, %284 : vector<16x1024xi1>, vector<16x1024xf32>
    %cst_119 = arith.constant 0.000000e+00 : f32
    %286 = vector.shape_cast %276 : vector<1x1024xi1> to vector<1x1024xi1>
    %287 = vector.broadcast %286 : vector<1x1024xi1> to vector<16x1024xi1>
    %288 = vector.broadcast %cst_119 : f32 to vector<16x1024xf32>
    %289 = arith.select %287, %281, %288 : vector<16x1024xi1>, vector<16x1024xf32>
    %290 = arith.truncf %285 : vector<16x1024xf32> to vector<16x1024xbf16>
    %c64 = arith.constant 64 : index
    %c0_120 = arith.constant 0 : index
    %291 = vector.load %arg10[%c64, %c0_120] : memref<288x1024xbf16, #tpu.memory_space<vmem>>, vector<16x1024xbf16>
    tpu.vector_store %arg10[%c64, %c0_120], %290 {strides = array<i32>} : memref<288x1024xbf16, #tpu.memory_space<vmem>>, vector<16x1024xbf16>,
    %292 = arith.truncf %289 : vector<16x1024xf32> to vector<16x1024xbf16>
    %c80 = arith.constant 80 : index
    %c0_121 = arith.constant 0 : index
    %293 = vector.load %arg10[%c80, %c0_121] : memref<288x1024xbf16, #tpu.memory_space<vmem>>, vector<16x1024xbf16>
    tpu.vector_store %arg10[%c80, %c0_121], %292 {strides = array<i32>} : memref<288x1024xbf16, #tpu.memory_space<vmem>>, vector<16x1024xbf16>,
    %c1_i32_122 = arith.constant 1 : i32
    %294 = vector.broadcast %c1_i32_122 : i32 to vector<1x1024xi32>
    %295 = arith.cmpi sge, %190, %294 : vector<1x1024xi32>
    %c0_123 = arith.constant 0 : index
    %c0_124 = arith.constant 0 : index
    %296 = vector.load %arg9[%c0_123, %c0_124] : memref<16x1024xf32, #tpu.memory_space<vmem>>, vector<16x1024xf32>
    %c0_125 = arith.constant 0 : index
    %c0_126 = arith.constant 0 : index
    %c0_127 = arith.constant 0 : index
    %297 = vector.load %arg2[%c0_125, %c0_126, %c0_127] : memref<1x16x1024xf32, #tpu.memory_space<vmem>>, vector<1x16x1024xf32>
    %298 = vector.shape_cast %297 : vector<1x16x1024xf32> to vector<16x1024xf32>
    %c1_i32_128 = arith.constant 1 : i32
    %299 = tpu.dynamic_rotate %296 by %c1_i32_128 dim 1 : vector<16x1024xf32>, i32 -> vector<16x1024xf32>
    %c1_i32_129 = arith.constant 1 : i32
    %300 = tpu.dynamic_rotate %298 by %c1_i32_129 dim 1 : vector<16x1024xf32>, i32 -> vector<16x1024xf32>
    %cst_130 = arith.constant 0.000000e+00 : f32
    %301 = vector.shape_cast %295 : vector<1x1024xi1> to vector<1x1024xi1>
    %302 = vector.broadcast %301 : vector<1x1024xi1> to vector<16x1024xi1>
    %303 = vector.broadcast %cst_130 : f32 to vector<16x1024xf32>
    %304 = arith.select %302, %299, %303 : vector<16x1024xi1>, vector<16x1024xf32>
    %cst_131 = arith.constant 0.000000e+00 : f32
    %305 = vector.shape_cast %295 : vector<1x1024xi1> to vector<1x1024xi1>
    %306 = vector.broadcast %305 : vector<1x1024xi1> to vector<16x1024xi1>
    %307 = vector.broadcast %cst_131 : f32 to vector<16x1024xf32>
    %308 = arith.select %306, %300, %307 : vector<16x1024xi1>, vector<16x1024xf32>
    %309 = arith.truncf %304 : vector<16x1024xf32> to vector<16x1024xbf16>
    %c96 = arith.constant 96 : index
    %c0_132 = arith.constant 0 : index
    %310 = vector.load %arg10[%c96, %c0_132] : memref<288x1024xbf16, #tpu.memory_space<vmem>>, vector<16x1024xbf16>
    tpu.vector_store %arg10[%c96, %c0_132], %309 {strides = array<i32>} : memref<288x1024xbf16, #tpu.memory_space<vmem>>, vector<16x1024xbf16>,
    %311 = arith.truncf %308 : vector<16x1024xf32> to vector<16x1024xbf16>
    %c112 = arith.constant 112 : index
    %c0_133 = arith.constant 0 : index
    %312 = vector.load %arg10[%c112, %c0_133] : memref<288x1024xbf16, #tpu.memory_space<vmem>>, vector<16x1024xbf16>
    tpu.vector_store %arg10[%c112, %c0_133], %311 {strides = array<i32>} : memref<288x1024xbf16, #tpu.memory_space<vmem>>, vector<16x1024xbf16>,
    %c0_134 = arith.constant 0 : index
    %c0_135 = arith.constant 0 : index
    %313 = vector.load %arg9[%c0_134, %c0_135] : memref<16x1024xf32, #tpu.memory_space<vmem>>, vector<16x1024xf32>
    %c0_136 = arith.constant 0 : index
    %c0_137 = arith.constant 0 : index
    %c0_138 = arith.constant 0 : index
    %314 = vector.load %arg2[%c0_136, %c0_137, %c0_138] : memref<1x16x1024xf32, #tpu.memory_space<vmem>>, vector<1x16x1024xf32>
    %315 = vector.shape_cast %314 : vector<1x16x1024xf32> to vector<16x1024xf32>
    %316 = arith.truncf %313 : vector<16x1024xf32> to vector<16x1024xbf16>
    %c128 = arith.constant 128 : index
    %c0_139 = arith.constant 0 : index
    %317 = vector.load %arg10[%c128, %c0_139] : memref<288x1024xbf16, #tpu.memory_space<vmem>>, vector<16x1024xbf16>
    tpu.vector_store %arg10[%c128, %c0_139], %316 {strides = array<i32>} : memref<288x1024xbf16, #tpu.memory_space<vmem>>, vector<16x1024xbf16>,
    %318 = arith.truncf %315 : vector<16x1024xf32> to vector<16x1024xbf16>
    %c144 = arith.constant 144 : index
    %c0_140 = arith.constant 0 : index
    %319 = vector.load %arg10[%c144, %c0_140] : memref<288x1024xbf16, #tpu.memory_space<vmem>>, vector<16x1024xbf16>
    tpu.vector_store %arg10[%c144, %c0_140], %318 {strides = array<i32>} : memref<288x1024xbf16, #tpu.memory_space<vmem>>, vector<16x1024xbf16>,
    %c30_i32_141 = arith.constant 30 : i32
    %320 = vector.broadcast %c30_i32_141 : i32 to vector<1x1024xi32>
    %321 = arith.cmpi sle, %190, %320 : vector<1x1024xi32>
    %c0_142 = arith.constant 0 : index
    %c0_143 = arith.constant 0 : index
    %322 = vector.load %arg9[%c0_142, %c0_143] : memref<16x1024xf32, #tpu.memory_space<vmem>>, vector<16x1024xf32>
    %c0_144 = arith.constant 0 : index
    %c0_145 = arith.constant 0 : index
    %c0_146 = arith.constant 0 : index
    %323 = vector.load %arg2[%c0_144, %c0_145, %c0_146] : memref<1x16x1024xf32, #tpu.memory_space<vmem>>, vector<1x16x1024xf32>
    %324 = vector.shape_cast %323 : vector<1x16x1024xf32> to vector<16x1024xf32>
    %c1023_i32 = arith.constant 1023 : i32
    %325 = tpu.dynamic_rotate %322 by %c1023_i32 dim 1 : vector<16x1024xf32>, i32 -> vector<16x1024xf32>
    %c1023_i32_147 = arith.constant 1023 : i32
    %326 = tpu.dynamic_rotate %324 by %c1023_i32_147 dim 1 : vector<16x1024xf32>, i32 -> vector<16x1024xf32>
    %cst_148 = arith.constant 0.000000e+00 : f32
    %327 = vector.shape_cast %321 : vector<1x1024xi1> to vector<1x1024xi1>
    %328 = vector.broadcast %327 : vector<1x1024xi1> to vector<16x1024xi1>
    %329 = vector.broadcast %cst_148 : f32 to vector<16x1024xf32>
    %330 = arith.select %328, %325, %329 : vector<16x1024xi1>, vector<16x1024xf32>
    %cst_149 = arith.constant 0.000000e+00 : f32
    %331 = vector.shape_cast %321 : vector<1x1024xi1> to vector<1x1024xi1>
    %332 = vector.broadcast %331 : vector<1x1024xi1> to vector<16x1024xi1>
    %333 = vector.broadcast %cst_149 : f32 to vector<16x1024xf32>
    %334 = arith.select %332, %326, %333 : vector<16x1024xi1>, vector<16x1024xf32>
    %335 = arith.truncf %330 : vector<16x1024xf32> to vector<16x1024xbf16>
    %c160 = arith.constant 160 : index
    %c0_150 = arith.constant 0 : index
    %336 = vector.load %arg10[%c160, %c0_150] : memref<288x1024xbf16, #tpu.memory_space<vmem>>, vector<16x1024xbf16>
    tpu.vector_store %arg10[%c160, %c0_150], %335 {strides = array<i32>} : memref<288x1024xbf16, #tpu.memory_space<vmem>>, vector<16x1024xbf16>,
    %337 = arith.truncf %334 : vector<16x1024xf32> to vector<16x1024xbf16>
    %c176 = arith.constant 176 : index
    %c0_151 = arith.constant 0 : index
    %338 = vector.load %arg10[%c176, %c0_151] : memref<288x1024xbf16, #tpu.memory_space<vmem>>, vector<16x1024xbf16>
    tpu.vector_store %arg10[%c176, %c0_151], %337 {strides = array<i32>} : memref<288x1024xbf16, #tpu.memory_space<vmem>>, vector<16x1024xbf16>,
    %c992_i32_152 = arith.constant 992 : i32
    %339 = vector.broadcast %c992_i32_152 : i32 to vector<1x1024xi32>
    %340 = arith.cmpi slt, %0, %339 : vector<1x1024xi32>
    %c1_i32_153 = arith.constant 1 : i32
    %341 = vector.broadcast %c1_i32_153 : i32 to vector<1x1024xi32>
    %342 = arith.cmpi sge, %190, %341 : vector<1x1024xi32>
    %343 = arith.andi %340, %342 : vector<1x1024xi1>
    %c0_154 = arith.constant 0 : index
    %c0_155 = arith.constant 0 : index
    %344 = vector.load %arg9[%c0_154, %c0_155] : memref<16x1024xf32, #tpu.memory_space<vmem>>, vector<16x1024xf32>
    %c0_156 = arith.constant 0 : index
    %c0_157 = arith.constant 0 : index
    %c0_158 = arith.constant 0 : index
    %345 = vector.load %arg2[%c0_156, %c0_157, %c0_158] : memref<1x16x1024xf32, #tpu.memory_space<vmem>>, vector<1x16x1024xf32>
    %346 = vector.shape_cast %345 : vector<1x16x1024xf32> to vector<16x1024xf32>
    %c993_i32 = arith.constant 993 : i32
    %347 = tpu.dynamic_rotate %344 by %c993_i32 dim 1 : vector<16x1024xf32>, i32 -> vector<16x1024xf32>
    %c993_i32_159 = arith.constant 993 : i32
    %348 = tpu.dynamic_rotate %346 by %c993_i32_159 dim 1 : vector<16x1024xf32>, i32 -> vector<16x1024xf32>
    %cst_160 = arith.constant 0.000000e+00 : f32
    %349 = vector.shape_cast %343 : vector<1x1024xi1> to vector<1x1024xi1>
    %350 = vector.broadcast %349 : vector<1x1024xi1> to vector<16x1024xi1>
    %351 = vector.broadcast %cst_160 : f32 to vector<16x1024xf32>
    %352 = arith.select %350, %347, %351 : vector<16x1024xi1>, vector<16x1024xf32>
    %cst_161 = arith.constant 0.000000e+00 : f32
    %353 = vector.shape_cast %343 : vector<1x1024xi1> to vector<1x1024xi1>
    %354 = vector.broadcast %353 : vector<1x1024xi1> to vector<16x1024xi1>
    %355 = vector.broadcast %cst_161 : f32 to vector<16x1024xf32>
    %356 = arith.select %354, %348, %355 : vector<16x1024xi1>, vector<16x1024xf32>
    %357 = arith.truncf %352 : vector<16x1024xf32> to vector<16x1024xbf16>
    %c192 = arith.constant 192 : index
    %c0_162 = arith.constant 0 : index
    %358 = vector.load %arg10[%c192, %c0_162] : memref<288x1024xbf16, #tpu.memory_space<vmem>>, vector<16x1024xbf16>
    tpu.vector_store %arg10[%c192, %c0_162], %357 {strides = array<i32>} : memref<288x1024xbf16, #tpu.memory_space<vmem>>, vector<16x1024xbf16>,
    %359 = arith.truncf %356 : vector<16x1024xf32> to vector<16x1024xbf16>
    %c208 = arith.constant 208 : index
    %c0_163 = arith.constant 0 : index
    %360 = vector.load %arg10[%c208, %c0_163] : memref<288x1024xbf16, #tpu.memory_space<vmem>>, vector<16x1024xbf16>
    tpu.vector_store %arg10[%c208, %c0_163], %359 {strides = array<i32>} : memref<288x1024xbf16, #tpu.memory_space<vmem>>, vector<16x1024xbf16>,
    %c992_i32_164 = arith.constant 992 : i32
    %361 = vector.broadcast %c992_i32_164 : i32 to vector<1x1024xi32>
    %362 = arith.cmpi slt, %0, %361 : vector<1x1024xi32>
    %c0_165 = arith.constant 0 : index
    %c0_166 = arith.constant 0 : index
    %363 = vector.load %arg9[%c0_165, %c0_166] : memref<16x1024xf32, #tpu.memory_space<vmem>>, vector<16x1024xf32>
    %c0_167 = arith.constant 0 : index
    %c0_168 = arith.constant 0 : index
    %c0_169 = arith.constant 0 : index
    %364 = vector.load %arg2[%c0_167, %c0_168, %c0_169] : memref<1x16x1024xf32, #tpu.memory_space<vmem>>, vector<1x16x1024xf32>
    %365 = vector.shape_cast %364 : vector<1x16x1024xf32> to vector<16x1024xf32>
    %c992_i32_170 = arith.constant 992 : i32
    %366 = tpu.dynamic_rotate %363 by %c992_i32_170 dim 1 : vector<16x1024xf32>, i32 -> vector<16x1024xf32>
    %c992_i32_171 = arith.constant 992 : i32
    %367 = tpu.dynamic_rotate %365 by %c992_i32_171 dim 1 : vector<16x1024xf32>, i32 -> vector<16x1024xf32>
    %cst_172 = arith.constant 0.000000e+00 : f32
    %368 = vector.shape_cast %362 : vector<1x1024xi1> to vector<1x1024xi1>
    %369 = vector.broadcast %368 : vector<1x1024xi1> to vector<16x1024xi1>
    %370 = vector.broadcast %cst_172 : f32 to vector<16x1024xf32>
    %371 = arith.select %369, %366, %370 : vector<16x1024xi1>, vector<16x1024xf32>
    %cst_173 = arith.constant 0.000000e+00 : f32
    %372 = vector.shape_cast %362 : vector<1x1024xi1> to vector<1x1024xi1>
    %373 = vector.broadcast %372 : vector<1x1024xi1> to vector<16x1024xi1>
    %374 = vector.broadcast %cst_173 : f32 to vector<16x1024xf32>
    %375 = arith.select %373, %367, %374 : vector<16x1024xi1>, vector<16x1024xf32>
    %376 = arith.truncf %371 : vector<16x1024xf32> to vector<16x1024xbf16>
    %c224 = arith.constant 224 : index
    %c0_174 = arith.constant 0 : index
    %377 = vector.load %arg10[%c224, %c0_174] : memref<288x1024xbf16, #tpu.memory_space<vmem>>, vector<16x1024xbf16>
    tpu.vector_store %arg10[%c224, %c0_174], %376 {strides = array<i32>} : memref<288x1024xbf16, #tpu.memory_space<vmem>>, vector<16x1024xbf16>,
    %378 = arith.truncf %375 : vector<16x1024xf32> to vector<16x1024xbf16>
    %c240 = arith.constant 240 : index
    %c0_175 = arith.constant 0 : index
    %379 = vector.load %arg10[%c240, %c0_175] : memref<288x1024xbf16, #tpu.memory_space<vmem>>, vector<16x1024xbf16>
    tpu.vector_store %arg10[%c240, %c0_175], %378 {strides = array<i32>} : memref<288x1024xbf16, #tpu.memory_space<vmem>>, vector<16x1024xbf16>,
    %c992_i32_176 = arith.constant 992 : i32
    %380 = vector.broadcast %c992_i32_176 : i32 to vector<1x1024xi32>
    %381 = arith.cmpi slt, %0, %380 : vector<1x1024xi32>
    %c30_i32_177 = arith.constant 30 : i32
    %382 = vector.broadcast %c30_i32_177 : i32 to vector<1x1024xi32>
    %383 = arith.cmpi sle, %190, %382 : vector<1x1024xi32>
    %384 = arith.andi %381, %383 : vector<1x1024xi1>
    %c0_178 = arith.constant 0 : index
    %c0_179 = arith.constant 0 : index
    %385 = vector.load %arg9[%c0_178, %c0_179] : memref<16x1024xf32, #tpu.memory_space<vmem>>, vector<16x1024xf32>
    %c0_180 = arith.constant 0 : index
    %c0_181 = arith.constant 0 : index
    %c0_182 = arith.constant 0 : index
    %386 = vector.load %arg2[%c0_180, %c0_181, %c0_182] : memref<1x16x1024xf32, #tpu.memory_space<vmem>>, vector<1x16x1024xf32>
    %387 = vector.shape_cast %386 : vector<1x16x1024xf32> to vector<16x1024xf32>
    %c991_i32 = arith.constant 991 : i32
    %388 = tpu.dynamic_rotate %385 by %c991_i32 dim 1 : vector<16x1024xf32>, i32 -> vector<16x1024xf32>
    %c991_i32_183 = arith.constant 991 : i32
    %389 = tpu.dynamic_rotate %387 by %c991_i32_183 dim 1 : vector<16x1024xf32>, i32 -> vector<16x1024xf32>
    %cst_184 = arith.constant 0.000000e+00 : f32
    %390 = vector.shape_cast %384 : vector<1x1024xi1> to vector<1x1024xi1>
    %391 = vector.broadcast %390 : vector<1x1024xi1> to vector<16x1024xi1>
    %392 = vector.broadcast %cst_184 : f32 to vector<16x1024xf32>
    %393 = arith.select %391, %388, %392 : vector<16x1024xi1>, vector<16x1024xf32>
    %cst_185 = arith.constant 0.000000e+00 : f32
    %394 = vector.shape_cast %384 : vector<1x1024xi1> to vector<1x1024xi1>
    %395 = vector.broadcast %394 : vector<1x1024xi1> to vector<16x1024xi1>
    %396 = vector.broadcast %cst_185 : f32 to vector<16x1024xf32>
    %397 = arith.select %395, %389, %396 : vector<16x1024xi1>, vector<16x1024xf32>
    %398 = arith.truncf %393 : vector<16x1024xf32> to vector<16x1024xbf16>
    %c256 = arith.constant 256 : index
    %c0_186 = arith.constant 0 : index
    %399 = vector.load %arg10[%c256, %c0_186] : memref<288x1024xbf16, #tpu.memory_space<vmem>>, vector<16x1024xbf16>
    tpu.vector_store %arg10[%c256, %c0_186], %398 {strides = array<i32>} : memref<288x1024xbf16, #tpu.memory_space<vmem>>, vector<16x1024xbf16>,
    %400 = arith.truncf %397 : vector<16x1024xf32> to vector<16x1024xbf16>
    %c272 = arith.constant 272 : index
    %c0_187 = arith.constant 0 : index
    %401 = vector.load %arg10[%c272, %c0_187] : memref<288x1024xbf16, #tpu.memory_space<vmem>>, vector<16x1024xbf16>
    tpu.vector_store %arg10[%c272, %c0_187], %400 {strides = array<i32>} : memref<288x1024xbf16, #tpu.memory_space<vmem>>, vector<16x1024xbf16>,
    %c0_188 = arith.constant 0 : index
    %c0_189 = arith.constant 0 : index
    %402 = vector.load %arg5[%c0_188, %c0_189] : memref<16x288xbf16, #tpu.memory_space<vmem>>, vector<16x288xbf16>
    %c0_190 = arith.constant 0 : index
    %c0_191 = arith.constant 0 : index
    %403 = vector.load %arg10[%c0_190, %c0_191] : memref<288x1024xbf16, #tpu.memory_space<vmem>>, vector<288x1024xbf16>
    %cst_192 = arith.constant dense<0.000000e+00> : vector<16x1024xf32>
    %404 = tpu.matmul %402, %403, %cst_192 {dimension_numbers = #tpu.dot_dimension_numbers<[1], [0], [0], [1], [0, 0, 1, 1], [], []>} : vector<16x288xbf16>, vector<288x1024xbf16>, vector<16x1024xf32> -> vector<16x1024xf32>
    %c0_193 = arith.constant 0 : index
    %c0_194 = arith.constant 0 : index
    %405 = vector.load %arg6[%c0_193, %c0_194] : memref<16x1xf32, #tpu.memory_space<vmem>>, vector<16x1xf32>
    %406 = vector.broadcast %405 : vector<16x1xf32> to vector<16x1024xf32>
    %407 = arith.addf %404, %406 : vector<16x1024xf32>
    %cst_195 = arith.constant 5.000000e-01 : f32
    %408 = vector.broadcast %cst_195 : f32 to vector<16x1024xf32>
    %409 = arith.mulf %408, %407 : vector<16x1024xf32>
    %cst_196 = arith.constant 4.471500e-02 : f32
    %410 = vector.broadcast %cst_196 : f32 to vector<16x1024xf32>
    %411 = arith.mulf %410, %407 : vector<16x1024xf32>
    %412 = arith.mulf %411, %407 : vector<16x1024xf32>
    %413 = arith.mulf %412, %407 : vector<16x1024xf32>
    %414 = arith.addf %407, %413 : vector<16x1024xf32>
    %cst_197 = arith.constant 0.797884583 : f32
    %415 = vector.broadcast %cst_197 : f32 to vector<16x1024xf32>
    %416 = arith.mulf %415, %414 : vector<16x1024xf32>
    %417 = math.tanh %416 : vector<16x1024xf32>
    %cst_198 = arith.constant 1.000000e+00 : f32
    %418 = vector.broadcast %cst_198 : f32 to vector<16x1024xf32>
    %419 = arith.addf %418, %417 : vector<16x1024xf32>
    %420 = arith.mulf %409, %419 : vector<16x1024xf32>
    %c0_199 = arith.constant 0 : index
    %c0_200 = arith.constant 0 : index
    %c0_201 = arith.constant 0 : index
    %421 = vector.load %arg7[%c0_199, %c0_200, %c0_201] : memref<1x16x1024xf32, #tpu.memory_space<vmem>>, vector<1x16x1024xf32>
    %422 = vector.shape_cast %421 : vector<1x16x1024xf32> to vector<16x1024xf32>
    %423 = vector.shape_cast %420 : vector<16x1024xf32> to vector<1x16x1024xf32>
    tpu.vector_store %arg7[%c0_199, %c0_200, %c0_201], %423 {strides = array<i32>} : memref<1x16x1024xf32, #tpu.memory_space<vmem>>, vector<1x16x1024xf32>,
    return
  }
  func.func @transform_0(%arg0: i32) -> (i32, i32, i32) {
    %c0_i32 = arith.constant 0 : i32
    %c0_i32_0 = arith.constant 0 : i32
    %c0_i32_1 = arith.constant 0 : i32
    return %arg0, %c0_i32, %c0_i32_0 : i32, i32, i32
  }
  func.func @transform_1(%arg0: i32) -> (i32, i32, i32) {
    %c0_i32 = arith.constant 0 : i32
    %c0_i32_0 = arith.constant 0 : i32
    %c0_i32_1 = arith.constant 0 : i32
    return %arg0, %c0_i32, %c0_i32_0 : i32, i32, i32
  }
  func.func @transform_2(%arg0: i32) -> (i32, i32) {
    %c0_i32 = arith.constant 0 : i32
    %c0_i32_0 = arith.constant 0 : i32
    %c0_i32_1 = arith.constant 0 : i32
    return %c0_i32, %c0_i32_0 : i32, i32
  }
  func.func @transform_3(%arg0: i32) -> (i32, i32) {
    %c0_i32 = arith.constant 0 : i32
    %c0_i32_0 = arith.constant 0 : i32
    %c0_i32_1 = arith.constant 0 : i32
    return %c0_i32, %c0_i32_0 : i32, i32
  }
  func.func @transform_4(%arg0: i32) -> (i32, i32) {
    %c0_i32 = arith.constant 0 : i32
    %c0_i32_0 = arith.constant 0 : i32
    %c0_i32_1 = arith.constant 0 : i32
    return %c0_i32, %c0_i32_0 : i32, i32
  }
  func.func @transform_5(%arg0: i32) -> (i32, i32) {
    %c0_i32 = arith.constant 0 : i32
    %c0_i32_0 = arith.constant 0 : i32
    %c0_i32_1 = arith.constant 0 : i32
    return %c0_i32, %c0_i32_0 : i32, i32
  }
  func.func @transform_6(%arg0: i32) -> (i32, i32, i32) {
    %c0_i32 = arith.constant 0 : i32
    %c0_i32_0 = arith.constant 0 : i32
    %c0_i32_1 = arith.constant 0 : i32
    return %arg0, %c0_i32, %c0_i32_0 : i32, i32, i32
  }
}

</mosaic_0001>

<llo_original>
// kernel: upblock_forward.1
$region0: #{upblock_forward.1}
  #allocation0 [shape = 'u32[]', space=smem, size = 0x4, offset = 0x4, fixed_abs, tag = 'smem constant byte address 0x4 - core index']
  #allocation1 [shape = 'u32[72,128]{1,0:T(1,128)}', space=vmem, size = 0x9000, scoped, tag = 'internal scratch']
  #allocation2 [shape = 'f32[64,1024]{1,0:T(8,128)}', space=vmem, size = 0x40000, scoped, tag = 'scratch operand']
  #allocation3 [shape = 'f32[16,1024]{1,0:T(8,128)}', space=vmem, size = 0x10000, scoped, tag = 'scratch operand']
  #allocation4 [shape = 'bf16[288,1024]{1,0:T(8,128)(2,1)}', space=vmem, size = 0x90000, scoped, tag = 'scratch operand']
  %s0 = inlined_call_operand.vmem [shape: bf16[2,32,1024], index: 0, kind: input, shape index: {}]
  %s1 = inlined_call_operand.vmem [shape: f32[2,16,1024], index: 1, kind: input, shape index: {}]
  %s2 = inlined_call_operand.vmem [shape: bf16[64,32], index: 2, kind: input, shape index: {}]
  %s3 = inlined_call_operand.vmem [shape: f32[16,1], index: 3, kind: input, shape index: {}]
  %s4 = inlined_call_operand.vmem [shape: bf16[16,288], index: 4, kind: input, shape index: {}]
  %s5 = inlined_call_operand.vmem [shape: f32[16,1], index: 5, kind: input, shape index: {}]
  %s6 = inlined_call_operand.vmem [shape: f32[2,16,1024], index: 6, kind: output, shape index: {}]
  %s7 = sld [smem:[#allocation0]]
  $region57: #{upblock_forward.1} parent=0
    _
  %s9 = ssub.s32 1, %s7
  %s10 = scalar_select 0, %s9, %s7
  loop: start=0, step=1, limit=4
  $region2: #{upblock_forward.1} parent=0 // loop_pre_header
    _
  $region3: #{upblock_forward.1} parent=0 // loop_header
    %s12 = sphi 0, %s16
    %p13 = scmp.ge.s32.totalorder %s12, 4
    %s22 = sphi 0, %s24
    %s25 = sphi 0, %s22
    %s26 = sphi 0, %s25
    %s42 = sphi 0, %s26
    %s48 = sphi 0, %s50
    %s51 = sphi 0, %s48
    %s52 = sphi 0, %s51
    %s68 = sphi 0, %s52
    %s72 = sphi 0, %s72
    %s74 = sphi 0, %s72
    %s75 = sphi 0, %s74
    %s89 = sphi 0, %s75
    %s93 = sphi 0, %s93
    %s95 = sphi 0, %s93
    %s96 = sphi 0, %s95
    %s110 = sphi 0, %s96
    %s114 = sphi 0, %s114
    %s116 = sphi 0, %s114
    %s117 = sphi 0, %s116
    %s131 = sphi 0, %s117
    %s135 = sphi 0, %s135
    %s137 = sphi 0, %s135
    %s138 = sphi 0, %s137
    %s152 = sphi 0, %s138
    %s158 = sphi 0, %s160
    %s161 = sphi 0, %s158
    %s162 = sphi 0, %s161
    %s178 = sphi 0, %s162
  $region4: #{upblock_forward.1} parent=0 // loop_header_branch
    %15 = sbr.rel (%p13) target = $region8
  $region5: #{upblock_forward.1} parent=0 // loop_body
    %s17 = ssub.s32 %s12, 1
    %s18 = ssub.s32 %s12, 2
    %s19 = sadd.s32 %s12, 1
    %s20 = ssub.s32 %s12, %s19
    %p21 = scmp.eq.s32.totalorder %s20, 0
    %s23 = sadd.s32 %s22, 1
    %s24 = scalar_select %p21, %s22, %s23
    %p27 = pneg %p21
    %p28 = scmp.eq.s32.totalorder %s12, 1
    %p29 = por %p27, %p28
    %p30 = scmp.ne.s32.totalorder %s22, %s25
    %p31 = scmp.eq.s32.totalorder %s12, 0
    %p32 = por %p30, %p31
    %p33 = scmp.ne.s32.totalorder %s22, %s25
    %p34 = scmp.eq.s32.totalorder %s17, 1
    %p35 = por %p33, %p34
    %p36 = scmp.ne.s32.totalorder %s25, %s26
    %p37 = scmp.eq.s32.totalorder %s17, 0
    %p38 = por %p36, %p37
    %p39 = scmp.ne.s32.totalorder %s25, %s26
    %p40 = scmp.eq.s32.totalorder %s18, 1
    %p41 = por %p39, %p40
    %p43 = scmp.ne.s32.totalorder %s26, %s42
    %p44 = scmp.eq.s32.totalorder %s18, 0
    %p45 = por %p43, %p44
    %s46 = ssub.s32 %s12, %s19
    %p47 = scmp.eq.s32.totalorder %s46, 0
    %s49 = sadd.s32 %s48, 1
    %s50 = scalar_select %p47, %s48, %s49
    %p53 = pneg %p47
    %p54 = scmp.eq.s32.totalorder %s12, 1
    %p55 = por %p53, %p54
    %p56 = scmp.ne.s32.totalorder %s48, %s51
    %p57 = scmp.eq.s32.totalorder %s12, 0
    %p58 = por %p56, %p57
    %p59 = scmp.ne.s32.totalorder %s48, %s51
    %p60 = scmp.eq.s32.totalorder %s17, 1
    %p61 = por %p59, %p60
    %p62 = scmp.ne.s32.totalorder %s51, %s52
    %p63 = scmp.eq.s32.totalorder %s17, 0
    %p64 = por %p62, %p63
    %p65 = scmp.ne.s32.totalorder %s51, %s52
    %p66 = scmp.eq.s32.totalorder %s18, 1
    %p67 = por %p65, %p66
    %p69 = scmp.ne.s32.totalorder %s52, %s68
    %p70 = scmp.eq.s32.totalorder %s18, 0
    %p71 = por %p69, %p70
    %s73 = sadd.s32 %s72, 1
    %p76 = scmp.eq.s32.totalorder %s12, 1
    %p77 = scmp.ne.s32.totalorder %s72, %s74
    %p78 = scmp.eq.s32.totalorder %s12, 0
    %p79 = por %p77, %p78
    %p80 = scmp.ne.s32.totalorder %s72, %s74
    %p81 = scmp.eq.s32.totalorder %s17, 1
    %p82 = por %p80, %p81
    %p83 = scmp.ne.s32.totalorder %s74, %s75
    %p84 = scmp.eq.s32.totalorder %s17, 0
    %p85 = por %p83, %p84
    %p86 = scmp.ne.s32.totalorder %s74, %s75
    %p87 = scmp.eq.s32.totalorder %s18, 1
    %p88 = por %p86, %p87
    %p90 = scmp.ne.s32.totalorder %s75, %s89
    %p91 = scmp.eq.s32.totalorder %s18, 0
    %p92 = por %p90, %p91
    %s94 = sadd.s32 %s93, 1
    %p97 = scmp.eq.s32.totalorder %s12, 1
    %p98 = scmp.ne.s32.totalorder %s93, %s95
    %p99 = scmp.eq.s32.totalorder %s12, 0
    %p100 = por %p98, %p99
    %p101 = scmp.ne.s32.totalorder %s93, %s95
    %p102 = scmp.eq.s32.totalorder %s17, 1
    %p103 = por %p101, %p102
    %p104 = scmp.ne.s32.totalorder %s95, %s96
    %p105 = scmp.eq.s32.totalorder %s17, 0
    %p106 = por %p104, %p105
    %p107 = scmp.ne.s32.totalorder %s95, %s96
    %p108 = scmp.eq.s32.totalorder %s18, 1
    %p109 = por %p107, %p108
    %p111 = scmp.ne.s32.totalorder %s96, %s110
    %p112 = scmp.eq.s32.totalorder %s18, 0
    %p113 = por %p111, %p112
    %s115 = sadd.s32 %s114, 1
    %p118 = scmp.eq.s32.totalorder %s12, 1
    %p119 = scmp.ne.s32.totalorder %s114, %s116
    %p120 = scmp.eq.s32.totalorder %s12, 0
    %p121 = por %p119, %p120
    %p122 = scmp.ne.s32.totalorder %s114, %s116
    %p123 = scmp.eq.s32.totalorder %s17, 1
    %p124 = por %p122, %p123
    %p125 = scmp.ne.s32.totalorder %s116, %s117
    %p126 = scmp.eq.s32.totalorder %s17, 0
    %p127 = por %p125, %p126
    %p128 = scmp.ne.s32.totalorder %s116, %s117
    %p129 = scmp.eq.s32.totalorder %s18, 1
    %p130 = por %p128, %p129
    %p132 = scmp.ne.s32.totalorder %s117, %s131
    %p133 = scmp.eq.s32.totalorder %s18, 0
    %p134 = por %p132, %p133
    %s136 = sadd.s32 %s135, 1
    %p139 = scmp.eq.s32.totalorder %s12, 1
    %p140 = scmp.ne.s32.totalorder %s135, %s137
    %p141 = scmp.eq.s32.totalorder %s12, 0
    %p142 = por %p140, %p141
    %p143 = scmp.ne.s32.totalorder %s135, %s137
    %p144 = scmp.eq.s32.totalorder %s17, 1
    %p145 = por %p143, %p144
    %p146 = scmp.ne.s32.totalorder %s137, %s138
    %p147 = scmp.eq.s32.totalorder %s17, 0
    %p148 = por %p146, %p147
    %p149 = scmp.ne.s32.totalorder %s137, %s138
    %p150 = scmp.eq.s32.totalorder %s18, 1
    %p151 = por %p149, %p150
    %p153 = scmp.ne.s32.totalorder %s138, %s152
    %p154 = scmp.eq.s32.totalorder %s18, 0
    %p155 = por %p153, %p154
    %s156 = ssub.s32 %s12, %s19
    %p157 = scmp.eq.s32.totalorder %s156, 0
    %s159 = sadd.s32 %s158, 1
    %s160 = scalar_select %p157, %s158, %s159
    %p163 = pneg %p157
    %p164 = scmp.eq.s32.totalorder %s12, 1
    %p165 = por %p163, %p164
    %p166 = scmp.ne.s32.totalorder %s158, %s161
    %p167 = scmp.eq.s32.totalorder %s12, 0
    %p168 = por %p166, %p167
    %p169 = scmp.ne.s32.totalorder %s158, %s161
    %p170 = scmp.eq.s32.totalorder %s17, 1
    %p171 = por %p169, %p170
    %p172 = scmp.ne.s32.totalorder %s161, %s162
    %p173 = scmp.eq.s32.totalorder %s17, 0
    %p174 = por %p172, %p173
    %p175 = scmp.ne.s32.totalorder %s161, %s162
    %p176 = scmp.eq.s32.totalorder %s18, 1
    %p177 = por %p175, %p176
    %p179 = scmp.ne.s32.totalorder %s162, %s178
    %p180 = scmp.eq.s32.totalorder %s18, 0
    %p181 = por %p179, %p180
    %p182 = scmp.le.s32.totalorder 1, %s12
    %p183 = scmp.lt.s32.totalorder %s12, 3
    %p184 = pnand %p182, %p183
    %p185 = pneg %p184
    // Predicated region
    $region9: #{upblock_forward.1} parent=5 // pred_check
      _
    $region10: #{upblock_forward.1} parent=5 // pred_check_branch
      %187 = sbr.rel (%p184) target = $region12
    $region11: #{upblock_forward.1} parent=5 // pred_region
      %s188 = ssub.s32 %s12, 1
      // Predicated region
      $region13: #{upblock_forward.1} parent=11 // pred_check
        %p189 = pneg %p85
      $region14: #{upblock_forward.1} parent=11 // pred_check_branch
        %191 = sbr.rel (%p189) target = $region16
      $region15: #{upblock_forward.1} parent=11 // pred_region
        _
      $region16: #{upblock_forward.1} parent=11 // pred_fallthru
        _
      // Predicated region
      $region17: #{upblock_forward.1} parent=11 // pred_check
        %p192 = pneg %p106
      $region18: #{upblock_forward.1} parent=11 // pred_check_branch
        %194 = sbr.rel (%p192) target = $region20
      $region19: #{upblock_forward.1} parent=11 // pred_region
        _
      $region20: #{upblock_forward.1} parent=11 // pred_fallthru
        _
      // Predicated region
      $region21: #{upblock_forward.1} parent=11 // pred_check
        %p195 = pneg %p127
      $region22: #{upblock_forward.1} parent=11 // pred_check_branch
        %197 = sbr.rel (%p195) target = $region24
      $region23: #{upblock_forward.1} parent=11 // pred_region
        _
      $region24: #{upblock_forward.1} parent=11 // pred_fallthru
        _
      // Predicated region
      $region25: #{upblock_forward.1} parent=11 // pred_check
        %p198 = pneg %p148
      $region26: #{upblock_forward.1} parent=11 // pred_check_branch
        %200 = sbr.rel (%p198) target = $region28
      $region27: #{upblock_forward.1} parent=11 // pred_region
        _
      $region28: #{upblock_forward.1} parent=11 // pred_fallthru
        _
    $region12: #{upblock_forward.1} parent=5 // pred_fallthru
      _
    %p201 = scmp.lt.s32.totalorder %s12, 2
    // Predicated region
    $region29: #{upblock_forward.1} parent=5 // pred_check
      %p202 = pneg %p201
    $region30: #{upblock_forward.1} parent=5 // pred_check_branch
      %204 = sbr.rel (%p202) target = $region32
    $region31: #{upblock_forward.1} parent=5 // pred_region
      // Predicated region
      $region33: #{upblock_forward.1} parent=31 // pred_check
        %p205 = pneg %p32
      $region34: #{upblock_forward.1} parent=31 // pred_check_branch
        %207 = sbr.rel (%p205) target = $region36
      $region35: #{upblock_forward.1} parent=31 // pred_region
        %p208 = scmp.lt.s32.totalorder %s12, 1
        %s209 = scalar_select %p208, %s12, 1
        %s210 = smul.addr %s209, 32
        %s211 = smul.addr %s210, 4
        %s212 = scalar_lea.vmem %s0, %s211
      $region36: #{upblock_forward.1} parent=31 // pred_fallthru
        _
      // Predicated region
      $region37: #{upblock_forward.1} parent=31 // pred_check
        %p213 = pneg %p58
      $region38: #{upblock_forward.1} parent=31 // pred_check_branch
        %215 = sbr.rel (%p213) target = $region40
      $region39: #{upblock_forward.1} parent=31 // pred_region
        %p216 = scmp.lt.s32.totalorder %s12, 1
        %s217 = scalar_select %p216, %s12, 1
        %s218 = smul.addr %s217, 16
        %s219 = smul.addr %s218, 8
        %s220 = scalar_lea.vmem %s1, %s219
      $region40: #{upblock_forward.1} parent=31 // pred_fallthru
        _
    $region32: #{upblock_forward.1} parent=5 // pred_fallthru
      _
    %p221 = scmp.le.s32.totalorder 1, %s12
    %p222 = scmp.lt.s32.totalorder %s12, 3
    %p223 = pnand %p221, %p222
    %p224 = pneg %p223
    // Predicated region
    $region41: #{upblock_forward.1} parent=5 // pred_check
      _
    $region42: #{upblock_forward.1} parent=5 // pred_check_branch
      %226 = sbr.rel (%p223) target = $region44
    $region43: #{upblock_forward.1} parent=5 // pred_region
      %s227 = ssub.s32 %s12, 1
      %p228 = scmp.lt.s32.totalorder %s17, 1
      %s229 = scalar_select %p228, %s17, 1
      %s230 = smul.addr %s229, 32
      %s231 = smul.addr %s230, 4
      %s232 = scalar_lea.vmem %s0, %s231
      %p233 = pneg %p38
      %p234 = pneg %p35
      %p235 = scmp.lt.s32.totalorder %s17, 1
      %s236 = scalar_select %p235, %s17, 1
      %s237 = smul.addr %s236, 16
      %s238 = smul.addr %s237, 8
      %s239 = scalar_lea.vmem %s1, %s238
      %p240 = pneg %p64
      %p241 = pneg %p61
      %p242 = pneg %p85
      %p243 = pneg %p82
      %p244 = pneg %p106
      %p245 = pneg %p103
      %p246 = pneg %p127
      %p247 = pneg %p124
      %p248 = pneg %p148
      %p249 = pneg %p145
      %p250 = pneg %p174
      %p251 = pneg %p171
      %p252 = scmp.lt.s32.totalorder %s17, 1
      %s253 = scalar_select %p252, %s17, 1
      %s254 = smul.addr %s253, 16
      %s255 = smul.addr %s254, 8
      %s256 = scalar_lea.vmem %s6, %s255
      %p257 = scmp.lt.s32.totalorder %s17, 1
      %s258 = scalar_select %p257, %s17, 1
      %s259 = smul.addr %s258, 32
      %s260 = smul.addr %s259, 4
      %s261 = scalar_lea.vmem %s0, %s260
      %p262 = scmp.lt.s32.totalorder %s17, 1
      %s263 = scalar_select %p262, %s17, 1
      %s264 = smul.addr %s263, 16
      %s265 = smul.addr %s264, 8
      %s266 = scalar_lea.vmem %s1, %s265
      %p267 = scmp.lt.s32.totalorder %s17, 1
      %s268 = scalar_select %p267, %s17, 1
      %s269 = smul.addr %s268, 16
      %s270 = smul.addr %s269, 8
      %s271 = scalar_lea.vmem %s6, %s270
      %v273 = vlaneseq
      %v274 = vand.u32 %v273, 127
      %v275 = vadd.s32 %v274, 128
      %v276 = vadd.s32 %v274, 256
      %v277 = vadd.s32 %v274, 384
      %v278 = vadd.s32 %v274, 512
      %v279 = vadd.s32 %v274, 640
      %v280 = vadd.s32 %v274, 768
      %v281 = vadd.s32 %v274, 896
      %vm282 = vcmp.ge.s32.totalorder %v274, 32
      %vm283 = vcmp.ge.s32.totalorder %v275, 32
      %vm284 = vcmp.ge.s32.totalorder %v276, 32
      %vm285 = vcmp.ge.s32.totalorder %v277, 32
      %vm286 = vcmp.ge.s32.totalorder %v278, 32
      %vm287 = vcmp.ge.s32.totalorder %v279, 32
      %vm288 = vcmp.ge.s32.totalorder %v280, 32
      %vm289 = vcmp.ge.s32.totalorder %v281, 32
      %v290 = vsel %vm282, 1, 0
      %v291 = vsel %vm283, 1, 0
      %v292 = vsel %vm284, 1, 0
      %v293 = vsel %vm285, 1, 0
      %v294 = vsel %vm286, 1, 0
      %v295 = vsel %vm287, 1, 0
      %v296 = vsel %vm288, 1, 0
      %v297 = vsel %vm289, 1, 0
      %vm298 = vcmp.ge.s32.totalorder %v274, 64
      %vm299 = vcmp.ge.s32.totalorder %v275, 64
      %vm300 = vcmp.ge.s32.totalorder %v276, 64
      %vm301 = vcmp.ge.s32.totalorder %v277, 64
      %vm302 = vcmp.ge.s32.totalorder %v278, 64
      %vm303 = vcmp.ge.s32.totalorder %v279, 64
      %vm304 = vcmp.ge.s32.totalorder %v280, 64
      %vm305 = vcmp.ge.s32.totalorder %v281, 64
      %v306 = vsel %vm298, 1, 0
      %v307 = vsel %vm299, 1, 0
      %v308 = vsel %vm300, 1, 0
      %v309 = vsel %vm301, 1, 0
      %v310 = vsel %vm302, 1, 0
      %v311 = vsel %vm303, 1, 0
      %v312 = vsel %vm304, 1, 0
      %v313 = vsel %vm305, 1, 0
      %v314 = vadd.s32 %v290, %v306
      %v315 = vadd.s32 %v291, %v307
      %v316 = vadd.s32 %v292, %v308
      %v317 = vadd.s32 %v293, %v309
      %v318 = vadd.s32 %v294, %v310
      %v319 = vadd.s32 %v295, %v311
      %v320 = vadd.s32 %v296, %v312
      %v321 = vadd.s32 %v297, %v313
      %vm322 = vcmp.ge.s32.totalorder %v274, 96
      %vm323 = vcmp.ge.s32.totalorder %v275, 96
      %vm324 = vcmp.ge.s32.totalorder %v276, 96
      %vm325 = vcmp.ge.s32.totalorder %v277, 96
      %vm326 = vcmp.ge.s32.totalorder %v278, 96
      %vm327 = vcmp.ge.s32.totalorder %v279, 96
      %vm328 = vcmp.ge.s32.totalorder %v280, 96
      %vm329 = vcmp.ge.s32.totalorder %v281, 96
      %v330 = vsel %vm322, 1, 0
      %v331 = vsel %vm323, 1, 0
      %v332 = vsel %vm324, 1, 0
      %v333 = vsel %vm325, 1, 0
      %v334 = vsel %vm326, 1, 0
      %v335 = vsel %vm327, 1, 0
      %v336 = vsel %vm328, 1, 0
      %v337 = vsel %vm329, 1, 0
      %v338 = vadd.s32 %v314, %v330
      %v339 = vadd.s32 %v315, %v331
      %v340 = vadd.s32 %v316, %v332
      %v341 = vadd.s32 %v317, %v333
      %v342 = vadd.s32 %v318, %v334
      %v343 = vadd.s32 %v319, %v335
      %v344 = vadd.s32 %v320, %v336
      %v345 = vadd.s32 %v321, %v337
      %vm346 = vcmp.ge.s32.totalorder %v274, 128
      %vm347 = vcmp.ge.s32.totalorder %v275, 128
      %vm348 = vcmp.ge.s32.totalorder %v276, 128
      %vm349 = vcmp.ge.s32.totalorder %v277, 128
      %vm350 = vcmp.ge.s32.totalorder %v278, 128
      %vm351 = vcmp.ge.s32.totalorder %v279, 128
      %vm352 = vcmp.ge.s32.totalorder %v280, 128
      %vm353 = vcmp.ge.s32.totalorder %v281, 128
      %v354 = vsel %vm346, 1, 0
      %v355 = vsel %vm347, 1, 0
      %v356 = vsel %vm348, 1, 0
      %v357 = vsel %vm349, 1, 0
      %v358 = vsel %vm350, 1, 0
      %v359 = vsel %vm351, 1, 0
      %v360 = vsel %vm352, 1, 0
      %v361 = vsel %vm353, 1, 0
      %v362 = vadd.s32 %v338, %v354
      %v363 = vadd.s32 %v339, %v355
      %v364 = vadd.s32 %v340, %v356
      %v365 = vadd.s32 %v341, %v357
      %v366 = vadd.s32 %v342, %v358
      %v367 = vadd.s32 %v343, %v359
      %v368 = vadd.s32 %v344, %v360
      %v369 = vadd.s32 %v345, %v361
      %vm370 = vcmp.ge.s32.totalorder %v274, 160
      %vm371 = vcmp.ge.s32.totalorder %v275, 160
      %vm372 = vcmp.ge.s32.totalorder %v276, 160
      %vm373 = vcmp.ge.s32.totalorder %v277, 160
      %vm374 = vcmp.ge.s32.totalorder %v278, 160
      %vm375 = vcmp.ge.s32.totalorder %v279, 160
      %vm376 = vcmp.ge.s32.totalorder %v280, 160
      %vm377 = vcmp.ge.s32.totalorder %v281, 160
      %v378 = vsel %vm370, 1, 0
      %v379 = vsel %vm371, 1, 0
      %v380 = vsel %vm372, 1, 0
      %v381 = vsel %vm373, 1, 0
      %v382 = vsel %vm374, 1, 0
      %v383 = vsel %vm375, 1, 0
      %v384 = vsel %vm376, 1, 0
      %v385 = vsel %vm377, 1, 0
      %v386 = vadd.s32 %v362, %v378
      %v387 = vadd.s32 %v363, %v379
      %v388 = vadd.s32 %v364, %v380
      %v389 = vadd.s32 %v365, %v381
      %v390 = vadd.s32 %v366, %v382
      %v391 = vadd.s32 %v367, %v383
      %v392 = vadd.s32 %v368, %v384
      %v393 = vadd.s32 %v369, %v385
      %vm394 = vcmp.ge.s32.totalorder %v274, 192
      %vm395 = vcmp.ge.s32.totalorder %v275, 192
      %vm396 = vcmp.ge.s32.totalorder %v276, 192
      %vm397 = vcmp.ge.s32.totalorder %v277, 192
      %vm398 = vcmp.ge.s32.totalorder %v278, 192
      %vm399 = vcmp.ge.s32.totalorder %v279, 192
      %vm400 = vcmp.ge.s32.totalorder %v280, 192
      %vm401 = vcmp.ge.s32.totalorder %v281, 192
      %v402 = vsel %vm394, 1, 0
      %v403 = vsel %vm395, 1, 0
      %v404 = vsel %vm396, 1, 0
      %v405 = vsel %vm397, 1, 0
      %v406 = vsel %vm398, 1, 0
      %v407 = vsel %vm399, 1, 0
      %v408 = vsel %vm400, 1, 0
      %v409 = vsel %vm401, 1, 0
      %v410 = vadd.s32 %v386, %v402
      %v411 = vadd.s32 %v387, %v403
      %v412 = vadd.s32 %v388, %v404
      %v413 = vadd.s32 %v389, %v405
      %v414 = vadd.s32 %v390, %v406
      %v415 = vadd.s32 %v391, %v407
      %v416 = vadd.s32 %v392, %v408
      %v417 = vadd.s32 %v393, %v409
      %vm418 = vcmp.ge.s32.totalorder %v274, 224
      %vm419 = vcmp.ge.s32.totalorder %v275, 224
      %vm420 = vcmp.ge.s32.totalorder %v276, 224
      %vm421 = vcmp.ge.s32.totalorder %v277, 224
      %vm422 = vcmp.ge.s32.totalorder %v278, 224
      %vm423 = vcmp.ge.s32.totalorder %v279, 224
      %vm424 = vcmp.ge.s32.totalorder %v280, 224
      %vm425 = vcmp.ge.s32.totalorder %v281, 224
      %v426 = vsel %vm418, 1, 0
      %v427 = vsel %vm419, 1, 0
      %v428 = vsel %vm420, 1, 0
      %v429 = vsel %vm421, 1, 0
      %v430 = vsel %vm422, 1, 0
      %v431 = vsel %vm423, 1, 0
      %v432 = vsel %vm424, 1, 0
      %v433 = vsel %vm425, 1, 0
      %v434 = vadd.s32 %v410, %v426
      %v435 = vadd.s32 %v411, %v427
      %v436 = vadd.s32 %v412, %v428
      %v437 = vadd.s32 %v413, %v429
      %v438 = vadd.s32 %v414, %v430
      %v439 = vadd.s32 %v415, %v431
      %v440 = vadd.s32 %v416, %v432
      %v441 = vadd.s32 %v417, %v433
      %vm442 = vcmp.ge.s32.totalorder %v274, 256
      %vm443 = vcmp.ge.s32.totalorder %v275, 256
      %vm444 = vcmp.ge.s32.totalorder %v276, 256
      %vm445 = vcmp.ge.s32.totalorder %v277, 256
      %vm446 = vcmp.ge.s32.totalorder %v278, 256
      %vm447 = vcmp.ge.s32.totalorder %v279, 256
      %vm448 = vcmp.ge.s32.totalorder %v280, 256
      %vm449 = vcmp.ge.s32.totalorder %v281, 256
      %v450 = vsel %vm442, 1, 0
      %v451 = vsel %vm443, 1, 0
      %v452 = vsel %vm444, 1, 0
      %v453 = vsel %vm445, 1, 0
      %v454 = vsel %vm446, 1, 0
      %v455 = vsel %vm447, 1, 0
      %v456 = vsel %vm448, 1, 0
      %v457 = vsel %vm449, 1, 0
      %v458 = vadd.s32 %v434, %v450
      %v459 = vadd.s32 %v435, %v451
      %v460 = vadd.s32 %v436, %v452
      %v461 = vadd.s32 %v437, %v453
      %v462 = vadd.s32 %v438, %v454
      %v463 = vadd.s32 %v439, %v455
      %v464 = vadd.s32 %v440, %v456
      %v465 = vadd.s32 %v441, %v457
      %vm466 = vcmp.ge.s32.totalorder %v274, 288
      %vm467 = vcmp.ge.s32.totalorder %v275, 288
      %vm468 = vcmp.ge.s32.totalorder %v276, 288
      %vm469 = vcmp.ge.s32.totalorder %v277, 288
      %vm470 = vcmp.ge.s32.totalorder %v278, 288
      %vm471 = vcmp.ge.s32.totalorder %v279, 288
      %vm472 = vcmp.ge.s32.totalorder %v280, 288
      %vm473 = vcmp.ge.s32.totalorder %v281, 288
      %v474 = vsel %vm466, 1, 0
      %v475 = vsel %vm467, 1, 0
      %v476 = vsel %vm468, 1, 0
      %v477 = vsel %vm469, 1, 0
      %v478 = vsel %vm470, 1, 0
      %v479 = vsel %vm471, 1, 0
      %v480 = vsel %vm472, 1, 0
      %v481 = vsel %vm473, 1, 0
      %v482 = vadd.s32 %v458, %v474
      %v483 = vadd.s32 %v459, %v475
      %v484 = vadd.s32 %v460, %v476
      %v485 = vadd.s32 %v461, %v477
      %v486 = vadd.s32 %v462, %v478
      %v487 = vadd.s32 %v463, %v479
      %v488 = vadd.s32 %v464, %v480
      %v489 = vadd.s32 %v465, %v481
      %vm490 = vcmp.ge.s32.totalorder %v274, 320
      %vm491 = vcmp.ge.s32.totalorder %v275, 320
      %vm492 = vcmp.ge.s32.totalorder %v276, 320
      %vm493 = vcmp.ge.s32.totalorder %v277, 320
      %vm494 = vcmp.ge.s32.totalorder %v278, 320
      %vm495 = vcmp.ge.s32.totalorder %v279, 320
      %vm496 = vcmp.ge.s32.totalorder %v280, 320
      %vm497 = vcmp.ge.s32.totalorder %v281, 320
      %v498 = vsel %vm490, 1, 0
      %v499 = vsel %vm491, 1, 0
      %v500 = vsel %vm492, 1, 0
      %v501 = vsel %vm493, 1, 0
      %v502 = vsel %vm494, 1, 0
      %v503 = vsel %vm495, 1, 0
      %v504 = vsel %vm496, 1, 0
      %v505 = vsel %vm497, 1, 0
      %v506 = vadd.s32 %v482, %v498
      %v507 = vadd.s32 %v483, %v499
      %v508 = vadd.s32 %v484, %v500
      %v509 = vadd.s32 %v485, %v501
      %v510 = vadd.s32 %v486, %v502
      %v511 = vadd.s32 %v487, %v503
      %v512 = vadd.s32 %v488, %v504
      %v513 = vadd.s32 %v489, %v505
      %vm514 = vcmp.ge.s32.totalorder %v274, 352
      %vm515 = vcmp.ge.s32.totalorder %v275, 352
      %vm516 = vcmp.ge.s32.totalorder %v276, 352
      %vm517 = vcmp.ge.s32.totalorder %v277, 352
      %vm518 = vcmp.ge.s32.totalorder %v278, 352
      %vm519 = vcmp.ge.s32.totalorder %v279, 352
      %vm520 = vcmp.ge.s32.totalorder %v280, 352
      %vm521 = vcmp.ge.s32.totalorder %v281, 352
      %v522 = vsel %vm514, 1, 0
      %v523 = vsel %vm515, 1, 0
      %v524 = vsel %vm516, 1, 0
      %v525 = vsel %vm517, 1, 0
      %v526 = vsel %vm518, 1, 0
      %v527 = vsel %vm519, 1, 0
      %v528 = vsel %vm520, 1, 0
      %v529 = vsel %vm521, 1, 0
      %v530 = vadd.s32 %v506, %v522
      %v531 = vadd.s32 %v507, %v523
      %v532 = vadd.s32 %v508, %v524
      %v533 = vadd.s32 %v509, %v525
      %v534 = vadd.s32 %v510, %v526
      %v535 = vadd.s32 %v511, %v527
      %v536 = vadd.s32 %v512, %v528
      %v537 = vadd.s32 %v513, %v529
      %vm538 = vcmp.ge.s32.totalorder %v274, 384
      %vm539 = vcmp.ge.s32.totalorder %v275, 384
      %vm540 = vcmp.ge.s32.totalorder %v276, 384
      %vm541 = vcmp.ge.s32.totalorder %v277, 384
      %vm542 = vcmp.ge.s32.totalorder %v278, 384
      %vm543 = vcmp.ge.s32.totalorder %v279, 384
      %vm544 = vcmp.ge.s32.totalorder %v280, 384
      %vm545 = vcmp.ge.s32.totalorder %v281, 384
      %v546 = vsel %vm538, 1, 0
      %v547 = vsel %vm539, 1, 0
      %v548 = vsel %vm540, 1, 0
      %v549 = vsel %vm541, 1, 0
      %v550 = vsel %vm542, 1, 0
      %v551 = vsel %vm543, 1, 0
      %v552 = vsel %vm544, 1, 0
      %v553 = vsel %vm545, 1, 0
      %v554 = vadd.s32 %v530, %v546
      %v555 = vadd.s32 %v531, %v547
      %v556 = vadd.s32 %v532, %v548
      %v557 = vadd.s32 %v533, %v549
      %v558 = vadd.s32 %v534, %v550
      %v559 = vadd.s32 %v535, %v551
      %v560 = vadd.s32 %v536, %v552
      %v561 = vadd.s32 %v537, %v553
      %vm562 = vcmp.ge.s32.totalorder %v274, 416
      %vm563 = vcmp.ge.s32.totalorder %v275, 416
      %vm564 = vcmp.ge.s32.totalorder %v276, 416
      %vm565 = vcmp.ge.s32.totalorder %v277, 416
      %vm566 = vcmp.ge.s32.totalorder %v278, 416
      %vm567 = vcmp.ge.s32.totalorder %v279, 416
      %vm568 = vcmp.ge.s32.totalorder %v280, 416
      %vm569 = vcmp.ge.s32.totalorder %v281, 416
      %v570 = vsel %vm562, 1, 0
      %v571 = vsel %vm563, 1, 0
      %v572 = vsel %vm564, 1, 0
      %v573 = vsel %vm565, 1, 0
      %v574 = vsel %vm566, 1, 0
      %v575 = vsel %vm567, 1, 0
      %v576 = vsel %vm568, 1, 0
      %v577 = vsel %vm569, 1, 0
      %v578 = vadd.s32 %v554, %v570
      %v579 = vadd.s32 %v555, %v571
      %v580 = vadd.s32 %v556, %v572
      %v581 = vadd.s32 %v557, %v573
      %v582 = vadd.s32 %v558, %v574
      %v583 = vadd.s32 %v559, %v575
      %v584 = vadd.s32 %v560, %v576
      %v585 = vadd.s32 %v561, %v577
      %vm586 = vcmp.ge.s32.totalorder %v274, 448
      %vm587 = vcmp.ge.s32.totalorder %v275, 448
      %vm588 = vcmp.ge.s32.totalorder %v276, 448
      %vm589 = vcmp.ge.s32.totalorder %v277, 448
      %vm590 = vcmp.ge.s32.totalorder %v278, 448
      %vm591 = vcmp.ge.s32.totalorder %v279, 448
      %vm592 = vcmp.ge.s32.totalorder %v280, 448
      %vm593 = vcmp.ge.s32.totalorder %v281, 448
      %v594 = vsel %vm586, 1, 0
      %v595 = vsel %vm587, 1, 0
      %v596 = vsel %vm588, 1, 0
      %v597 = vsel %vm589, 1, 0
      %v598 = vsel %vm590, 1, 0
      %v599 = vsel %vm591, 1, 0
      %v600 = vsel %vm592, 1, 0
      %v601 = vsel %vm593, 1, 0
      %v602 = vadd.s32 %v578, %v594
      %v603 = vadd.s32 %v579, %v595
      %v604 = vadd.s32 %v580, %v596
      %v605 = vadd.s32 %v581, %v597
      %v606 = vadd.s32 %v582, %v598
      %v607 = vadd.s32 %v583, %v599
      %v608 = vadd.s32 %v584, %v600
      %v609 = vadd.s32 %v585, %v601
      %vm610 = vcmp.ge.s32.totalorder %v274, 480
      %vm611 = vcmp.ge.s32.totalorder %v275, 480
      %vm612 = vcmp.ge.s32.totalorder %v276, 480
      %vm613 = vcmp.ge.s32.totalorder %v277, 480
      %vm614 = vcmp.ge.s32.totalorder %v278, 480
      %vm615 = vcmp.ge.s32.totalorder %v279, 480
      %vm616 = vcmp.ge.s32.totalorder %v280, 480
      %vm617 = vcmp.ge.s32.totalorder %v281, 480
      %v618 = vsel %vm610, 1, 0
      %v619 = vsel %vm611, 1, 0
      %v620 = vsel %vm612, 1, 0
      %v621 = vsel %vm613, 1, 0
      %v622 = vsel %vm614, 1, 0
      %v623 = vsel %vm615, 1, 0
      %v624 = vsel %vm616, 1, 0
      %v625 = vsel %vm617, 1, 0
      %v626 = vadd.s32 %v602, %v618
      %v627 = vadd.s32 %v603, %v619
      %v628 = vadd.s32 %v604, %v620
      %v629 = vadd.s32 %v605, %v621
      %v630 = vadd.s32 %v606, %v622
      %v631 = vadd.s32 %v607, %v623
      %v632 = vadd.s32 %v608, %v624
      %v633 = vadd.s32 %v609, %v625
      %vm634 = vcmp.ge.s32.totalorder %v274, 512
      %vm635 = vcmp.ge.s32.totalorder %v275, 512
      %vm636 = vcmp.ge.s32.totalorder %v276, 512
      %vm637 = vcmp.ge.s32.totalorder %v277, 512
      %vm638 = vcmp.ge.s32.totalorder %v278, 512
      %vm639 = vcmp.ge.s32.totalorder %v279, 512
      %vm640 = vcmp.ge.s32.totalorder %v280, 512
      %vm641 = vcmp.ge.s32.totalorder %v281, 512
      %v642 = vsel %vm634, 1, 0
      %v643 = vsel %vm635, 1, 0
      %v644 = vsel %vm636, 1, 0
      %v645 = vsel %vm637, 1, 0
      %v646 = vsel %vm638, 1, 0
      %v647 = vsel %vm639, 1, 0
      %v648 = vsel %vm640, 1, 0
      %v649 = vsel %vm641, 1, 0
      %v650 = vadd.s32 %v626, %v642
      %v651 = vadd.s32 %v627, %v643
      %v652 = vadd.s32 %v628, %v644
      %v653 = vadd.s32 %v629, %v645
      %v654 = vadd.s32 %v630, %v646
      %v655 = vadd.s32 %v631, %v647
      %v656 = vadd.s32 %v632, %v648
      %v657 = vadd.s32 %v633, %v649
      %vm658 = vcmp.ge.s32.totalorder %v274, 544
      %vm659 = vcmp.ge.s32.totalorder %v275, 544
      %vm660 = vcmp.ge.s32.totalorder %v276, 544
      %vm661 = vcmp.ge.s32.totalorder %v277, 544
      %vm662 = vcmp.ge.s32.totalorder %v278, 544
      %vm663 = vcmp.ge.s32.totalorder %v279, 544
      %vm664 = vcmp.ge.s32.totalorder %v280, 544
      %vm665 = vcmp.ge.s32.totalorder %v281, 544
      %v666 = vsel %vm658, 1, 0
      %v667 = vsel %vm659, 1, 0
      %v668 = vsel %vm660, 1, 0
      %v669 = vsel %vm661, 1, 0
      %v670 = vsel %vm662, 1, 0
      %v671 = vsel %vm663, 1, 0
      %v672 = vsel %vm664, 1, 0
      %v673 = vsel %vm665, 1, 0
      %v674 = vadd.s32 %v650, %v666
      %v675 = vadd.s32 %v651, %v667
      %v676 = vadd.s32 %v652, %v668
      %v677 = vadd.s32 %v653, %v669
      %v678 = vadd.s32 %v654, %v670
      %v679 = vadd.s32 %v655, %v671
      %v680 = vadd.s32 %v656, %v672
      %v681 = vadd.s32 %v657, %v673
      %vm682 = vcmp.ge.s32.totalorder %v274, 576
      %vm683 = vcmp.ge.s32.totalorder %v275, 576
      %vm684 = vcmp.ge.s32.totalorder %v276, 576
      %vm685 = vcmp.ge.s32.totalorder %v277, 576
      %vm686 = vcmp.ge.s32.totalorder %v278, 576
      %vm687 = vcmp.ge.s32.totalorder %v279, 576
      %vm688 = vcmp.ge.s32.totalorder %v280, 576
      %vm689 = vcmp.ge.s32.totalorder %v281, 576
      %v690 = vsel %vm682, 1, 0
      %v691 = vsel %vm683, 1, 0
      %v692 = vsel %vm684, 1, 0
      %v693 = vsel %vm685, 1, 0
      %v694 = vsel %vm686, 1, 0
      %v695 = vsel %vm687, 1, 0
      %v696 = vsel %vm688, 1, 0
      %v697 = vsel %vm689, 1, 0
      %v698 = vadd.s32 %v674, %v690
      %v699 = vadd.s32 %v675, %v691
      %v700 = vadd.s32 %v676, %v692
      %v701 = vadd.s32 %v677, %v693
      %v702 = vadd.s32 %v678, %v694
      %v703 = vadd.s32 %v679, %v695
      %v704 = vadd.s32 %v680, %v696
      %v705 = vadd.s32 %v681, %v697
      %vm706 = vcmp.ge.s32.totalorder %v274, 608
      %vm707 = vcmp.ge.s32.totalorder %v275, 608
      %vm708 = vcmp.ge.s32.totalorder %v276, 608
      %vm709 = vcmp.ge.s32.totalorder %v277, 608
      %vm710 = vcmp.ge.s32.totalorder %v278, 608
      %vm711 = vcmp.ge.s32.totalorder %v279, 608
      %vm712 = vcmp.ge.s32.totalorder %v280, 608
      %vm713 = vcmp.ge.s32.totalorder %v281, 608
      %v714 = vsel %vm706, 1, 0
      %v715 = vsel %vm707, 1, 0
      %v716 = vsel %vm708, 1, 0
      %v717 = vsel %vm709, 1, 0
      %v718 = vsel %vm710, 1, 0
      %v719 = vsel %vm711, 1, 0
      %v720 = vsel %vm712, 1, 0
      %v721 = vsel %vm713, 1, 0
      %v722 = vadd.s32 %v698, %v714
      %v723 = vadd.s32 %v699, %v715
      %v724 = vadd.s32 %v700, %v716
      %v725 = vadd.s32 %v701, %v717
      %v726 = vadd.s32 %v702, %v718
      %v727 = vadd.s32 %v703, %v719
      %v728 = vadd.s32 %v704, %v720
      %v729 = vadd.s32 %v705, %v721
      %vm730 = vcmp.ge.s32.totalorder %v274, 640
      %vm731 = vcmp.ge.s32.totalorder %v275, 640
      %vm732 = vcmp.ge.s32.totalorder %v276, 640
      %vm733 = vcmp.ge.s32.totalorder %v277, 640
      %vm734 = vcmp.ge.s32.totalorder %v278, 640
      %vm735 = vcmp.ge.s32.totalorder %v279, 640
      %vm736 = vcmp.ge.s32.totalorder %v280, 640
      %vm737 = vcmp.ge.s32.totalorder %v281, 640
      %v738 = vsel %vm730, 1, 0
      %v739 = vsel %vm731, 1, 0
      %v740 = vsel %vm732, 1, 0
      %v741 = vsel %vm733, 1, 0
      %v742 = vsel %vm734, 1, 0
      %v743 = vsel %vm735, 1, 0
      %v744 = vsel %vm736, 1, 0
      %v745 = vsel %vm737, 1, 0
      %v746 = vadd.s32 %v722, %v738
      %v747 = vadd.s32 %v723, %v739
      %v748 = vadd.s32 %v724, %v740
      %v749 = vadd.s32 %v725, %v741
      %v750 = vadd.s32 %v726, %v742
      %v751 = vadd.s32 %v727, %v743
      %v752 = vadd.s32 %v728, %v744
      %v753 = vadd.s32 %v729, %v745
      %vm754 = vcmp.ge.s32.totalorder %v274, 672
      %vm755 = vcmp.ge.s32.totalorder %v275, 672
      %vm756 = vcmp.ge.s32.totalorder %v276, 672
      %vm757 = vcmp.ge.s32.totalorder %v277, 672
      %vm758 = vcmp.ge.s32.totalorder %v278, 672
      %vm759 = vcmp.ge.s32.totalorder %v279, 672
      %vm760 = vcmp.ge.s32.totalorder %v280, 672
      %vm761 = vcmp.ge.s32.totalorder %v281, 672
      %v762 = vsel %vm754, 1, 0
      %v763 = vsel %vm755, 1, 0
      %v764 = vsel %vm756, 1, 0
      %v765 = vsel %vm757, 1, 0
      %v766 = vsel %vm758, 1, 0
      %v767 = vsel %vm759, 1, 0
      %v768 = vsel %vm760, 1, 0
      %v769 = vsel %vm761, 1, 0
      %v770 = vadd.s32 %v746, %v762
      %v771 = vadd.s32 %v747, %v763
      %v772 = vadd.s32 %v748, %v764
      %v773 = vadd.s32 %v749, %v765
      %v774 = vadd.s32 %v750, %v766
      %v775 = vadd.s32 %v751, %v767
      %v776 = vadd.s32 %v752, %v768
      %v777 = vadd.s32 %v753, %v769
      %vm778 = vcmp.ge.s32.totalorder %v274, 704
      %vm779 = vcmp.ge.s32.totalorder %v275, 704
      %vm780 = vcmp.ge.s32.totalorder %v276, 704
      %vm781 = vcmp.ge.s32.totalorder %v277, 704
      %vm782 = vcmp.ge.s32.totalorder %v278, 704
      %vm783 = vcmp.ge.s32.totalorder %v279, 704
      %vm784 = vcmp.ge.s32.totalorder %v280, 704
      %vm785 = vcmp.ge.s32.totalorder %v281, 704
      %v786 = vsel %vm778, 1, 0
      %v787 = vsel %vm779, 1, 0
      %v788 = vsel %vm780, 1, 0
      %v789 = vsel %vm781, 1, 0
      %v790 = vsel %vm782, 1, 0
      %v791 = vsel %vm783, 1, 0
      %v792 = vsel %vm784, 1, 0
      %v793 = vsel %vm785, 1, 0
      %v794 = vadd.s32 %v770, %v786
      %v795 = vadd.s32 %v771, %v787
      %v796 = vadd.s32 %v772, %v788
      %v797 = vadd.s32 %v773, %v789
      %v798 = vadd.s32 %v774, %v790
      %v799 = vadd.s32 %v775, %v791
      %v800 = vadd.s32 %v776, %v792
      %v801 = vadd.s32 %v777, %v793
      %vm802 = vcmp.ge.s32.totalorder %v274, 736
      %vm803 = vcmp.ge.s32.totalorder %v275, 736
      %vm804 = vcmp.ge.s32.totalorder %v276, 736
      %vm805 = vcmp.ge.s32.totalorder %v277, 736
      %vm806 = vcmp.ge.s32.totalorder %v278, 736
      %vm807 = vcmp.ge.s32.totalorder %v279, 736
      %vm808 = vcmp.ge.s32.totalorder %v280, 736
      %vm809 = vcmp.ge.s32.totalorder %v281, 736
      %v810 = vsel %vm802, 1, 0
      %v811 = vsel %vm803, 1, 0
      %v812 = vsel %vm804, 1, 0
      %v813 = vsel %vm805, 1, 0
      %v814 = vsel %vm806, 1, 0
      %v815 = vsel %vm807, 1, 0
      %v816 = vsel %vm808, 1, 0
      %v817 = vsel %vm809, 1, 0
      %v818 = vadd.s32 %v794, %v810
      %v819 = vadd.s32 %v795, %v811
      %v820 = vadd.s32 %v796, %v812
      %v821 = vadd.s32 %v797, %v813
      %v822 = vadd.s32 %v798, %v814
      %v823 = vadd.s32 %v799, %v815
      %v824 = vadd.s32 %v800, %v816
      %v825 = vadd.s32 %v801, %v817
      %vm826 = vcmp.ge.s32.totalorder %v274, 768
      %vm827 = vcmp.ge.s32.totalorder %v275, 768
      %vm828 = vcmp.ge.s32.totalorder %v276, 768
      %vm829 = vcmp.ge.s32.totalorder %v277, 768
      %vm830 = vcmp.ge.s32.totalorder %v278, 768
      %vm831 = vcmp.ge.s32.totalorder %v279, 768
      %vm832 = vcmp.ge.s32.totalorder %v280, 768
      %vm833 = vcmp.ge.s32.totalorder %v281, 768
      %v834 = vsel %vm826, 1, 0
      %v835 = vsel %vm827, 1, 0
      %v836 = vsel %vm828, 1, 0
      %v837 = vsel %vm829, 1, 0
      %v838 = vsel %vm830, 1, 0
      %v839 = vsel %vm831, 1, 0
      %v840 = vsel %vm832, 1, 0
      %v841 = vsel %vm833, 1, 0
      %v842 = vadd.s32 %v818, %v834
      %v843 = vadd.s32 %v819, %v835
      %v844 = vadd.s32 %v820, %v836
      %v845 = vadd.s32 %v821, %v837
      %v846 = vadd.s32 %v822, %v838
      %v847 = vadd.s32 %v823, %v839
      %v848 = vadd.s32 %v824, %v840
      %v849 = vadd.s32 %v825, %v841
      %vm850 = vcmp.ge.s32.totalorder %v274, 800
      %vm851 = vcmp.ge.s32.totalorder %v275, 800
      %vm852 = vcmp.ge.s32.totalorder %v276, 800
      %vm853 = vcmp.ge.s32.totalorder %v277, 800
      %vm854 = vcmp.ge.s32.totalorder %v278, 800
      %vm855 = vcmp.ge.s32.totalorder %v279, 800
      %vm856 = vcmp.ge.s32.totalorder %v280, 800
      %vm857 = vcmp.ge.s32.totalorder %v281, 800
      %v858 = vsel %vm850, 1, 0
      %v859 = vsel %vm851, 1, 0
      %v860 = vsel %vm852, 1, 0
      %v861 = vsel %vm853, 1, 0
      %v862 = vsel %vm854, 1, 0
      %v863 = vsel %vm855, 1, 0
      %v864 = vsel %vm856, 1, 0
      %v865 = vsel %vm857, 1, 0
      %v866 = vadd.s32 %v842, %v858
      %v867 = vadd.s32 %v843, %v859
      %v868 = vadd.s32 %v844, %v860
      %v869 = vadd.s32 %v845, %v861
      %v870 = vadd.s32 %v846, %v862
      %v871 = vadd.s32 %v847, %v863
      %v872 = vadd.s32 %v848, %v864
      %v873 = vadd.s32 %v849, %v865
      %vm874 = vcmp.ge.s32.totalorder %v274, 832
      %vm875 = vcmp.ge.s32.totalorder %v275, 832
      %vm876 = vcmp.ge.s32.totalorder %v276, 832
      %vm877 = vcmp.ge.s32.totalorder %v277, 832
      %vm878 = vcmp.ge.s32.totalorder %v278, 832
      %vm879 = vcmp.ge.s32.totalorder %v279, 832
      %vm880 = vcmp.ge.s32.totalorder %v280, 832
      %vm881 = vcmp.ge.s32.totalorder %v281, 832
      %v882 = vsel %vm874, 1, 0
      %v883 = vsel %vm875, 1, 0
      %v884 = vsel %vm876, 1, 0
      %v885 = vsel %vm877, 1, 0
      %v886 = vsel %vm878, 1, 0
      %v887 = vsel %vm879, 1, 0
      %v888 = vsel %vm880, 1, 0
      %v889 = vsel %vm881, 1, 0
      %v890 = vadd.s32 %v866, %v882
      %v891 = vadd.s32 %v867, %v883
      %v892 = vadd.s32 %v868, %v884
      %v893 = vadd.s32 %v869, %v885
      %v894 = vadd.s32 %v870, %v886
      %v895 = vadd.s32 %v871, %v887
      %v896 = vadd.s32 %v872, %v888
      %v897 = vadd.s32 %v873, %v889
      %vm898 = vcmp.ge.s32.totalorder %v274, 864
      %vm899 = vcmp.ge.s32.totalorder %v275, 864
      %vm900 = vcmp.ge.s32.totalorder %v276, 864
      %vm901 = vcmp.ge.s32.totalorder %v277, 864
      %vm902 = vcmp.ge.s32.totalorder %v278, 864
      %vm903 = vcmp.ge.s32.totalorder %v279, 864
      %vm904 = vcmp.ge.s32.totalorder %v280, 864
      %vm905 = vcmp.ge.s32.totalorder %v281, 864
      %v906 = vsel %vm898, 1, 0
      %v907 = vsel %vm899, 1, 0
      %v908 = vsel %vm900, 1, 0
      %v909 = vsel %vm901, 1, 0
      %v910 = vsel %vm902, 1, 0
      %v911 = vsel %vm903, 1, 0
      %v912 = vsel %vm904, 1, 0
      %v913 = vsel %vm905, 1, 0
      %v914 = vadd.s32 %v890, %v906
      %v915 = vadd.s32 %v891, %v907
      %v916 = vadd.s32 %v892, %v908
      %v917 = vadd.s32 %v893, %v909
      %v918 = vadd.s32 %v894, %v910
      %v919 = vadd.s32 %v895, %v911
      %v920 = vadd.s32 %v896, %v912
      %v921 = vadd.s32 %v897, %v913
      %vm922 = vcmp.ge.s32.totalorder %v274, 896
      %vm923 = vcmp.ge.s32.totalorder %v275, 896
      %vm924 = vcmp.ge.s32.totalorder %v276, 896
      %vm925 = vcmp.ge.s32.totalorder %v277, 896
      %vm926 = vcmp.ge.s32.totalorder %v278, 896
      %vm927 = vcmp.ge.s32.totalorder %v279, 896
      %vm928 = vcmp.ge.s32.totalorder %v280, 896
      %vm929 = vcmp.ge.s32.totalorder %v281, 896
      %v930 = vsel %vm922, 1, 0
      %v931 = vsel %vm923, 1, 0
      %v932 = vsel %vm924, 1, 0
      %v933 = vsel %vm925, 1, 0
      %v934 = vsel %vm926, 1, 0
      %v935 = vsel %vm927, 1, 0
      %v936 = vsel %vm928, 1, 0
      %v937 = vsel %vm929, 1, 0
      %v938 = vadd.s32 %v914, %v930
      %v939 = vadd.s32 %v915, %v931
      %v940 = vadd.s32 %v916, %v932
      %v941 = vadd.s32 %v917, %v933
      %v942 = vadd.s32 %v918, %v934
      %v943 = vadd.s32 %v919, %v935
      %v944 = vadd.s32 %v920, %v936
      %v945 = vadd.s32 %v921, %v937
      %vm946 = vcmp.ge.s32.totalorder %v274, 928
      %vm947 = vcmp.ge.s32.totalorder %v275, 928
      %vm948 = vcmp.ge.s32.totalorder %v276, 928
      %vm949 = vcmp.ge.s32.totalorder %v277, 928
      %vm950 = vcmp.ge.s32.totalorder %v278, 928
      %vm951 = vcmp.ge.s32.totalorder %v279, 928
      %vm952 = vcmp.ge.s32.totalorder %v280, 928
      %vm953 = vcmp.ge.s32.totalorder %v281, 928
      %v954 = vsel %vm946, 1, 0
      %v955 = vsel %vm947, 1, 0
      %v956 = vsel %vm948, 1, 0
      %v957 = vsel %vm949, 1, 0
      %v958 = vsel %vm950, 1, 0
      %v959 = vsel %vm951, 1, 0
      %v960 = vsel %vm952, 1, 0
      %v961 = vsel %vm953, 1, 0
      %v962 = vadd.s32 %v938, %v954
      %v963 = vadd.s32 %v939, %v955
      %v964 = vadd.s32 %v940, %v956
      %v965 = vadd.s32 %v941, %v957
      %v966 = vadd.s32 %v942, %v958
      %v967 = vadd.s32 %v943, %v959
      %v968 = vadd.s32 %v944, %v960
      %v969 = vadd.s32 %v945, %v961
      %vm970 = vcmp.ge.s32.totalorder %v274, 960
      %vm971 = vcmp.ge.s32.totalorder %v275, 960
      %vm972 = vcmp.ge.s32.totalorder %v276, 960
      %vm973 = vcmp.ge.s32.totalorder %v277, 960
      %vm974 = vcmp.ge.s32.totalorder %v278, 960
      %vm975 = vcmp.ge.s32.totalorder %v279, 960
      %vm976 = vcmp.ge.s32.totalorder %v280, 960
      %vm977 = vcmp.ge.s32.totalorder %v281, 960
      %v978 = vsel %vm970, 1, 0
      %v979 = vsel %vm971, 1, 0
      %v980 = vsel %vm972, 1, 0
      %v981 = vsel %vm973, 1, 0
      %v982 = vsel %vm974, 1, 0
      %v983 = vsel %vm975, 1, 0
      %v984 = vsel %vm976, 1, 0
      %v985 = vsel %vm977, 1, 0
      %v986 = vadd.s32 %v962, %v978
      %v987 = vadd.s32 %v963, %v979
      %v988 = vadd.s32 %v964, %v980
      %v989 = vadd.s32 %v965, %v981
      %v990 = vadd.s32 %v966, %v982
      %v991 = vadd.s32 %v967, %v983
      %v992 = vadd.s32 %v968, %v984
      %v993 = vadd.s32 %v969, %v985
      %vm994 = vcmp.ge.s32.totalorder %v274, 992
      %vm995 = vcmp.ge.s32.totalorder %v275, 992
      %vm996 = vcmp.ge.s32.totalorder %v276, 992
      %vm997 = vcmp.ge.s32.totalorder %v277, 992
      %vm998 = vcmp.ge.s32.totalorder %v278, 992
      %vm999 = vcmp.ge.s32.totalorder %v279, 992
      %vm1000 = vcmp.ge.s32.totalorder %v280, 992
      %vm1001 = vcmp.ge.s32.totalorder %v281, 992
      %v1002 = vsel %vm994, 1, 0
      %v1003 = vsel %vm995, 1, 0
      %v1004 = vsel %vm996, 1, 0
      %v1005 = vsel %vm997, 1, 0
      %v1006 = vsel %vm998, 1, 0
      %v1007 = vsel %vm999, 1, 0
      %v1008 = vsel %vm1000, 1, 0
      %v1009 = vsel %vm1001, 1, 0
      %v1010 = vadd.s32 %v986, %v1002
      %v1011 = vadd.s32 %v987, %v1003
      %v1012 = vadd.s32 %v988, %v1004
      %v1013 = vadd.s32 %v989, %v1005
      %v1014 = vadd.s32 %v990, %v1006
      %v1015 = vadd.s32 %v991, %v1007
      %v1016 = vadd.s32 %v992, %v1008
      %v1017 = vadd.s32 %v993, %v1009
      %v1018 = vmul.u32 %v1010, 32
      %v1019 = vmul.u32 %v1011, 32
      %v1020 = vmul.u32 %v1012, 32
      %v1021 = vmul.u32 %v1013, 32
      %v1022 = vmul.u32 %v1014, 32
      %v1023 = vmul.u32 %v1015, 32
      %v1024 = vmul.u32 %v1016, 32
      %v1025 = vmul.u32 %v1017, 32
      %v1026 = vsub.s32 %v274, %v1018
      %v1027 = vsub.s32 %v275, %v1019
      %v1028 = vsub.s32 %v276, %v1020
      %v1029 = vsub.s32 %v277, %v1021
      %v1030 = vsub.s32 %v278, %v1022
      %v1031 = vsub.s32 %v279, %v1023
      %v1032 = vsub.s32 %v280, %v1024
      %v1033 = vsub.s32 %v281, %v1025
      %v1034 = vcvt.s32.f32 %v1010
      %v1035 = vcvt.s32.f32 %v1011
      %v1036 = vcvt.s32.f32 %v1012
      %v1037 = vcvt.s32.f32 %v1013
      %v1038 = vcvt.s32.f32 %v1014
      %v1039 = vcvt.s32.f32 %v1015
      %v1040 = vcvt.s32.f32 %v1016
      %v1041 = vcvt.s32.f32 %v1017
      %v1042 = vmul.f32 %v1034, 0.5
      %v1043 = vmul.f32 %v1035, 0.5
      %v1044 = vmul.f32 %v1036, 0.5
      %v1045 = vmul.f32 %v1037, 0.5
      %v1046 = vmul.f32 %v1038, 0.5
      %v1047 = vmul.f32 %v1039, 0.5
      %v1048 = vmul.f32 %v1040, 0.5
      %v1049 = vmul.f32 %v1041, 0.5
      %v1050 = vfloor.f32 %v1042
      %v1051 = vfloor.f32 %v1043
      %v1052 = vfloor.f32 %v1044
      %v1053 = vfloor.f32 %v1045
      %v1054 = vfloor.f32 %v1046
      %v1055 = vfloor.f32 %v1047
      %v1056 = vfloor.f32 %v1048
      %v1057 = vfloor.f32 %v1049
      %v1058 = vmul.f32 %v1050, 2.0
      %v1059 = vmul.f32 %v1051, 2.0
      %v1060 = vmul.f32 %v1052, 2.0
      %v1061 = vmul.f32 %v1053, 2.0
      %v1062 = vmul.f32 %v1054, 2.0
      %v1063 = vmul.f32 %v1055, 2.0
      %v1064 = vmul.f32 %v1056, 2.0
      %v1065 = vmul.f32 %v1057, 2.0
      %v1066 = vsub.f32 %v1034, %v1058
      %v1067 = vsub.f32 %v1035, %v1059
      %v1068 = vsub.f32 %v1036, %v1060
      %v1069 = vsub.f32 %v1037, %v1061
      %v1070 = vsub.f32 %v1038, %v1062
      %v1071 = vsub.f32 %v1039, %v1063
      %v1072 = vsub.f32 %v1040, %v1064
      %v1073 = vsub.f32 %v1041, %v1065
      %vm1074 = vcmp.gt.f32.partialorder %v1066, 0.5
      %vm1075 = vcmp.gt.f32.partialorder %v1067, 0.5
      %vm1076 = vcmp.gt.f32.partialorder %v1068, 0.5
      %vm1077 = vcmp.gt.f32.partialorder %v1069, 0.5
      %vm1078 = vcmp.gt.f32.partialorder %v1070, 0.5
      %vm1079 = vcmp.gt.f32.partialorder %v1071, 0.5
      %vm1080 = vcmp.gt.f32.partialorder %v1072, 0.5
      %vm1081 = vcmp.gt.f32.partialorder %v1073, 0.5
      %v1082 = vcvt.s32.f32 %v1026
      %v1083 = vcvt.s32.f32 %v1027
      %v1084 = vcvt.s32.f32 %v1028
      %v1085 = vcvt.s32.f32 %v1029
      %v1086 = vcvt.s32.f32 %v1030
      %v1087 = vcvt.s32.f32 %v1031
      %v1088 = vcvt.s32.f32 %v1032
      %v1089 = vcvt.s32.f32 %v1033
      %v1090 = vmul.f32 %v1082, 0.5
      %v1091 = vmul.f32 %v1083, 0.5
      %v1092 = vmul.f32 %v1084, 0.5
      %v1093 = vmul.f32 %v1085, 0.5
      %v1094 = vmul.f32 %v1086, 0.5
      %v1095 = vmul.f32 %v1087, 0.5
      %v1096 = vmul.f32 %v1088, 0.5
      %v1097 = vmul.f32 %v1089, 0.5
      %v1098 = vfloor.f32 %v1090
      %v1099 = vfloor.f32 %v1091
      %v1100 = vfloor.f32 %v1092
      %v1101 = vfloor.f32 %v1093
      %v1102 = vfloor.f32 %v1094
      %v1103 = vfloor.f32 %v1095
      %v1104 = vfloor.f32 %v1096
      %v1105 = vfloor.f32 %v1097
      %v1106 = vmul.f32 %v1098, 2.0
      %v1107 = vmul.f32 %v1099, 2.0
      %v1108 = vmul.f32 %v1100, 2.0
      %v1109 = vmul.f32 %v1101, 2.0
      %v1110 = vmul.f32 %v1102, 2.0
      %v1111 = vmul.f32 %v1103, 2.0
      %v1112 = vmul.f32 %v1104, 2.0
      %v1113 = vmul.f32 %v1105, 2.0
      %v1114 = vsub.f32 %v1082, %v1106
      %v1115 = vsub.f32 %v1083, %v1107
      %v1116 = vsub.f32 %v1084, %v1108
      %v1117 = vsub.f32 %v1085, %v1109
      %v1118 = vsub.f32 %v1086, %v1110
      %v1119 = vsub.f32 %v1087, %v1111
      %v1120 = vsub.f32 %v1088, %v1112
      %v1121 = vsub.f32 %v1089, %v1113
      %vm1122 = vcmp.gt.f32.partialorder %v1114, 0.5
      %vm1123 = vcmp.gt.f32.partialorder %v1115, 0.5
      %vm1124 = vcmp.gt.f32.partialorder %v1116, 0.5
      %vm1125 = vcmp.gt.f32.partialorder %v1117, 0.5
      %vm1126 = vcmp.gt.f32.partialorder %v1118, 0.5
      %vm1127 = vcmp.gt.f32.partialorder %v1119, 0.5
      %vm1128 = vcmp.gt.f32.partialorder %v1120, 0.5
      %vm1129 = vcmp.gt.f32.partialorder %v1121, 0.5
      %v1130 = vld [vmem:[%s2] sm:$0xf]
      %v1131 = vld [vmem:[%s2 + $0x4] sm:$0xf]
      %v1132 = vld [vmem:[%s2 + $0x8] sm:$0xf]
      %v1133 = vld [vmem:[%s2 + $0xc] sm:$0xf]
      %v1134 = vld [vmem:[%s2 + $0x10] sm:$0xf]
      %v1135 = vld [vmem:[%s2 + $0x14] sm:$0xf]
      %v1136 = vld [vmem:[%s2 + $0x18] sm:$0xf]
      %v1137 = vld [vmem:[%s2 + $0x1c] sm:$0xf]
      %v1138 = vld [vmem:[%s261] sm:$0xff]
      %v1139 = vld [vmem:[%s261 + $0x8] sm:$0xff]
      %v1140 = vld [vmem:[%s261 + $0x10] sm:$0xff]
      %v1141 = vld [vmem:[%s261 + $0x18] sm:$0xff]
      %v1142 = vld [vmem:[%s261 + $0x20] sm:$0xff]
      %v1143 = vld [vmem:[%s261 + $0x28] sm:$0xff]
      %v1144 = vld [vmem:[%s261 + $0x30] sm:$0xff]
      %v1145 = vld [vmem:[%s261 + $0x38] sm:$0xff]
      %v1146 = vld [vmem:[%s261 + $0x40] sm:$0xff]
      %v1147 = vld [vmem:[%s261 + $0x48] sm:$0xff]
      %v1148 = vld [vmem:[%s261 + $0x50] sm:$0xff]
      %v1149 = vld [vmem:[%s261 + $0x58] sm:$0xff]
      %v1150 = vld [vmem:[%s261 + $0x60] sm:$0xff]
      %v1151 = vld [vmem:[%s261 + $0x68] sm:$0xff]
      %v1152 = vld [vmem:[%s261 + $0x70] sm:$0xff]
      %v1153 = vld [vmem:[%s261 + $0x78] sm:$0xff]
      %v1162 = vunpack.c.l.b16 %v1130
      %v1163 = vunpack.c.l.b16 %v1131
      %v1164 = vunpack.c.l.b16 %v1132
      %v1165 = vunpack.c.l.b16 %v1133
      %v1166 = vunpack.c.l.b16 %v1134
      %v1167 = vunpack.c.l.b16 %v1135
      %v1168 = vunpack.c.l.b16 %v1136
      %v1169 = vunpack.c.l.b16 %v1137
      %v1170 = vpack.c.b16 %v1163, %v1162
      %v1171 = vpack.c.b16 %v1165, %v1164
      %v1172 = vpack.c.b16 %v1167, %v1166
      %v1173 = vpack.c.b16 %v1169, %v1168
      %v1190 = vunpack.c.l.b16 %v1138
      %v1191 = vunpack.c.h.b16 %v1138
      %v1192 = vunpack.c.l.b16 %v1139
      %v1193 = vunpack.c.h.b16 %v1139
      %v1194 = vunpack.c.l.b16 %v1140
      %v1195 = vunpack.c.h.b16 %v1140
      %v1196 = vunpack.c.l.b16 %v1141
      %v1197 = vunpack.c.h.b16 %v1141
      %v1198 = vunpack.c.l.b16 %v1142
      %v1199 = vunpack.c.h.b16 %v1142
      %v1200 = vunpack.c.l.b16 %v1143
      %v1201 = vunpack.c.h.b16 %v1143
      %v1202 = vunpack.c.l.b16 %v1144
      %v1203 = vunpack.c.h.b16 %v1144
      %v1204 = vunpack.c.l.b16 %v1145
      %v1205 = vunpack.c.h.b16 %v1145
      %v1206 = vunpack.c.l.b16 %v1146
      %v1207 = vunpack.c.h.b16 %v1146
      %v1208 = vunpack.c.l.b16 %v1147
      %v1209 = vunpack.c.h.b16 %v1147
      %v1210 = vunpack.c.l.b16 %v1148
      %v1211 = vunpack.c.h.b16 %v1148
      %v1212 = vunpack.c.l.b16 %v1149
      %v1213 = vunpack.c.h.b16 %v1149
      %v1214 = vunpack.c.l.b16 %v1150
      %v1215 = vunpack.c.h.b16 %v1150
      %v1216 = vunpack.c.l.b16 %v1151
      %v1217 = vunpack.c.h.b16 %v1151
      %v1218 = vunpack.c.l.b16 %v1152
      %v1219 = vunpack.c.h.b16 %v1152
      %v1220 = vunpack.c.l.b16 %v1153
      %v1221 = vunpack.c.h.b16 %v1153
      %v1222 = vpack.c.b16 %v1198, %v1190
      %v1223 = vpack.c.b16 %v1199, %v1191
      %v1224 = vpack.c.b16 %v1200, %v1192
      %v1225 = vpack.c.b16 %v1201, %v1193
      %v1226 = vpack.c.b16 %v1202, %v1194
      %v1227 = vpack.c.b16 %v1203, %v1195
      %v1228 = vpack.c.b16 %v1204, %v1196
      %v1229 = vpack.c.b16 %v1205, %v1197
      %v1230 = vpack.c.b16 %v1214, %v1206
      %v1231 = vpack.c.b16 %v1215, %v1207
      %v1232 = vpack.c.b16 %v1216, %v1208
      %v1233 = vpack.c.b16 %v1217, %v1209
      %v1234 = vpack.c.b16 %v1218, %v1210
      %v1235 = vpack.c.b16 %v1219, %v1211
      %v1236 = vpack.c.b16 %v1220, %v1212
      %v1237 = vpack.c.b16 %v1221, %v1213
      %vm1254 = vcmask 261120
      %v1256 = vsel %vm1254, %v1170, 0
      %v1259 = vsel %vm1254, %v1171, 0
      %v1262 = vsel %vm1254, %v1172, 0
      %v1265 = vsel %vm1254, %v1173, 0
      %1267 = vmatpush.bf16.msra.mxu0 0
      %1268 = vmatpush.bf16.msra.mxu0 0
      %1269 = vmatpush.bf16.msra.mxu0 0
      %1270 = vmatpush.bf16.msra.mxu0 0
      %1271 = vmatpush.bf16.msra.mxu0 0
      %1272 = vmatpush.bf16.msra.mxu0 0
      %1273 = vmatpush.bf16.msra.mxu0 %v1230
      %1274 = vmatpush.bf16.msra.mxu0 %v1222
      %1275 = vmatmul.bf16.gmra.mxu0 %v1256
      %v1276 = vpop.f32.mrf.mxu0
      %v1277 = vadd.f32 0.0, %v1276
      %v1278 = vpop.f32.mrf.mxu0
      %v1279 = vadd.f32 0.0, %v1278
      %1280 = vmatmul.bf16.gmra.mxu0 %v1259
      %v1281 = vpop.f32.mrf.mxu0
      %v1282 = vadd.f32 0.0, %v1281
      %v1283 = vpop.f32.mrf.mxu0
      %v1284 = vadd.f32 0.0, %v1283
      %1285 = vmatmul.bf16.gmra.mxu0 %v1262
      %v1286 = vpop.f32.mrf.mxu0
      %v1287 = vadd.f32 0.0, %v1286
      %v1288 = vpop.f32.mrf.mxu0
      %v1289 = vadd.f32 0.0, %v1288
      %1290 = vmatmul.bf16.gmra.mxu0 %v1265
      %v1291 = vpop.f32.mrf.mxu0
      %v1292 = vadd.f32 0.0, %v1291
      %v1293 = vpop.f32.mrf.mxu0
      %v1294 = vadd.f32 0.0, %v1293
      %1295 = vdwg.mxu0
      %1296 = vmatpush.bf16.msra.mxu0 0
      %1297 = vmatpush.bf16.msra.mxu0 0
      %1298 = vmatpush.bf16.msra.mxu0 0
      %1299 = vmatpush.bf16.msra.mxu0 0
      %1300 = vmatpush.bf16.msra.mxu0 0
      %1301 = vmatpush.bf16.msra.mxu0 0
      %1302 = vmatpush.bf16.msra.mxu0 %v1231
      %1303 = vmatpush.bf16.msra.mxu0 %v1223
      %1304 = vmatmul.bf16.gmra.mxu0 %v1256
      %v1305 = vpop.f32.mrf.mxu0
      %v1306 = vadd.f32 0.0, %v1305
      %v1307 = vpop.f32.mrf.mxu0
      %v1308 = vadd.f32 0.0, %v1307
      %1309 = vmatmul.bf16.gmra.mxu0 %v1259
      %v1310 = vpop.f32.mrf.mxu0
      %v1311 = vadd.f32 0.0, %v1310
      %v1312 = vpop.f32.mrf.mxu0
      %v1313 = vadd.f32 0.0, %v1312
      %1314 = vmatmul.bf16.gmra.mxu0 %v1262
      %v1315 = vpop.f32.mrf.mxu0
      %v1316 = vadd.f32 0.0, %v1315
      %v1317 = vpop.f32.mrf.mxu0
      %v1318 = vadd.f32 0.0, %v1317
      %1319 = vmatmul.bf16.gmra.mxu0 %v1265
      %v1320 = vpop.f32.mrf.mxu0
      %v1321 = vadd.f32 0.0, %v1320
      %v1322 = vpop.f32.mrf.mxu0
      %v1323 = vadd.f32 0.0, %v1322
      %1324 = vdwg.mxu0
      %1325 = vmatpush.bf16.msra.mxu0 0
      %1326 = vmatpush.bf16.msra.mxu0 0
      %1327 = vmatpush.bf16.msra.mxu0 0
      %1328 = vmatpush.bf16.msra.mxu0 0
      %1329 = vmatpush.bf16.msra.mxu0 0
      %1330 = vmatpush.bf16.msra.mxu0 0
      %1331 = vmatpush.bf16.msra.mxu0 %v1232
      %1332 = vmatpush.bf16.msra.mxu0 %v1224
      %1333 = vmatmul.bf16.gmra.mxu0 %v1256
      %v1334 = vpop.f32.mrf.mxu0
      %v1335 = vadd.f32 0.0, %v1334
      %v1336 = vpop.f32.mrf.mxu0
      %v1337 = vadd.f32 0.0, %v1336
      %1338 = vmatmul.bf16.gmra.mxu0 %v1259
      %v1339 = vpop.f32.mrf.mxu0
      %v1340 = vadd.f32 0.0, %v1339
      %v1341 = vpop.f32.mrf.mxu0
      %v1342 = vadd.f32 0.0, %v1341
      %1343 = vmatmul.bf16.gmra.mxu0 %v1262
      %v1344 = vpop.f32.mrf.mxu0
      %v1345 = vadd.f32 0.0, %v1344
      %v1346 = vpop.f32.mrf.mxu0
      %v1347 = vadd.f32 0.0, %v1346
      %1348 = vmatmul.bf16.gmra.mxu0 %v1265
      %v1349 = vpop.f32.mrf.mxu0
      %v1350 = vadd.f32 0.0, %v1349
      %v1351 = vpop.f32.mrf.mxu0
      %v1352 = vadd.f32 0.0, %v1351
      %1353 = vdwg.mxu0
      %1354 = vmatpush.bf16.msra.mxu0 0
      %1355 = vmatpush.bf16.msra.mxu0 0
      %1356 = vmatpush.bf16.msra.mxu0 0
      %1357 = vmatpush.bf16.msra.mxu0 0
      %1358 = vmatpush.bf16.msra.mxu0 0
      %1359 = vmatpush.bf16.msra.mxu0 0
      %1360 = vmatpush.bf16.msra.mxu0 %v1233
      %1361 = vmatpush.bf16.msra.mxu0 %v1225
      %1362 = vmatmul.bf16.gmra.mxu0 %v1256
      %v1363 = vpop.f32.mrf.mxu0
      %v1364 = vadd.f32 0.0, %v1363
      %v1365 = vpop.f32.mrf.mxu0
      %v1366 = vadd.f32 0.0, %v1365
      %1367 = vmatmul.bf16.gmra.mxu0 %v1259
      %v1368 = vpop.f32.mrf.mxu0
      %v1369 = vadd.f32 0.0, %v1368
      %v1370 = vpop.f32.mrf.mxu0
      %v1371 = vadd.f32 0.0, %v1370
      %1372 = vmatmul.bf16.gmra.mxu0 %v1262
      %v1373 = vpop.f32.mrf.mxu0
      %v1374 = vadd.f32 0.0, %v1373
      %v1375 = vpop.f32.mrf.mxu0
      %v1376 = vadd.f32 0.0, %v1375
      %1377 = vmatmul.bf16.gmra.mxu0 %v1265
      %v1378 = vpop.f32.mrf.mxu0
      %v1379 = vadd.f32 0.0, %v1378
      %v1380 = vpop.f32.mrf.mxu0
      %v1381 = vadd.f32 0.0, %v1380
      %1382 = vdwg.mxu0
      %1383 = vmatpush.bf16.msra.mxu0 0
      %1384 = vmatpush.bf16.msra.mxu0 0
      %1385 = vmatpush.bf16.msra.mxu0 0
      %1386 = vmatpush.bf16.msra.mxu0 0
      %1387 = vmatpush.bf16.msra.mxu0 0
      %1388 = vmatpush.bf16.msra.mxu0 0
      %1389 = vmatpush.bf16.msra.mxu0 %v1234
      %1390 = vmatpush.bf16.msra.mxu0 %v1226
      %1391 = vmatmul.bf16.gmra.mxu0 %v1256
      %v1392 = vpop.f32.mrf.mxu0
      %v1393 = vadd.f32 0.0, %v1392
      %v1394 = vpop.f32.mrf.mxu0
      %v1395 = vadd.f32 0.0, %v1394
      %1396 = vmatmul.bf16.gmra.mxu0 %v1259
      %v1397 = vpop.f32.mrf.mxu0
      %v1398 = vadd.f32 0.0, %v1397
      %v1399 = vpop.f32.mrf.mxu0
      %v1400 = vadd.f32 0.0, %v1399
      %1401 = vmatmul.bf16.gmra.mxu0 %v1262
      %v1402 = vpop.f32.mrf.mxu0
      %v1403 = vadd.f32 0.0, %v1402
      %v1404 = vpop.f32.mrf.mxu0
      %v1405 = vadd.f32 0.0, %v1404
      %1406 = vmatmul.bf16.gmra.mxu0 %v1265
      %v1407 = vpop.f32.mrf.mxu0
      %v1408 = vadd.f32 0.0, %v1407
      %v1409 = vpop.f32.mrf.mxu0
      %v1410 = vadd.f32 0.0, %v1409
      %1411 = vdwg.mxu0
      %1412 = vmatpush.bf16.msra.mxu0 0
      %1413 = vmatpush.bf16.msra.mxu0 0
      %1414 = vmatpush.bf16.msra.mxu0 0
      %1415 = vmatpush.bf16.msra.mxu0 0
      %1416 = vmatpush.bf16.msra.mxu0 0
      %1417 = vmatpush.bf16.msra.mxu0 0
      %1418 = vmatpush.bf16.msra.mxu0 %v1235
      %1419 = vmatpush.bf16.msra.mxu0 %v1227
      %1420 = vmatmul.bf16.gmra.mxu0 %v1256
      %v1421 = vpop.f32.mrf.mxu0
      %v1422 = vadd.f32 0.0, %v1421
      %v1423 = vpop.f32.mrf.mxu0
      %v1424 = vadd.f32 0.0, %v1423
      %1425 = vmatmul.bf16.gmra.mxu0 %v1259
      %v1426 = vpop.f32.mrf.mxu0
      %v1427 = vadd.f32 0.0, %v1426
      %v1428 = vpop.f32.mrf.mxu0
      %v1429 = vadd.f32 0.0, %v1428
      %1430 = vmatmul.bf16.gmra.mxu0 %v1262
      %v1431 = vpop.f32.mrf.mxu0
      %v1432 = vadd.f32 0.0, %v1431
      %v1433 = vpop.f32.mrf.mxu0
      %v1434 = vadd.f32 0.0, %v1433
      %1435 = vmatmul.bf16.gmra.mxu0 %v1265
      %v1436 = vpop.f32.mrf.mxu0
      %v1437 = vadd.f32 0.0, %v1436
      %v1438 = vpop.f32.mrf.mxu0
      %v1439 = vadd.f32 0.0, %v1438
      %1440 = vdwg.mxu0
      %1441 = vmatpush.bf16.msra.mxu0 0
      %1442 = vmatpush.bf16.msra.mxu0 0
      %1443 = vmatpush.bf16.msra.mxu0 0
      %1444 = vmatpush.bf16.msra.mxu0 0
      %1445 = vmatpush.bf16.msra.mxu0 0
      %1446 = vmatpush.bf16.msra.mxu0 0
      %1447 = vmatpush.bf16.msra.mxu0 %v1236
      %1448 = vmatpush.bf16.msra.mxu0 %v1228
      %1449 = vmatmul.bf16.gmra.mxu0 %v1256
      %v1450 = vpop.f32.mrf.mxu0
      %v1451 = vadd.f32 0.0, %v1450
      %v1452 = vpop.f32.mrf.mxu0
      %v1453 = vadd.f32 0.0, %v1452
      %1454 = vmatmul.bf16.gmra.mxu0 %v1259
      %v1455 = vpop.f32.mrf.mxu0
      %v1456 = vadd.f32 0.0, %v1455
      %v1457 = vpop.f32.mrf.mxu0
      %v1458 = vadd.f32 0.0, %v1457
      %1459 = vmatmul.bf16.gmra.mxu0 %v1262
      %v1460 = vpop.f32.mrf.mxu0
      %v1461 = vadd.f32 0.0, %v1460
      %v1462 = vpop.f32.mrf.mxu0
      %v1463 = vadd.f32 0.0, %v1462
      %1464 = vmatmul.bf16.gmra.mxu0 %v1265
      %v1465 = vpop.f32.mrf.mxu0
      %v1466 = vadd.f32 0.0, %v1465
      %v1467 = vpop.f32.mrf.mxu0
      %v1468 = vadd.f32 0.0, %v1467
      %1469 = vdwg.mxu0
      %1470 = vmatpush.bf16.msra.mxu0 0
      %1471 = vmatpush.bf16.msra.mxu0 0
      %1472 = vmatpush.bf16.msra.mxu0 0
      %1473 = vmatpush.bf16.msra.mxu0 0
      %1474 = vmatpush.bf16.msra.mxu0 0
      %1475 = vmatpush.bf16.msra.mxu0 0
      %1476 = vmatpush.bf16.msra.mxu0 %v1237
      %1477 = vmatpush.bf16.msra.mxu0 %v1229
      %1478 = vmatmul.bf16.gmra.mxu0 %v1256
      %v1479 = vpop.f32.mrf.mxu0
      %v1480 = vadd.f32 0.0, %v1479
      %v1481 = vpop.f32.mrf.mxu0
      %v1482 = vadd.f32 0.0, %v1481
      %1483 = vmatmul.bf16.gmra.mxu0 %v1259
      %v1484 = vpop.f32.mrf.mxu0
      %v1485 = vadd.f32 0.0, %v1484
      %v1486 = vpop.f32.mrf.mxu0
      %v1487 = vadd.f32 0.0, %v1486
      %1488 = vmatmul.bf16.gmra.mxu0 %v1262
      %v1489 = vpop.f32.mrf.mxu0
      %v1490 = vadd.f32 0.0, %v1489
      %v1491 = vpop.f32.mrf.mxu0
      %v1492 = vadd.f32 0.0, %v1491
      %1493 = vmatmul.bf16.gmra.mxu0 %v1265
      %v1494 = vpop.f32.mrf.mxu0
      %v1495 = vadd.f32 0.0, %v1494
      %v1496 = vpop.f32.mrf.mxu0
      %v1497 = vadd.f32 0.0, %v1496
      %1498 = vdwg.mxu0
      %1499 = vst [vmem:[#allocation2] sm:$0xff] %v1277
      %1500 = vst [vmem:[#allocation2 + $0x8] sm:$0xff] %v1306
      %1501 = vst [vmem:[#allocation2 + $0x10] sm:$0xff] %v1335
      %1502 = vst [vmem:[#allocation2 + $0x18] sm:$0xff] %v1364
      %1503 = vst [vmem:[#allocation2 + $0x20] sm:$0xff] %v1393
      %1504 = vst [vmem:[#allocation2 + $0x28] sm:$0xff] %v1422
      %1505 = vst [vmem:[#allocation2 + $0x30] sm:$0xff] %v1451
      %1506 = vst [vmem:[#allocation2 + $0x38] sm:$0xff] %v1480
      %1507 = vst [vmem:[#allocation2 + $0x40] sm:$0xff] %v1279
      %1508 = vst [vmem:[#allocation2 + $0x48] sm:$0xff] %v1308
      %1509 = vst [vmem:[#allocation2 + $0x50] sm:$0xff] %v1337
      %1510 = vst [vmem:[#allocation2 + $0x58] sm:$0xff] %v1366
      %1511 = vst [vmem:[#allocation2 + $0x60] sm:$0xff] %v1395
      %1512 = vst [vmem:[#allocation2 + $0x68] sm:$0xff] %v1424
      %1513 = vst [vmem:[#allocation2 + $0x70] sm:$0xff] %v1453
      %1514 = vst [vmem:[#allocation2 + $0x78] sm:$0xff] %v1482
      %1515 = vst [vmem:[#allocation2 + $0x80] sm:$0xff] %v1282
      %1516 = vst [vmem:[#allocation2 + $0x88] sm:$0xff] %v1311
      %1517 = vst [vmem:[#allocation2 + $0x90] sm:$0xff] %v1340
      %1518 = vst [vmem:[#allocation2 + $0x98] sm:$0xff] %v1369
      %1519 = vst [vmem:[#allocation2 + $0xa0] sm:$0xff] %v1398
      %1520 = vst [vmem:[#allocation2 + $0xa8] sm:$0xff] %v1427
      %1521 = vst [vmem:[#allocation2 + $0xb0] sm:$0xff] %v1456
      %1522 = vst [vmem:[#allocation2 + $0xb8] sm:$0xff] %v1485
      %1523 = vst [vmem:[#allocation2 + $0xc0] sm:$0xff] %v1284
      %1524 = vst [vmem:[#allocation2 + $0xc8] sm:$0xff] %v1313
      %1525 = vst [vmem:[#allocation2 + $0xd0] sm:$0xff] %v1342
      %1526 = vst [vmem:[#allocation2 + $0xd8] sm:$0xff] %v1371
      %1527 = vst [vmem:[#allocation2 + $0xe0] sm:$0xff] %v1400
      %1528 = vst [vmem:[#allocation2 + $0xe8] sm:$0xff] %v1429
      %1529 = vst [vmem:[#allocation2 + $0xf0] sm:$0xff] %v1458
      %1530 = vst [vmem:[#allocation2 + $0xf8] sm:$0xff] %v1487
      %1531 = vst [vmem:[#allocation2 + $0x100] sm:$0xff] %v1287
      %1532 = vst [vmem:[#allocation2 + $0x108] sm:$0xff] %v1316
      %1533 = vst [vmem:[#allocation2 + $0x110] sm:$0xff] %v1345
      %1534 = vst [vmem:[#allocation2 + $0x118] sm:$0xff] %v1374
      %1535 = vst [vmem:[#allocation2 + $0x120] sm:$0xff] %v1403
      %1536 = vst [vmem:[#allocation2 + $0x128] sm:$0xff] %v1432
      %1537 = vst [vmem:[#allocation2 + $0x130] sm:$0xff] %v1461
      %1538 = vst [vmem:[#allocation2 + $0x138] sm:$0xff] %v1490
      %1539 = vst [vmem:[#allocation2 + $0x140] sm:$0xff] %v1289
      %1540 = vst [vmem:[#allocation2 + $0x148] sm:$0xff] %v1318
      %1541 = vst [vmem:[#allocation2 + $0x150] sm:$0xff] %v1347
      %1542 = vst [vmem:[#allocation2 + $0x158] sm:$0xff] %v1376
      %1543 = vst [vmem:[#allocation2 + $0x160] sm:$0xff] %v1405
      %1544 = vst [vmem:[#allocation2 + $0x168] sm:$0xff] %v1434
      %1545 = vst [vmem:[#allocation2 + $0x170] sm:$0xff] %v1463
      %1546 = vst [vmem:[#allocation2 + $0x178] sm:$0xff] %v1492
      %1547 = vst [vmem:[#allocation2 + $0x180] sm:$0xff] %v1292
      %1548 = vst [vmem:[#allocation2 + $0x188] sm:$0xff] %v1321
      %1549 = vst [vmem:[#allocation2 + $0x190] sm:$0xff] %v1350
      %1550 = vst [vmem:[#allocation2 + $0x198] sm:$0xff] %v1379
      %1551 = vst [vmem:[#allocation2 + $0x1a0] sm:$0xff] %v1408
      %1552 = vst [vmem:[#allocation2 + $0x1a8] sm:$0xff] %v1437
      %1553 = vst [vmem:[#allocation2 + $0x1b0] sm:$0xff] %v1466
      %1554 = vst [vmem:[#allocation2 + $0x1b8] sm:$0xff] %v1495
      %1555 = vst [vmem:[#allocation2 + $0x1c0] sm:$0xff] %v1294
      %1556 = vst [vmem:[#allocation2 + $0x1c8] sm:$0xff] %v1323
      %1557 = vst [vmem:[#allocation2 + $0x1d0] sm:$0xff] %v1352
      %1558 = vst [vmem:[#allocation2 + $0x1d8] sm:$0xff] %v1381
      %1559 = vst [vmem:[#allocation2 + $0x1e0] sm:$0xff] %v1410
      %1560 = vst [vmem:[#allocation2 + $0x1e8] sm:$0xff] %v1439
      %1561 = vst [vmem:[#allocation2 + $0x1f0] sm:$0xff] %v1468
      %1562 = vst [vmem:[#allocation2 + $0x1f8] sm:$0xff] %v1497
      %v1563 = vld [vmem:[#allocation2] sm:$0xff]
      %v1564 = vld [vmem:[#allocation2 + $0x8] sm:$0xff]
      %v1565 = vld [vmem:[#allocation2 + $0x10] sm:$0xff]
      %v1566 = vld [vmem:[#allocation2 + $0x18] sm:$0xff]
      %v1567 = vld [vmem:[#allocation2 + $0x20] sm:$0xff]
      %v1568 = vld [vmem:[#allocation2 + $0x28] sm:$0xff]
      %v1569 = vld [vmem:[#allocation2 + $0x30] sm:$0xff]
      %v1570 = vld [vmem:[#allocation2 + $0x38] sm:$0xff]
      %v1571 = vld [vmem:[#allocation2 + $0x40] sm:$0xff]
      %v1572 = vld [vmem:[#allocation2 + $0x48] sm:$0xff]
      %v1573 = vld [vmem:[#allocation2 + $0x50] sm:$0xff]
      %v1574 = vld [vmem:[#allocation2 + $0x58] sm:$0xff]
      %v1575 = vld [vmem:[#allocation2 + $0x60] sm:$0xff]
      %v1576 = vld [vmem:[#allocation2 + $0x68] sm:$0xff]
      %v1577 = vld [vmem:[#allocation2 + $0x70] sm:$0xff]
      %v1578 = vld [vmem:[#allocation2 + $0x78] sm:$0xff]
      %v1579 = vld [vmem:[#allocation2 + $0x80] sm:$0xff]
      %v1580 = vld [vmem:[#allocation2 + $0x88] sm:$0xff]
      %v1581 = vld [vmem:[#allocation2 + $0x90] sm:$0xff]
      %v1582 = vld [vmem:[#allocation2 + $0x98] sm:$0xff]
      %v1583 = vld [vmem:[#allocation2 + $0xa0] sm:$0xff]
      %v1584 = vld [vmem:[#allocation2 + $0xa8] sm:$0xff]
      %v1585 = vld [vmem:[#allocation2 + $0xb0] sm:$0xff]
      %v1586 = vld [vmem:[#allocation2 + $0xb8] sm:$0xff]
      %v1587 = vld [vmem:[#allocation2 + $0xc0] sm:$0xff]
      %v1588 = vld [vmem:[#allocation2 + $0xc8] sm:$0xff]
      %v1589 = vld [vmem:[#allocation2 + $0xd0] sm:$0xff]
      %v1590 = vld [vmem:[#allocation2 + $0xd8] sm:$0xff]
      %v1591 = vld [vmem:[#allocation2 + $0xe0] sm:$0xff]
      %v1592 = vld [vmem:[#allocation2 + $0xe8] sm:$0xff]
      %v1593 = vld [vmem:[#allocation2 + $0xf0] sm:$0xff]
      %v1594 = vld [vmem:[#allocation2 + $0xf8] sm:$0xff]
      %v1595 = vld [vmem:[#allocation2 + $0x100] sm:$0xff]
      %v1596 = vld [vmem:[#allocation2 + $0x108] sm:$0xff]
      %v1597 = vld [vmem:[#allocation2 + $0x110] sm:$0xff]
      %v1598 = vld [vmem:[#allocation2 + $0x118] sm:$0xff]
      %v1599 = vld [vmem:[#allocation2 + $0x120] sm:$0xff]
      %v1600 = vld [vmem:[#allocation2 + $0x128] sm:$0xff]
      %v1601 = vld [vmem:[#allocation2 + $0x130] sm:$0xff]
      %v1602 = vld [vmem:[#allocation2 + $0x138] sm:$0xff]
      %v1603 = vld [vmem:[#allocation2 + $0x140] sm:$0xff]
      %v1604 = vld [vmem:[#allocation2 + $0x148] sm:$0xff]
      %v1605 = vld [vmem:[#allocation2 + $0x150] sm:$0xff]
      %v1606 = vld [vmem:[#allocation2 + $0x158] sm:$0xff]
      %v1607 = vld [vmem:[#allocation2 + $0x160] sm:$0xff]
      %v1608 = vld [vmem:[#allocation2 + $0x168] sm:$0xff]
      %v1609 = vld [vmem:[#allocation2 + $0x170] sm:$0xff]
      %v1610 = vld [vmem:[#allocation2 + $0x178] sm:$0xff]
      %v1611 = vld [vmem:[#allocation2 + $0x180] sm:$0xff]
      %v1612 = vld [vmem:[#allocation2 + $0x188] sm:$0xff]
      %v1613 = vld [vmem:[#allocation2 + $0x190] sm:$0xff]
      %v1614 = vld [vmem:[#allocation2 + $0x198] sm:$0xff]
      %v1615 = vld [vmem:[#allocation2 + $0x1a0] sm:$0xff]
      %v1616 = vld [vmem:[#allocation2 + $0x1a8] sm:$0xff]
      %v1617 = vld [vmem:[#allocation2 + $0x1b0] sm:$0xff]
      %v1618 = vld [vmem:[#allocation2 + $0x1b8] sm:$0xff]
      %v1619 = vld [vmem:[#allocation2 + $0x1c0] sm:$0xff]
      %v1620 = vld [vmem:[#allocation2 + $0x1c8] sm:$0xff]
      %v1621 = vld [vmem:[#allocation2 + $0x1d0] sm:$0xff]
      %v1622 = vld [vmem:[#allocation2 + $0x1d8] sm:$0xff]
      %v1623 = vld [vmem:[#allocation2 + $0x1e0] sm:$0xff]
      %v1624 = vld [vmem:[#allocation2 + $0x1e8] sm:$0xff]
      %v1625 = vld [vmem:[#allocation2 + $0x1f0] sm:$0xff]
      %v1626 = vld [vmem:[#allocation2 + $0x1f8] sm:$0xff]
      %v1627 = vsel %vm1122, 1, 0
      %v1628 = vsel %vm1123, 1, 0
      %v1629 = vsel %vm1124, 1, 0
      %v1630 = vsel %vm1125, 1, 0
      %v1631 = vsel %vm1126, 1, 0
      %v1632 = vsel %vm1127, 1, 0
      %v1633 = vsel %vm1128, 1, 0
      %v1634 = vsel %vm1129, 1, 0
      %vm1635 = vcmp.eq.s32.totalorder %v1627, 1
      %vm1636 = vcmp.eq.s32.totalorder %v1628, 1
      %vm1637 = vcmp.eq.s32.totalorder %v1629, 1
      %vm1638 = vcmp.eq.s32.totalorder %v1630, 1
      %vm1639 = vcmp.eq.s32.totalorder %v1631, 1
      %vm1640 = vcmp.eq.s32.totalorder %v1632, 1
      %vm1641 = vcmp.eq.s32.totalorder %v1633, 1
      %vm1642 = vcmp.eq.s32.totalorder %v1634, 1
      %v1643 = vsel %vm1635, %v1611, %v1595
      %v1644 = vsel %vm1636, %v1612, %v1596
      %v1645 = vsel %vm1637, %v1613, %v1597
      %v1646 = vsel %vm1638, %v1614, %v1598
      %v1647 = vsel %vm1639, %v1615, %v1599
      %v1648 = vsel %vm1640, %v1616, %v1600
      %v1649 = vsel %vm1641, %v1617, %v1601
      %v1650 = vsel %vm1642, %v1618, %v1602
      %v1651 = vsel %vm1635, %v1619, %v1603
      %v1652 = vsel %vm1636, %v1620, %v1604
      %v1653 = vsel %vm1637, %v1621, %v1605
      %v1654 = vsel %vm1638, %v1622, %v1606
      %v1655 = vsel %vm1639, %v1623, %v1607
      %v1656 = vsel %vm1640, %v1624, %v1608
      %v1657 = vsel %vm1641, %v1625, %v1609
      %v1658 = vsel %vm1642, %v1626, %v1610
      %v1659 = vsel %vm1635, %v1579, %v1563
      %v1660 = vsel %vm1636, %v1580, %v1564
      %v1661 = vsel %vm1637, %v1581, %v1565
      %v1662 = vsel %vm1638, %v1582, %v1566
      %v1663 = vsel %vm1639, %v1583, %v1567
      %v1664 = vsel %vm1640, %v1584, %v1568
      %v1665 = vsel %vm1641, %v1585, %v1569
      %v1666 = vsel %vm1642, %v1586, %v1570
      %v1667 = vsel %vm1635, %v1587, %v1571
      %v1668 = vsel %vm1636, %v1588, %v1572
      %v1669 = vsel %vm1637, %v1589, %v1573
      %v1670 = vsel %vm1638, %v1590, %v1574
      %v1671 = vsel %vm1639, %v1591, %v1575
      %v1672 = vsel %vm1640, %v1592, %v1576
      %v1673 = vsel %vm1641, %v1593, %v1577
      %v1674 = vsel %vm1642, %v1594, %v1578
      %v1675 = vsel %vm1074, 1, 0
      %v1676 = vsel %vm1075, 1, 0
      %v1677 = vsel %vm1076, 1, 0
      %v1678 = vsel %vm1077, 1, 0
      %v1679 = vsel %vm1078, 1, 0
      %v1680 = vsel %vm1079, 1, 0
      %v1681 = vsel %vm1080, 1, 0
      %v1682 = vsel %vm1081, 1, 0
      %vm1683 = vcmp.eq.s32.totalorder %v1675, 1
      %vm1684 = vcmp.eq.s32.totalorder %v1676, 1
      %vm1685 = vcmp.eq.s32.totalorder %v1677, 1
      %vm1686 = vcmp.eq.s32.totalorder %v1678, 1
      %vm1687 = vcmp.eq.s32.totalorder %v1679, 1
      %vm1688 = vcmp.eq.s32.totalorder %v1680, 1
      %vm1689 = vcmp.eq.s32.totalorder %v1681, 1
      %vm1690 = vcmp.eq.s32.totalorder %v1682, 1
      %v1691 = vsel %vm1683, %v1643, %v1659
      %v1692 = vsel %vm1684, %v1644, %v1660
      %v1693 = vsel %vm1685, %v1645, %v1661
      %v1694 = vsel %vm1686, %v1646, %v1662
      %v1695 = vsel %vm1687, %v1647, %v1663
      %v1696 = vsel %vm1688, %v1648, %v1664
      %v1697 = vsel %vm1689, %v1649, %v1665
      %v1698 = vsel %vm1690, %v1650, %v1666
      %v1699 = vsel %vm1683, %v1651, %v1667
      %v1700 = vsel %vm1684, %v1652, %v1668
      %v1701 = vsel %vm1685, %v1653, %v1669
      %v1702 = vsel %vm1686, %v1654, %v1670
      %v1703 = vsel %vm1687, %v1655, %v1671
      %v1704 = vsel %vm1688, %v1656, %v1672
      %v1705 = vsel %vm1689, %v1657, %v1673
      %v1706 = vsel %vm1690, %v1658, %v1674
      %v1707 = vld [vmem:[%s3] sm:$0xff]
      %v1708 = vld [vmem:[%s3 + $0x8] sm:$0xff]
      %1710 = vset.pattern.permute.xlu0 0
      %1711 = vperm.xlu0 %1710, %v1707
      %v1712 = vpop.permute.xlu0 %1711
      %1715 = vset.pattern.permute.xlu0 0
      %1716 = vperm.xlu0 %1715, %v1708
      %v1717 = vpop.permute.xlu0 %1716
      %v1719 = vadd.f32 %v1691, %v1712
      %v1720 = vadd.f32 %v1692, %v1712
      %v1721 = vadd.f32 %v1693, %v1712
      %v1722 = vadd.f32 %v1694, %v1712
      %v1723 = vadd.f32 %v1695, %v1712
      %v1724 = vadd.f32 %v1696, %v1712
      %v1725 = vadd.f32 %v1697, %v1712
      %v1726 = vadd.f32 %v1698, %v1712
      %v1727 = vadd.f32 %v1699, %v1717
      %v1728 = vadd.f32 %v1700, %v1717
      %v1729 = vadd.f32 %v1701, %v1717
      %v1730 = vadd.f32 %v1702, %v1717
      %v1731 = vadd.f32 %v1703, %v1717
      %v1732 = vadd.f32 %v1704, %v1717
      %v1733 = vadd.f32 %v1705, %v1717
      %v1734 = vadd.f32 %v1706, %v1717
      %1735 = vst [vmem:[#allocation3] sm:$0xff] %v1719
      %1736 = vst [vmem:[#allocation3 + $0x8] sm:$0xff] %v1720
      %1737 = vst [vmem:[#allocation3 + $0x10] sm:$0xff] %v1721
      %1738 = vst [vmem:[#allocation3 + $0x18] sm:$0xff] %v1722
      %1739 = vst [vmem:[#allocation3 + $0x20] sm:$0xff] %v1723
      %1740 = vst [vmem:[#allocation3 + $0x28] sm:$0xff] %v1724
      %1741 = vst [vmem:[#allocation3 + $0x30] sm:$0xff] %v1725
      %1742 = vst [vmem:[#allocation3 + $0x38] sm:$0xff] %v1726
      %1743 = vst [vmem:[#allocation3 + $0x40] sm:$0xff] %v1727
      %1744 = vst [vmem:[#allocation3 + $0x48] sm:$0xff] %v1728
      %1745 = vst [vmem:[#allocation3 + $0x50] sm:$0xff] %v1729
      %1746 = vst [vmem:[#allocation3 + $0x58] sm:$0xff] %v1730
      %1747 = vst [vmem:[#allocation3 + $0x60] sm:$0xff] %v1731
      %1748 = vst [vmem:[#allocation3 + $0x68] sm:$0xff] %v1732
      %1749 = vst [vmem:[#allocation3 + $0x70] sm:$0xff] %v1733
      %1750 = vst [vmem:[#allocation3 + $0x78] sm:$0xff] %v1734
      %vm1751 = vcmp.ge.s32.totalorder %v1026, 1
      %vm1752 = vcmp.ge.s32.totalorder %v1027, 1
      %vm1753 = vcmp.ge.s32.totalorder %v1028, 1
      %vm1754 = vcmp.ge.s32.totalorder %v1029, 1
      %vm1755 = vcmp.ge.s32.totalorder %v1030, 1
      %vm1756 = vcmp.ge.s32.totalorder %v1031, 1
      %vm1757 = vcmp.ge.s32.totalorder %v1032, 1
      %vm1758 = vcmp.ge.s32.totalorder %v1033, 1
      %vm1759 = vmand %vm282, %vm1751
      %vm1760 = vmand %vm283, %vm1752
      %vm1761 = vmand %vm284, %vm1753
      %vm1762 = vmand %vm285, %vm1754
      %vm1763 = vmand %vm286, %vm1755
      %vm1764 = vmand %vm287, %vm1756
      %vm1765 = vmand %vm288, %vm1757
      %vm1766 = vmand %vm289, %vm1758
      %v1767 = vld [vmem:[#allocation3] sm:$0xff]
      %v1768 = vld [vmem:[#allocation3 + $0x8] sm:$0xff]
      %v1769 = vld [vmem:[#allocation3 + $0x10] sm:$0xff]
      %v1770 = vld [vmem:[#allocation3 + $0x18] sm:$0xff]
      %v1771 = vld [vmem:[#allocation3 + $0x20] sm:$0xff]
      %v1772 = vld [vmem:[#allocation3 + $0x28] sm:$0xff]
      %v1773 = vld [vmem:[#allocation3 + $0x30] sm:$0xff]
      %v1774 = vld [vmem:[#allocation3 + $0x38] sm:$0xff]
      %v1775 = vld [vmem:[#allocation3 + $0x40] sm:$0xff]
      %v1776 = vld [vmem:[#allocation3 + $0x48] sm:$0xff]
      %v1777 = vld [vmem:[#allocation3 + $0x50] sm:$0xff]
      %v1778 = vld [vmem:[#allocation3 + $0x58] sm:$0xff]
      %v1779 = vld [vmem:[#allocation3 + $0x60] sm:$0xff]
      %v1780 = vld [vmem:[#allocation3 + $0x68] sm:$0xff]
      %v1781 = vld [vmem:[#allocation3 + $0x70] sm:$0xff]
      %v1782 = vld [vmem:[#allocation3 + $0x78] sm:$0xff]
      %v1783 = vld [vmem:[%s266] sm:$0xff]
      %v1784 = vld [vmem:[%s266 + $0x8] sm:$0xff]
      %v1785 = vld [vmem:[%s266 + $0x10] sm:$0xff]
      %v1786 = vld [vmem:[%s266 + $0x18] sm:$0xff]
      %v1787 = vld [vmem:[%s266 + $0x20] sm:$0xff]
      %v1788 = vld [vmem:[%s266 + $0x28] sm:$0xff]
      %v1789 = vld [vmem:[%s266 + $0x30] sm:$0xff]
      %v1790 = vld [vmem:[%s266 + $0x38] sm:$0xff]
      %v1791 = vld [vmem:[%s266 + $0x40] sm:$0xff]
      %v1792 = vld [vmem:[%s266 + $0x48] sm:$0xff]
      %v1793 = vld [vmem:[%s266 + $0x50] sm:$0xff]
      %v1794 = vld [vmem:[%s266 + $0x58] sm:$0xff]
      %v1795 = vld [vmem:[%s266 + $0x60] sm:$0xff]
      %v1796 = vld [vmem:[%s266 + $0x68] sm:$0xff]
      %v1797 = vld [vmem:[%s266 + $0x70] sm:$0xff]
      %v1798 = vld [vmem:[%s266 + $0x78] sm:$0xff]
      %1799 = vrot.lane.b32.xlu0 %v1767, 33
      %v1800 = vpop.permute.xlu0 %1799
      %1801 = vrot.lane.b32.xlu0 %v1775, 33
      %v1802 = vpop.permute.xlu0 %1801
      %1803 = vrot.lane.b32.xlu0 %v1768, 33
      %v1804 = vpop.permute.xlu0 %1803
      %1805 = vrot.lane.b32.xlu0 %v1776, 33
      %v1806 = vpop.permute.xlu0 %1805
      %1807 = vrot.lane.b32.xlu0 %v1769, 33
      %v1808 = vpop.permute.xlu0 %1807
      %1809 = vrot.lane.b32.xlu0 %v1777, 33
      %v1810 = vpop.permute.xlu0 %1809
      %1811 = vrot.lane.b32.xlu0 %v1770, 33
      %v1812 = vpop.permute.xlu0 %1811
      %1813 = vrot.lane.b32.xlu0 %v1778, 33
      %v1814 = vpop.permute.xlu0 %1813
      %1815 = vrot.lane.b32.xlu0 %v1771, 33
      %v1816 = vpop.permute.xlu0 %1815
      %1817 = vrot.lane.b32.xlu0 %v1779, 33
      %v1818 = vpop.permute.xlu0 %1817
      %1819 = vrot.lane.b32.xlu0 %v1772, 33
      %v1820 = vpop.permute.xlu0 %1819
      %1821 = vrot.lane.b32.xlu0 %v1780, 33
      %v1822 = vpop.permute.xlu0 %1821
      %1823 = vrot.lane.b32.xlu0 %v1773, 33
      %v1824 = vpop.permute.xlu0 %1823
      %1825 = vrot.lane.b32.xlu0 %v1781, 33
      %v1826 = vpop.permute.xlu0 %1825
      %1827 = vrot.lane.b32.xlu0 %v1774, 33
      %v1828 = vpop.permute.xlu0 %1827
      %1829 = vrot.lane.b32.xlu0 %v1782, 33
      %v1830 = vpop.permute.xlu0 %1829
      %vm1831 = vcmp.lt.s32.totalorder %v274, 33
      %v1832 = vsel %vm1831, %v1824, %v1828
      %v1833 = vsel %vm1831, %v1826, %v1830
      %v1834 = vsel %vm1831, %v1820, %v1824
      %v1835 = vsel %vm1831, %v1822, %v1826
      %v1836 = vsel %vm1831, %v1816, %v1820
      %v1837 = vsel %vm1831, %v1818, %v1822
      %v1838 = vsel %vm1831, %v1812, %v1816
      %v1839 = vsel %vm1831, %v1814, %v1818
      %v1840 = vsel %vm1831, %v1808, %v1812
      %v1841 = vsel %vm1831, %v1810, %v1814
      %v1842 = vsel %vm1831, %v1804, %v1808
      %v1843 = vsel %vm1831, %v1806, %v1810
      %v1844 = vsel %vm1831, %v1800, %v1804
      %v1845 = vsel %vm1831, %v1802, %v1806
      %v1846 = vsel %vm1831, %v1828, %v1800
      %v1847 = vsel %vm1831, %v1830, %v1802
      %1848 = vrot.lane.b32.xlu0 %v1783, 33
      %v1849 = vpop.permute.xlu0 %1848
      %1850 = vrot.lane.b32.xlu0 %v1791, 33
      %v1851 = vpop.permute.xlu0 %1850
      %1852 = vrot.lane.b32.xlu0 %v1784, 33
      %v1853 = vpop.permute.xlu0 %1852
      %1854 = vrot.lane.b32.xlu0 %v1792, 33
      %v1855 = vpop.permute.xlu0 %1854
      %1856 = vrot.lane.b32.xlu0 %v1785, 33
      %v1857 = vpop.permute.xlu0 %1856
      %1858 = vrot.lane.b32.xlu0 %v1793, 33
      %v1859 = vpop.permute.xlu0 %1858
      %1860 = vrot.lane.b32.xlu0 %v1786, 33
      %v1861 = vpop.permute.xlu0 %1860
      %1862 = vrot.lane.b32.xlu0 %v1794, 33
      %v1863 = vpop.permute.xlu0 %1862
      %1864 = vrot.lane.b32.xlu0 %v1787, 33
      %v1865 = vpop.permute.xlu0 %1864
      %1866 = vrot.lane.b32.xlu0 %v1795, 33
      %v1867 = vpop.permute.xlu0 %1866
      %1868 = vrot.lane.b32.xlu0 %v1788, 33
      %v1869 = vpop.permute.xlu0 %1868
      %1870 = vrot.lane.b32.xlu0 %v1796, 33
      %v1871 = vpop.permute.xlu0 %1870
      %1872 = vrot.lane.b32.xlu0 %v1789, 33
      %v1873 = vpop.permute.xlu0 %1872
      %1874 = vrot.lane.b32.xlu0 %v1797, 33
      %v1875 = vpop.permute.xlu0 %1874
      %1876 = vrot.lane.b32.xlu0 %v1790, 33
      %v1877 = vpop.permute.xlu0 %1876
      %1878 = vrot.lane.b32.xlu0 %v1798, 33
      %v1879 = vpop.permute.xlu0 %1878
      %v1880 = vsel %vm1831, %v1873, %v1877
      %v1881 = vsel %vm1831, %v1875, %v1879
      %v1882 = vsel %vm1831, %v1869, %v1873
      %v1883 = vsel %vm1831, %v1871, %v1875
      %v1884 = vsel %vm1831, %v1865, %v1869
      %v1885 = vsel %vm1831, %v1867, %v1871
      %v1886 = vsel %vm1831, %v1861, %v1865
      %v1887 = vsel %vm1831, %v1863, %v1867
      %v1888 = vsel %vm1831, %v1857, %v1861
      %v1889 = vsel %vm1831, %v1859, %v1863
      %v1890 = vsel %vm1831, %v1853, %v1857
      %v1891 = vsel %vm1831, %v1855, %v1859
      %v1892 = vsel %vm1831, %v1849, %v1853
      %v1893 = vsel %vm1831, %v1851, %v1855
      %v1894 = vsel %vm1831, %v1877, %v1849
      %v1895 = vsel %vm1831, %v1879, %v1851
      %v1896 = vsel %vm1759, 1, 0
      %v1897 = vsel %vm1760, 1, 0
      %v1898 = vsel %vm1761, 1, 0
      %v1899 = vsel %vm1762, 1, 0
      %v1900 = vsel %vm1763, 1, 0
      %v1901 = vsel %vm1764, 1, 0
      %v1902 = vsel %vm1765, 1, 0
      %v1903 = vsel %vm1766, 1, 0
      %vm1904 = vcmp.eq.s32.totalorder %v1896, 1
      %vm1905 = vcmp.eq.s32.totalorder %v1897, 1
      %vm1906 = vcmp.eq.s32.totalorder %v1898, 1
      %vm1907 = vcmp.eq.s32.totalorder %v1899, 1
      %vm1908 = vcmp.eq.s32.totalorder %v1900, 1
      %vm1909 = vcmp.eq.s32.totalorder %v1901, 1
      %vm1910 = vcmp.eq.s32.totalorder %v1902, 1
      %vm1911 = vcmp.eq.s32.totalorder %v1903, 1
      %v1912 = vsel %vm1904, %v1846, 0.0
      %v1913 = vsel %vm1905, %v1844, 0.0
      %v1914 = vsel %vm1906, %v1842, 0.0
      %v1915 = vsel %vm1907, %v1840, 0.0
      %v1916 = vsel %vm1908, %v1838, 0.0
      %v1917 = vsel %vm1909, %v1836, 0.0
      %v1918 = vsel %vm1910, %v1834, 0.0
      %v1919 = vsel %vm1911, %v1832, 0.0
      %v1920 = vsel %vm1904, %v1847, 0.0
      %v1921 = vsel %vm1905, %v1845, 0.0
      %v1922 = vsel %vm1906, %v1843, 0.0
      %v1923 = vsel %vm1907, %v1841, 0.0
      %v1924 = vsel %vm1908, %v1839, 0.0
      %v1925 = vsel %vm1909, %v1837, 0.0
      %v1926 = vsel %vm1910, %v1835, 0.0
      %v1927 = vsel %vm1911, %v1833, 0.0
      %v1928 = vsel %vm1904, %v1894, 0.0
      %v1929 = vsel %vm1905, %v1892, 0.0
      %v1930 = vsel %vm1906, %v1890, 0.0
      %v1931 = vsel %vm1907, %v1888, 0.0
      %v1932 = vsel %vm1908, %v1886, 0.0
      %v1933 = vsel %vm1909, %v1884, 0.0
      %v1934 = vsel %vm1910, %v1882, 0.0
      %v1935 = vsel %vm1911, %v1880, 0.0
      %v1936 = vsel %vm1904, %v1895, 0.0
      %v1937 = vsel %vm1905, %v1893, 0.0
      %v1938 = vsel %vm1906, %v1891, 0.0
      %v1939 = vsel %vm1907, %v1889, 0.0
      %v1940 = vsel %vm1908, %v1887, 0.0
      %v1941 = vsel %vm1909, %v1885, 0.0
      %v1942 = vsel %vm1910, %v1883, 0.0
      %v1943 = vsel %vm1911, %v1881, 0.0
      %v1944 = vpack.c.bf16 %v1913, %v1912
      %v1945 = vpack.c.bf16 %v1915, %v1914
      %v1946 = vpack.c.bf16 %v1917, %v1916
      %v1947 = vpack.c.bf16 %v1919, %v1918
      %v1948 = vpack.c.bf16 %v1921, %v1920
      %v1949 = vpack.c.bf16 %v1923, %v1922
      %v1950 = vpack.c.bf16 %v1925, %v1924
      %v1951 = vpack.c.bf16 %v1927, %v1926
      %1952 = vst [vmem:[#allocation4] sm:$0xff] %v1944
      %1953 = vst [vmem:[#allocation4 + $0x8] sm:$0xff] %v1945
      %1954 = vst [vmem:[#allocation4 + $0x10] sm:$0xff] %v1946
      %1955 = vst [vmem:[#allocation4 + $0x18] sm:$0xff] %v1947
      %1956 = vst [vmem:[#allocation4 + $0x20] sm:$0xff] %v1948
      %1957 = vst [vmem:[#allocation4 + $0x28] sm:$0xff] %v1949
      %1958 = vst [vmem:[#allocation4 + $0x30] sm:$0xff] %v1950
      %1959 = vst [vmem:[#allocation4 + $0x38] sm:$0xff] %v1951
      %v1960 = vpack.c.bf16 %v1929, %v1928
      %v1961 = vpack.c.bf16 %v1931, %v1930
      %v1962 = vpack.c.bf16 %v1933, %v1932
      %v1963 = vpack.c.bf16 %v1935, %v1934
      %v1964 = vpack.c.bf16 %v1937, %v1936
      %v1965 = vpack.c.bf16 %v1939, %v1938
      %v1966 = vpack.c.bf16 %v1941, %v1940
      %v1967 = vpack.c.bf16 %v1943, %v1942
      %1968 = vst [vmem:[#allocation4 + $0x40] sm:$0xff] %v1960
      %1969 = vst [vmem:[#allocation4 + $0x48] sm:$0xff] %v1961
      %1970 = vst [vmem:[#allocation4 + $0x50] sm:$0xff] %v1962
      %1971 = vst [vmem:[#allocation4 + $0x58] sm:$0xff] %v1963
      %1972 = vst [vmem:[#allocation4 + $0x60] sm:$0xff] %v1964
      %1973 = vst [vmem:[#allocation4 + $0x68] sm:$0xff] %v1965
      %1974 = vst [vmem:[#allocation4 + $0x70] sm:$0xff] %v1966
      %1975 = vst [vmem:[#allocation4 + $0x78] sm:$0xff] %v1967
      %v1976 = vld [vmem:[#allocation3] sm:$0xff]
      %v1977 = vld [vmem:[#allocation3 + $0x8] sm:$0xff]
      %v1978 = vld [vmem:[#allocation3 + $0x10] sm:$0xff]
      %v1979 = vld [vmem:[#allocation3 + $0x18] sm:$0xff]
      %v1980 = vld [vmem:[#allocation3 + $0x20] sm:$0xff]
      %v1981 = vld [vmem:[#allocation3 + $0x28] sm:$0xff]
      %v1982 = vld [vmem:[#allocation3 + $0x30] sm:$0xff]
      %v1983 = vld [vmem:[#allocation3 + $0x38] sm:$0xff]
      %v1984 = vld [vmem:[#allocation3 + $0x40] sm:$0xff]
      %v1985 = vld [vmem:[#allocation3 + $0x48] sm:$0xff]
      %v1986 = vld [vmem:[#allocation3 + $0x50] sm:$0xff]
      %v1987 = vld [vmem:[#allocation3 + $0x58] sm:$0xff]
      %v1988 = vld [vmem:[#allocation3 + $0x60] sm:$0xff]
      %v1989 = vld [vmem:[#allocation3 + $0x68] sm:$0xff]
      %v1990 = vld [vmem:[#allocation3 + $0x70] sm:$0xff]
      %v1991 = vld [vmem:[#allocation3 + $0x78] sm:$0xff]
      %v1992 = vld [vmem:[%s266] sm:$0xff]
      %v1993 = vld [vmem:[%s266 + $0x8] sm:$0xff]
      %v1994 = vld [vmem:[%s266 + $0x10] sm:$0xff]
      %v1995 = vld [vmem:[%s266 + $0x18] sm:$0xff]
      %v1996 = vld [vmem:[%s266 + $0x20] sm:$0xff]
      %v1997 = vld [vmem:[%s266 + $0x28] sm:$0xff]
      %v1998 = vld [vmem:[%s266 + $0x30] sm:$0xff]
      %v1999 = vld [vmem:[%s266 + $0x38] sm:$0xff]
      %v2000 = vld [vmem:[%s266 + $0x40] sm:$0xff]
      %v2001 = vld [vmem:[%s266 + $0x48] sm:$0xff]
      %v2002 = vld [vmem:[%s266 + $0x50] sm:$0xff]
      %v2003 = vld [vmem:[%s266 + $0x58] sm:$0xff]
      %v2004 = vld [vmem:[%s266 + $0x60] sm:$0xff]
      %v2005 = vld [vmem:[%s266 + $0x68] sm:$0xff]
      %v2006 = vld [vmem:[%s266 + $0x70] sm:$0xff]
      %v2007 = vld [vmem:[%s266 + $0x78] sm:$0xff]
      %2008 = vrot.lane.b32.xlu0 %v1976, 32
      %v2009 = vpop.permute.xlu0 %2008
      %2010 = vrot.lane.b32.xlu0 %v1984, 32
      %v2011 = vpop.permute.xlu0 %2010
      %2012 = vrot.lane.b32.xlu0 %v1977, 32
      %v2013 = vpop.permute.xlu0 %2012
      %2014 = vrot.lane.b32.xlu0 %v1985, 32
      %v2015 = vpop.permute.xlu0 %2014
      %2016 = vrot.lane.b32.xlu0 %v1978, 32
      %v2017 = vpop.permute.xlu0 %2016
      %2018 = vrot.lane.b32.xlu0 %v1986, 32
      %v2019 = vpop.permute.xlu0 %2018
      %2020 = vrot.lane.b32.xlu0 %v1979, 32
      %v2021 = vpop.permute.xlu0 %2020
      %2022 = vrot.lane.b32.xlu0 %v1987, 32
      %v2023 = vpop.permute.xlu0 %2022
      %2024 = vrot.lane.b32.xlu0 %v1980, 32
      %v2025 = vpop.permute.xlu0 %2024
      %2026 = vrot.lane.b32.xlu0 %v1988, 32
      %v2027 = vpop.permute.xlu0 %2026
      %2028 = vrot.lane.b32.xlu0 %v1981, 32
      %v2029 = vpop.permute.xlu0 %2028
      %2030 = vrot.lane.b32.xlu0 %v1989, 32
      %v2031 = vpop.permute.xlu0 %2030
      %2032 = vrot.lane.b32.xlu0 %v1982, 32
      %v2033 = vpop.permute.xlu0 %2032
      %2034 = vrot.lane.b32.xlu0 %v1990, 32
      %v2035 = vpop.permute.xlu0 %2034
      %2036 = vrot.lane.b32.xlu0 %v1983, 32
      %v2037 = vpop.permute.xlu0 %2036
      %2038 = vrot.lane.b32.xlu0 %v1991, 32
      %v2039 = vpop.permute.xlu0 %2038
      %vm2040 = vcmp.lt.s32.totalorder %v274, 32
      %v2041 = vsel %vm2040, %v2033, %v2037
      %v2042 = vsel %vm2040, %v2035, %v2039
      %v2043 = vsel %vm2040, %v2029, %v2033
      %v2044 = vsel %vm2040, %v2031, %v2035
      %v2045 = vsel %vm2040, %v2025, %v2029
      %v2046 = vsel %vm2040, %v2027, %v2031
      %v2047 = vsel %vm2040, %v2021, %v2025
      %v2048 = vsel %vm2040, %v2023, %v2027
      %v2049 = vsel %vm2040, %v2017, %v2021
      %v2050 = vsel %vm2040, %v2019, %v2023
      %v2051 = vsel %vm2040, %v2013, %v2017
      %v2052 = vsel %vm2040, %v2015, %v2019
      %v2053 = vsel %vm2040, %v2009, %v2013
      %v2054 = vsel %vm2040, %v2011, %v2015
      %v2055 = vsel %vm2040, %v2037, %v2009
      %v2056 = vsel %vm2040, %v2039, %v2011
      %2057 = vrot.lane.b32.xlu0 %v1992, 32
      %v2058 = vpop.permute.xlu0 %2057
      %2059 = vrot.lane.b32.xlu0 %v2000, 32
      %v2060 = vpop.permute.xlu0 %2059
      %2061 = vrot.lane.b32.xlu0 %v1993, 32
      %v2062 = vpop.permute.xlu0 %2061
      %2063 = vrot.lane.b32.xlu0 %v2001, 32
      %v2064 = vpop.permute.xlu0 %2063
      %2065 = vrot.lane.b32.xlu0 %v1994, 32
      %v2066 = vpop.permute.xlu0 %2065
      %2067 = vrot.lane.b32.xlu0 %v2002, 32
      %v2068 = vpop.permute.xlu0 %2067
      %2069 = vrot.lane.b32.xlu0 %v1995, 32
      %v2070 = vpop.permute.xlu0 %2069
      %2071 = vrot.lane.b32.xlu0 %v2003, 32
      %v2072 = vpop.permute.xlu0 %2071
      %2073 = vrot.lane.b32.xlu0 %v1996, 32
      %v2074 = vpop.permute.xlu0 %2073
      %2075 = vrot.lane.b32.xlu0 %v2004, 32
      %v2076 = vpop.permute.xlu0 %2075
      %2077 = vrot.lane.b32.xlu0 %v1997, 32
      %v2078 = vpop.permute.xlu0 %2077
      %2079 = vrot.lane.b32.xlu0 %v2005, 32
      %v2080 = vpop.permute.xlu0 %2079
      %2081 = vrot.lane.b32.xlu0 %v1998, 32
      %v2082 = vpop.permute.xlu0 %2081
      %2083 = vrot.lane.b32.xlu0 %v2006, 32
      %v2084 = vpop.permute.xlu0 %2083
      %2085 = vrot.lane.b32.xlu0 %v1999, 32
      %v2086 = vpop.permute.xlu0 %2085
      %2087 = vrot.lane.b32.xlu0 %v2007, 32
      %v2088 = vpop.permute.xlu0 %2087
      %v2089 = vsel %vm2040, %v2082, %v2086
      %v2090 = vsel %vm2040, %v2084, %v2088
      %v2091 = vsel %vm2040, %v2078, %v2082
      %v2092 = vsel %vm2040, %v2080, %v2084
      %v2093 = vsel %vm2040, %v2074, %v2078
      %v2094 = vsel %vm2040, %v2076, %v2080
      %v2095 = vsel %vm2040, %v2070, %v2074
      %v2096 = vsel %vm2040, %v2072, %v2076
      %v2097 = vsel %vm2040, %v2066, %v2070
      %v2098 = vsel %vm2040, %v2068, %v2072
      %v2099 = vsel %vm2040, %v2062, %v2066
      %v2100 = vsel %vm2040, %v2064, %v2068
      %v2101 = vsel %vm2040, %v2058, %v2062
      %v2102 = vsel %vm2040, %v2060, %v2064
      %v2103 = vsel %vm2040, %v2086, %v2058
      %v2104 = vsel %vm2040, %v2088, %v2060
      %vm2105 = vcmp.eq.s32.totalorder %v290, 1
      %vm2106 = vcmp.eq.s32.totalorder %v291, 1
      %vm2107 = vcmp.eq.s32.totalorder %v292, 1
      %vm2108 = vcmp.eq.s32.totalorder %v293, 1
      %vm2109 = vcmp.eq.s32.totalorder %v294, 1
      %vm2110 = vcmp.eq.s32.totalorder %v295, 1
      %vm2111 = vcmp.eq.s32.totalorder %v296, 1
      %vm2112 = vcmp.eq.s32.totalorder %v297, 1
      %v2113 = vsel %vm2105, %v2055, 0.0
      %v2114 = vsel %vm2106, %v2053, 0.0
      %v2115 = vsel %vm2107, %v2051, 0.0
      %v2116 = vsel %vm2108, %v2049, 0.0
      %v2117 = vsel %vm2109, %v2047, 0.0
      %v2118 = vsel %vm2110, %v2045, 0.0
      %v2119 = vsel %vm2111, %v2043, 0.0
      %v2120 = vsel %vm2112, %v2041, 0.0
      %v2121 = vsel %vm2105, %v2056, 0.0
      %v2122 = vsel %vm2106, %v2054, 0.0
      %v2123 = vsel %vm2107, %v2052, 0.0
      %v2124 = vsel %vm2108, %v2050, 0.0
      %v2125 = vsel %vm2109, %v2048, 0.0
      %v2126 = vsel %vm2110, %v2046, 0.0
      %v2127 = vsel %vm2111, %v2044, 0.0
      %v2128 = vsel %vm2112, %v2042, 0.0
      %v2129 = vsel %vm2105, %v2103, 0.0
      %v2130 = vsel %vm2106, %v2101, 0.0
      %v2131 = vsel %vm2107, %v2099, 0.0
      %v2132 = vsel %vm2108, %v2097, 0.0
      %v2133 = vsel %vm2109, %v2095, 0.0
      %v2134 = vsel %vm2110, %v2093, 0.0
      %v2135 = vsel %vm2111, %v2091, 0.0
      %v2136 = vsel %vm2112, %v2089, 0.0
      %v2137 = vsel %vm2105, %v2104, 0.0
      %v2138 = vsel %vm2106, %v2102, 0.0
      %v2139 = vsel %vm2107, %v2100, 0.0
      %v2140 = vsel %vm2108, %v2098, 0.0
      %v2141 = vsel %vm2109, %v2096, 0.0
      %v2142 = vsel %vm2110, %v2094, 0.0
      %v2143 = vsel %vm2111, %v2092, 0.0
      %v2144 = vsel %vm2112, %v2090, 0.0
      %v2145 = vpack.c.bf16 %v2114, %v2113
      %v2146 = vpack.c.bf16 %v2116, %v2115
      %v2147 = vpack.c.bf16 %v2118, %v2117
      %v2148 = vpack.c.bf16 %v2120, %v2119
      %v2149 = vpack.c.bf16 %v2122, %v2121
      %v2150 = vpack.c.bf16 %v2124, %v2123
      %v2151 = vpack.c.bf16 %v2126, %v2125
      %v2152 = vpack.c.bf16 %v2128, %v2127
      %2153 = vst [vmem:[#allocation4 + $0x80] sm:$0xff] %v2145
      %2154 = vst [vmem:[#allocation4 + $0x88] sm:$0xff] %v2146
      %2155 = vst [vmem:[#allocation4 + $0x90] sm:$0xff] %v2147
      %2156 = vst [vmem:[#allocation4 + $0x98] sm:$0xff] %v2148
      %2157 = vst [vmem:[#allocation4 + $0xa0] sm:$0xff] %v2149
      %2158 = vst [vmem:[#allocation4 + $0xa8] sm:$0xff] %v2150
      %2159 = vst [vmem:[#allocation4 + $0xb0] sm:$0xff] %v2151
      %2160 = vst [vmem:[#allocation4 + $0xb8] sm:$0xff] %v2152
      %v2161 = vpack.c.bf16 %v2130, %v2129
      %v2162 = vpack.c.bf16 %v2132, %v2131
      %v2163 = vpack.c.bf16 %v2134, %v2133
      %v2164 = vpack.c.bf16 %v2136, %v2135
      %v2165 = vpack.c.bf16 %v2138, %v2137
      %v2166 = vpack.c.bf16 %v2140, %v2139
      %v2167 = vpack.c.bf16 %v2142, %v2141
      %v2168 = vpack.c.bf16 %v2144, %v2143
      %2169 = vst [vmem:[#allocation4 + $0xc0] sm:$0xff] %v2161
      %2170 = vst [vmem:[#allocation4 + $0xc8] sm:$0xff] %v2162
      %2171 = vst [vmem:[#allocation4 + $0xd0] sm:$0xff] %v2163
      %2172 = vst [vmem:[#allocation4 + $0xd8] sm:$0xff] %v2164
      %2173 = vst [vmem:[#allocation4 + $0xe0] sm:$0xff] %v2165
      %2174 = vst [vmem:[#allocation4 + $0xe8] sm:$0xff] %v2166
      %2175 = vst [vmem:[#allocation4 + $0xf0] sm:$0xff] %v2167
      %2176 = vst [vmem:[#allocation4 + $0xf8] sm:$0xff] %v2168
      %vm2177 = vcmp.le.s32.totalorder %v1026, 30
      %vm2178 = vcmp.le.s32.totalorder %v1027, 30
      %vm2179 = vcmp.le.s32.totalorder %v1028, 30
      %vm2180 = vcmp.le.s32.totalorder %v1029, 30
      %vm2181 = vcmp.le.s32.totalorder %v1030, 30
      %vm2182 = vcmp.le.s32.totalorder %v1031, 30
      %vm2183 = vcmp.le.s32.totalorder %v1032, 30
      %vm2184 = vcmp.le.s32.totalorder %v1033, 30
      %vm2185 = vmand %vm282, %vm2177
      %vm2186 = vmand %vm283, %vm2178
      %vm2187 = vmand %vm284, %vm2179
      %vm2188 = vmand %vm285, %vm2180
      %vm2189 = vmand %vm286, %vm2181
      %vm2190 = vmand %vm287, %vm2182
      %vm2191 = vmand %vm288, %vm2183
      %vm2192 = vmand %vm289, %vm2184
      %v2193 = vld [vmem:[#allocation3] sm:$0xff]
      %v2194 = vld [vmem:[#allocation3 + $0x8] sm:$0xff]
      %v2195 = vld [vmem:[#allocation3 + $0x10] sm:$0xff]
      %v2196 = vld [vmem:[#allocation3 + $0x18] sm:$0xff]
      %v2197 = vld [vmem:[#allocation3 + $0x20] sm:$0xff]
      %v2198 = vld [vmem:[#allocation3 + $0x28] sm:$0xff]
      %v2199 = vld [vmem:[#allocation3 + $0x30] sm:$0xff]
      %v2200 = vld [vmem:[#allocation3 + $0x38] sm:$0xff]
      %v2201 = vld [vmem:[#allocation3 + $0x40] sm:$0xff]
      %v2202 = vld [vmem:[#allocation3 + $0x48] sm:$0xff]
      %v2203 = vld [vmem:[#allocation3 + $0x50] sm:$0xff]
      %v2204 = vld [vmem:[#allocation3 + $0x58] sm:$0xff]
      %v2205 = vld [vmem:[#allocation3 + $0x60] sm:$0xff]
      %v2206 = vld [vmem:[#allocation3 + $0x68] sm:$0xff]
      %v2207 = vld [vmem:[#allocation3 + $0x70] sm:$0xff]
      %v2208 = vld [vmem:[#allocation3 + $0x78] sm:$0xff]
      %v2209 = vld [vmem:[%s266] sm:$0xff]
      %v2210 = vld [vmem:[%s266 + $0x8] sm:$0xff]
      %v2211 = vld [vmem:[%s266 + $0x10] sm:$0xff]
      %v2212 = vld [vmem:[%s266 + $0x18] sm:$0xff]
      %v2213 = vld [vmem:[%s266 + $0x20] sm:$0xff]
      %v2214 = vld [vmem:[%s266 + $0x28] sm:$0xff]
      %v2215 = vld [vmem:[%s266 + $0x30] sm:$0xff]
      %v2216 = vld [vmem:[%s266 + $0x38] sm:$0xff]
      %v2217 = vld [vmem:[%s266 + $0x40] sm:$0xff]
      %v2218 = vld [vmem:[%s266 + $0x48] sm:$0xff]
      %v2219 = vld [vmem:[%s266 + $0x50] sm:$0xff]
      %v2220 = vld [vmem:[%s266 + $0x58] sm:$0xff]
      %v2221 = vld [vmem:[%s266 + $0x60] sm:$0xff]
      %v2222 = vld [vmem:[%s266 + $0x68] sm:$0xff]
      %v2223 = vld [vmem:[%s266 + $0x70] sm:$0xff]
      %v2224 = vld [vmem:[%s266 + $0x78] sm:$0xff]
      %2225 = vrot.lane.b32.xlu0 %v2193, 31
      %v2226 = vpop.permute.xlu0 %2225
      %2227 = vrot.lane.b32.xlu0 %v2201, 31
      %v2228 = vpop.permute.xlu0 %2227
      %2229 = vrot.lane.b32.xlu0 %v2194, 31
      %v2230 = vpop.permute.xlu0 %2229
      %2231 = vrot.lane.b32.xlu0 %v2202, 31
      %v2232 = vpop.permute.xlu0 %2231
      %2233 = vrot.lane.b32.xlu0 %v2195, 31
      %v2234 = vpop.permute.xlu0 %2233
      %2235 = vrot.lane.b32.xlu0 %v2203, 31
      %v2236 = vpop.permute.xlu0 %2235
      %2237 = vrot.lane.b32.xlu0 %v2196, 31
      %v2238 = vpop.permute.xlu0 %2237
      %2239 = vrot.lane.b32.xlu0 %v2204, 31
      %v2240 = vpop.permute.xlu0 %2239
      %2241 = vrot.lane.b32.xlu0 %v2197, 31
      %v2242 = vpop.permute.xlu0 %2241
      %2243 = vrot.lane.b32.xlu0 %v2205, 31
      %v2244 = vpop.permute.xlu0 %2243
      %2245 = vrot.lane.b32.xlu0 %v2198, 31
      %v2246 = vpop.permute.xlu0 %2245
      %2247 = vrot.lane.b32.xlu0 %v2206, 31
      %v2248 = vpop.permute.xlu0 %2247
      %2249 = vrot.lane.b32.xlu0 %v2199, 31
      %v2250 = vpop.permute.xlu0 %2249
      %2251 = vrot.lane.b32.xlu0 %v2207, 31
      %v2252 = vpop.permute.xlu0 %2251
      %2253 = vrot.lane.b32.xlu0 %v2200, 31
      %v2254 = vpop.permute.xlu0 %2253
      %2255 = vrot.lane.b32.xlu0 %v2208, 31
      %v2256 = vpop.permute.xlu0 %2255
      %vm2257 = vcmp.lt.s32.totalorder %v274, 31
      %v2258 = vsel %vm2257, %v2250, %v2254
      %v2259 = vsel %vm2257, %v2252, %v2256
      %v2260 = vsel %vm2257, %v2246, %v2250
      %v2261 = vsel %vm2257, %v2248, %v2252
      %v2262 = vsel %vm2257, %v2242, %v2246
      %v2263 = vsel %vm2257, %v2244, %v2248
      %v2264 = vsel %vm2257, %v2238, %v2242
      %v2265 = vsel %vm2257, %v2240, %v2244
      %v2266 = vsel %vm2257, %v2234, %v2238
      %v2267 = vsel %vm2257, %v2236, %v2240
      %v2268 = vsel %vm2257, %v2230, %v2234
      %v2269 = vsel %vm2257, %v2232, %v2236
      %v2270 = vsel %vm2257, %v2226, %v2230
      %v2271 = vsel %vm2257, %v2228, %v2232
      %v2272 = vsel %vm2257, %v2254, %v2226
      %v2273 = vsel %vm2257, %v2256, %v2228
      %2274 = vrot.lane.b32.xlu0 %v2209, 31
      %v2275 = vpop.permute.xlu0 %2274
      %2276 = vrot.lane.b32.xlu0 %v2217, 31
      %v2277 = vpop.permute.xlu0 %2276
      %2278 = vrot.lane.b32.xlu0 %v2210, 31
      %v2279 = vpop.permute.xlu0 %2278
      %2280 = vrot.lane.b32.xlu0 %v2218, 31
      %v2281 = vpop.permute.xlu0 %2280
      %2282 = vrot.lane.b32.xlu0 %v2211, 31
      %v2283 = vpop.permute.xlu0 %2282
      %2284 = vrot.lane.b32.xlu0 %v2219, 31
      %v2285 = vpop.permute.xlu0 %2284
      %2286 = vrot.lane.b32.xlu0 %v2212, 31
      %v2287 = vpop.permute.xlu0 %2286
      %2288 = vrot.lane.b32.xlu0 %v2220, 31
      %v2289 = vpop.permute.xlu0 %2288
      %2290 = vrot.lane.b32.xlu0 %v2213, 31
      %v2291 = vpop.permute.xlu0 %2290
      %2292 = vrot.lane.b32.xlu0 %v2221, 31
      %v2293 = vpop.permute.xlu0 %2292
      %2294 = vrot.lane.b32.xlu0 %v2214, 31
      %v2295 = vpop.permute.xlu0 %2294
      %2296 = vrot.lane.b32.xlu0 %v2222, 31
      %v2297 = vpop.permute.xlu0 %2296
      %2298 = vrot.lane.b32.xlu0 %v2215, 31
      %v2299 = vpop.permute.xlu0 %2298
      %2300 = vrot.lane.b32.xlu0 %v2223, 31
      %v2301 = vpop.permute.xlu0 %2300
      %2302 = vrot.lane.b32.xlu0 %v2216, 31
      %v2303 = vpop.permute.xlu0 %2302
      %2304 = vrot.lane.b32.xlu0 %v2224, 31
      %v2305 = vpop.permute.xlu0 %2304
      %v2306 = vsel %vm2257, %v2299, %v2303
      %v2307 = vsel %vm2257, %v2301, %v2305
      %v2308 = vsel %vm2257, %v2295, %v2299
      %v2309 = vsel %vm2257, %v2297, %v2301
      %v2310 = vsel %vm2257, %v2291, %v2295
      %v2311 = vsel %vm2257, %v2293, %v2297
      %v2312 = vsel %vm2257, %v2287, %v2291
      %v2313 = vsel %vm2257, %v2289, %v2293
      %v2314 = vsel %vm2257, %v2283, %v2287
      %v2315 = vsel %vm2257, %v2285, %v2289
      %v2316 = vsel %vm2257, %v2279, %v2283
      %v2317 = vsel %vm2257, %v2281, %v2285
      %v2318 = vsel %vm2257, %v2275, %v2279
      %v2319 = vsel %vm2257, %v2277, %v2281
      %v2320 = vsel %vm2257, %v2303, %v2275
      %v2321 = vsel %vm2257, %v2305, %v2277
      %v2322 = vsel %vm2185, 1, 0
      %v2323 = vsel %vm2186, 1, 0
      %v2324 = vsel %vm2187, 1, 0
      %v2325 = vsel %vm2188, 1, 0
      %v2326 = vsel %vm2189, 1, 0
      %v2327 = vsel %vm2190, 1, 0
      %v2328 = vsel %vm2191, 1, 0
      %v2329 = vsel %vm2192, 1, 0
      %vm2330 = vcmp.eq.s32.totalorder %v2322, 1
      %vm2331 = vcmp.eq.s32.totalorder %v2323, 1
      %vm2332 = vcmp.eq.s32.totalorder %v2324, 1
      %vm2333 = vcmp.eq.s32.totalorder %v2325, 1
      %vm2334 = vcmp.eq.s32.totalorder %v2326, 1
      %vm2335 = vcmp.eq.s32.totalorder %v2327, 1
      %vm2336 = vcmp.eq.s32.totalorder %v2328, 1
      %vm2337 = vcmp.eq.s32.totalorder %v2329, 1
      %v2338 = vsel %vm2330, %v2272, 0.0
      %v2339 = vsel %vm2331, %v2270, 0.0
      %v2340 = vsel %vm2332, %v2268, 0.0
      %v2341 = vsel %vm2333, %v2266, 0.0
      %v2342 = vsel %vm2334, %v2264, 0.0
      %v2343 = vsel %vm2335, %v2262, 0.0
      %v2344 = vsel %vm2336, %v2260, 0.0
      %v2345 = vsel %vm2337, %v2258, 0.0
      %v2346 = vsel %vm2330, %v2273, 0.0
      %v2347 = vsel %vm2331, %v2271, 0.0
      %v2348 = vsel %vm2332, %v2269, 0.0
      %v2349 = vsel %vm2333, %v2267, 0.0
      %v2350 = vsel %vm2334, %v2265, 0.0
      %v2351 = vsel %vm2335, %v2263, 0.0
      %v2352 = vsel %vm2336, %v2261, 0.0
      %v2353 = vsel %vm2337, %v2259, 0.0
      %v2354 = vsel %vm2330, %v2320, 0.0
      %v2355 = vsel %vm2331, %v2318, 0.0
      %v2356 = vsel %vm2332, %v2316, 0.0
      %v2357 = vsel %vm2333, %v2314, 0.0
      %v2358 = vsel %vm2334, %v2312, 0.0
      %v2359 = vsel %vm2335, %v2310, 0.0
      %v2360 = vsel %vm2336, %v2308, 0.0
      %v2361 = vsel %vm2337, %v2306, 0.0
      %v2362 = vsel %vm2330, %v2321, 0.0
      %v2363 = vsel %vm2331, %v2319, 0.0
      %v2364 = vsel %vm2332, %v2317, 0.0
      %v2365 = vsel %vm2333, %v2315, 0.0
      %v2366 = vsel %vm2334, %v2313, 0.0
      %v2367 = vsel %vm2335, %v2311, 0.0
      %v2368 = vsel %vm2336, %v2309, 0.0
      %v2369 = vsel %vm2337, %v2307, 0.0
      %v2370 = vpack.c.bf16 %v2339, %v2338
      %v2371 = vpack.c.bf16 %v2341, %v2340
      %v2372 = vpack.c.bf16 %v2343, %v2342
      %v2373 = vpack.c.bf16 %v2345, %v2344
      %v2374 = vpack.c.bf16 %v2347, %v2346
      %v2375 = vpack.c.bf16 %v2349, %v2348
      %v2376 = vpack.c.bf16 %v2351, %v2350
      %v2377 = vpack.c.bf16 %v2353, %v2352
      %2378 = vst [vmem:[#allocation4 + $0x100] sm:$0xff] %v2370
      %2379 = vst [vmem:[#allocation4 + $0x108] sm:$0xff] %v2371
      %2380 = vst [vmem:[#allocation4 + $0x110] sm:$0xff] %v2372
      %2381 = vst [vmem:[#allocation4 + $0x118] sm:$0xff] %v2373
      %2382 = vst [vmem:[#allocation4 + $0x120] sm:$0xff] %v2374
      %2383 = vst [vmem:[#allocation4 + $0x128] sm:$0xff] %v2375
      %2384 = vst [vmem:[#allocation4 + $0x130] sm:$0xff] %v2376
      %2385 = vst [vmem:[#allocation4 + $0x138] sm:$0xff] %v2377
      %v2386 = vpack.c.bf16 %v2355, %v2354
      %v2387 = vpack.c.bf16 %v2357, %v2356
      %v2388 = vpack.c.bf16 %v2359, %v2358
      %v2389 = vpack.c.bf16 %v2361, %v2360
      %v2390 = vpack.c.bf16 %v2363, %v2362
      %v2391 = vpack.c.bf16 %v2365, %v2364
      %v2392 = vpack.c.bf16 %v2367, %v2366
      %v2393 = vpack.c.bf16 %v2369, %v2368
      %2394 = vst [vmem:[#allocation4 + $0x140] sm:$0xff] %v2386
      %2395 = vst [vmem:[#allocation4 + $0x148] sm:$0xff] %v2387
      %2396 = vst [vmem:[#allocation4 + $0x150] sm:$0xff] %v2388
      %2397 = vst [vmem:[#allocation4 + $0x158] sm:$0xff] %v2389
      %2398 = vst [vmem:[#allocation4 + $0x160] sm:$0xff] %v2390
      %2399 = vst [vmem:[#allocation4 + $0x168] sm:$0xff] %v2391
      %2400 = vst [vmem:[#allocation4 + $0x170] sm:$0xff] %v2392
      %2401 = vst [vmem:[#allocation4 + $0x178] sm:$0xff] %v2393
      %v2402 = vld [vmem:[#allocation3] sm:$0xff]
      %v2403 = vld [vmem:[#allocation3 + $0x8] sm:$0xff]
      %v2404 = vld [vmem:[#allocation3 + $0x10] sm:$0xff]
      %v2405 = vld [vmem:[#allocation3 + $0x18] sm:$0xff]
      %v2406 = vld [vmem:[#allocation3 + $0x20] sm:$0xff]
      %v2407 = vld [vmem:[#allocation3 + $0x28] sm:$0xff]
      %v2408 = vld [vmem:[#allocation3 + $0x30] sm:$0xff]
      %v2409 = vld [vmem:[#allocation3 + $0x38] sm:$0xff]
      %v2410 = vld [vmem:[#allocation3 + $0x40] sm:$0xff]
      %v2411 = vld [vmem:[#allocation3 + $0x48] sm:$0xff]
      %v2412 = vld [vmem:[#allocation3 + $0x50] sm:$0xff]
      %v2413 = vld [vmem:[#allocation3 + $0x58] sm:$0xff]
      %v2414 = vld [vmem:[#allocation3 + $0x60] sm:$0xff]
      %v2415 = vld [vmem:[#allocation3 + $0x68] sm:$0xff]
      %v2416 = vld [vmem:[#allocation3 + $0x70] sm:$0xff]
      %v2417 = vld [vmem:[#allocation3 + $0x78] sm:$0xff]
      %v2418 = vld [vmem:[%s266] sm:$0xff]
      %v2419 = vld [vmem:[%s266 + $0x8] sm:$0xff]
      %v2420 = vld [vmem:[%s266 + $0x10] sm:$0xff]
      %v2421 = vld [vmem:[%s266 + $0x18] sm:$0xff]
      %v2422 = vld [vmem:[%s266 + $0x20] sm:$0xff]
      %v2423 = vld [vmem:[%s266 + $0x28] sm:$0xff]
      %v2424 = vld [vmem:[%s266 + $0x30] sm:$0xff]
      %v2425 = vld [vmem:[%s266 + $0x38] sm:$0xff]
      %v2426 = vld [vmem:[%s266 + $0x40] sm:$0xff]
      %v2427 = vld [vmem:[%s266 + $0x48] sm:$0xff]
      %v2428 = vld [vmem:[%s266 + $0x50] sm:$0xff]
      %v2429 = vld [vmem:[%s266 + $0x58] sm:$0xff]
      %v2430 = vld [vmem:[%s266 + $0x60] sm:$0xff]
      %v2431 = vld [vmem:[%s266 + $0x68] sm:$0xff]
      %v2432 = vld [vmem:[%s266 + $0x70] sm:$0xff]
      %v2433 = vld [vmem:[%s266 + $0x78] sm:$0xff]
      %2434 = vrot.lane.b32.xlu0 %v2402, 1
      %v2435 = vpop.permute.xlu0 %2434
      %2436 = vrot.lane.b32.xlu0 %v2410, 1
      %v2437 = vpop.permute.xlu0 %2436
      %2438 = vrot.lane.b32.xlu0 %v2403, 1
      %v2439 = vpop.permute.xlu0 %2438
      %2440 = vrot.lane.b32.xlu0 %v2411, 1
      %v2441 = vpop.permute.xlu0 %2440
      %2442 = vrot.lane.b32.xlu0 %v2404, 1
      %v2443 = vpop.permute.xlu0 %2442
      %2444 = vrot.lane.b32.xlu0 %v2412, 1
      %v2445 = vpop.permute.xlu0 %2444
      %2446 = vrot.lane.b32.xlu0 %v2405, 1
      %v2447 = vpop.permute.xlu0 %2446
      %2448 = vrot.lane.b32.xlu0 %v2413, 1
      %v2449 = vpop.permute.xlu0 %2448
      %2450 = vrot.lane.b32.xlu0 %v2406, 1
      %v2451 = vpop.permute.xlu0 %2450
      %2452 = vrot.lane.b32.xlu0 %v2414, 1
      %v2453 = vpop.permute.xlu0 %2452
      %2454 = vrot.lane.b32.xlu0 %v2407, 1
      %v2455 = vpop.permute.xlu0 %2454
      %2456 = vrot.lane.b32.xlu0 %v2415, 1
      %v2457 = vpop.permute.xlu0 %2456
      %2458 = vrot.lane.b32.xlu0 %v2408, 1
      %v2459 = vpop.permute.xlu0 %2458
      %2460 = vrot.lane.b32.xlu0 %v2416, 1
      %v2461 = vpop.permute.xlu0 %2460
      %2462 = vrot.lane.b32.xlu0 %v2409, 1
      %v2463 = vpop.permute.xlu0 %2462
      %2464 = vrot.lane.b32.xlu0 %v2417, 1
      %v2465 = vpop.permute.xlu0 %2464
      %vm2466 = vcmp.lt.s32.totalorder %v274, 1
      %v2467 = vsel %vm2466, %v2459, %v2463
      %v2468 = vsel %vm2466, %v2461, %v2465
      %v2469 = vsel %vm2466, %v2455, %v2459
      %v2470 = vsel %vm2466, %v2457, %v2461
      %v2471 = vsel %vm2466, %v2451, %v2455
      %v2472 = vsel %vm2466, %v2453, %v2457
      %v2473 = vsel %vm2466, %v2447, %v2451
      %v2474 = vsel %vm2466, %v2449, %v2453
      %v2475 = vsel %vm2466, %v2443, %v2447
      %v2476 = vsel %vm2466, %v2445, %v2449
      %v2477 = vsel %vm2466, %v2439, %v2443
      %v2478 = vsel %vm2466, %v2441, %v2445
      %v2479 = vsel %vm2466, %v2435, %v2439
      %v2480 = vsel %vm2466, %v2437, %v2441
      %v2481 = vsel %vm2466, %v2463, %v2435
      %v2482 = vsel %vm2466, %v2465, %v2437
      %2483 = vrot.lane.b32.xlu0 %v2418, 1
      %v2484 = vpop.permute.xlu0 %2483
      %2485 = vrot.lane.b32.xlu0 %v2426, 1
      %v2486 = vpop.permute.xlu0 %2485
      %2487 = vrot.lane.b32.xlu0 %v2419, 1
      %v2488 = vpop.permute.xlu0 %2487
      %2489 = vrot.lane.b32.xlu0 %v2427, 1
      %v2490 = vpop.permute.xlu0 %2489
      %2491 = vrot.lane.b32.xlu0 %v2420, 1
      %v2492 = vpop.permute.xlu0 %2491
      %2493 = vrot.lane.b32.xlu0 %v2428, 1
      %v2494 = vpop.permute.xlu0 %2493
      %2495 = vrot.lane.b32.xlu0 %v2421, 1
      %v2496 = vpop.permute.xlu0 %2495
      %2497 = vrot.lane.b32.xlu0 %v2429, 1
      %v2498 = vpop.permute.xlu0 %2497
      %2499 = vrot.lane.b32.xlu0 %v2422, 1
      %v2500 = vpop.permute.xlu0 %2499
      %2501 = vrot.lane.b32.xlu0 %v2430, 1
      %v2502 = vpop.permute.xlu0 %2501
      %2503 = vrot.lane.b32.xlu0 %v2423, 1
      %v2504 = vpop.permute.xlu0 %2503
      %2505 = vrot.lane.b32.xlu0 %v2431, 1
      %v2506 = vpop.permute.xlu0 %2505
      %2507 = vrot.lane.b32.xlu0 %v2424, 1
      %v2508 = vpop.permute.xlu0 %2507
      %2509 = vrot.lane.b32.xlu0 %v2432, 1
      %v2510 = vpop.permute.xlu0 %2509
      %2511 = vrot.lane.b32.xlu0 %v2425, 1
      %v2512 = vpop.permute.xlu0 %2511
      %2513 = vrot.lane.b32.xlu0 %v2433, 1
      %v2514 = vpop.permute.xlu0 %2513
      %v2515 = vsel %vm2466, %v2508, %v2512
      %v2516 = vsel %vm2466, %v2510, %v2514
      %v2517 = vsel %vm2466, %v2504, %v2508
      %v2518 = vsel %vm2466, %v2506, %v2510
      %v2519 = vsel %vm2466, %v2500, %v2504
      %v2520 = vsel %vm2466, %v2502, %v2506
      %v2521 = vsel %vm2466, %v2496, %v2500
      %v2522 = vsel %vm2466, %v2498, %v2502
      %v2523 = vsel %vm2466, %v2492, %v2496
      %v2524 = vsel %vm2466, %v2494, %v2498
      %v2525 = vsel %vm2466, %v2488, %v2492
      %v2526 = vsel %vm2466, %v2490, %v2494
      %v2527 = vsel %vm2466, %v2484, %v2488
      %v2528 = vsel %vm2466, %v2486, %v2490
      %v2529 = vsel %vm2466, %v2512, %v2484
      %v2530 = vsel %vm2466, %v2514, %v2486
      %v2531 = vsel %vm1751, 1, 0
      %v2532 = vsel %vm1752, 1, 0
      %v2533 = vsel %vm1753, 1, 0
      %v2534 = vsel %vm1754, 1, 0
      %v2535 = vsel %vm1755, 1, 0
      %v2536 = vsel %vm1756, 1, 0
      %v2537 = vsel %vm1757, 1, 0
      %v2538 = vsel %vm1758, 1, 0
      %vm2539 = vcmp.eq.s32.totalorder %v2531, 1
      %vm2540 = vcmp.eq.s32.totalorder %v2532, 1
      %vm2541 = vcmp.eq.s32.totalorder %v2533, 1
      %vm2542 = vcmp.eq.s32.totalorder %v2534, 1
      %vm2543 = vcmp.eq.s32.totalorder %v2535, 1
      %vm2544 = vcmp.eq.s32.totalorder %v2536, 1
      %vm2545 = vcmp.eq.s32.totalorder %v2537, 1
      %vm2546 = vcmp.eq.s32.totalorder %v2538, 1
      %v2547 = vsel %vm2539, %v2481, 0.0
      %v2548 = vsel %vm2540, %v2479, 0.0
      %v2549 = vsel %vm2541, %v2477, 0.0
      %v2550 = vsel %vm2542, %v2475, 0.0
      %v2551 = vsel %vm2543, %v2473, 0.0
      %v2552 = vsel %vm2544, %v2471, 0.0
      %v2553 = vsel %vm2545, %v2469, 0.0
      %v2554 = vsel %vm2546, %v2467, 0.0
      %v2555 = vsel %vm2539, %v2482, 0.0
      %v2556 = vsel %vm2540, %v2480, 0.0
      %v2557 = vsel %vm2541, %v2478, 0.0
      %v2558 = vsel %vm2542, %v2476, 0.0
      %v2559 = vsel %vm2543, %v2474, 0.0
      %v2560 = vsel %vm2544, %v2472, 0.0
      %v2561 = vsel %vm2545, %v2470, 0.0
      %v2562 = vsel %vm2546, %v2468, 0.0
      %v2563 = vsel %vm2539, %v2529, 0.0
      %v2564 = vsel %vm2540, %v2527, 0.0
      %v2565 = vsel %vm2541, %v2525, 0.0
      %v2566 = vsel %vm2542, %v2523, 0.0
      %v2567 = vsel %vm2543, %v2521, 0.0
      %v2568 = vsel %vm2544, %v2519, 0.0
      %v2569 = vsel %vm2545, %v2517, 0.0
      %v2570 = vsel %vm2546, %v2515, 0.0
      %v2571 = vsel %vm2539, %v2530, 0.0
      %v2572 = vsel %vm2540, %v2528, 0.0
      %v2573 = vsel %vm2541, %v2526, 0.0
      %v2574 = vsel %vm2542, %v2524, 0.0
      %v2575 = vsel %vm2543, %v2522, 0.0
      %v2576 = vsel %vm2544, %v2520, 0.0
      %v2577 = vsel %vm2545, %v2518, 0.0
      %v2578 = vsel %vm2546, %v2516, 0.0
      %v2579 = vpack.c.bf16 %v2548, %v2547
      %v2580 = vpack.c.bf16 %v2550, %v2549
      %v2581 = vpack.c.bf16 %v2552, %v2551
      %v2582 = vpack.c.bf16 %v2554, %v2553
      %v2583 = vpack.c.bf16 %v2556, %v2555
      %v2584 = vpack.c.bf16 %v2558, %v2557
      %v2585 = vpack.c.bf16 %v2560, %v2559
      %v2586 = vpack.c.bf16 %v2562, %v2561
      %2587 = vst [vmem:[#allocation4 + $0x180] sm:$0xff] %v2579
      %2588 = vst [vmem:[#allocation4 + $0x188] sm:$0xff] %v2580
      %2589 = vst [vmem:[#allocation4 + $0x190] sm:$0xff] %v2581
      %2590 = vst [vmem:[#allocation4 + $0x198] sm:$0xff] %v2582
      %2591 = vst [vmem:[#allocation4 + $0x1a0] sm:$0xff] %v2583
      %2592 = vst [vmem:[#allocation4 + $0x1a8] sm:$0xff] %v2584
      %2593 = vst [vmem:[#allocation4 + $0x1b0] sm:$0xff] %v2585
      %2594 = vst [vmem:[#allocation4 + $0x1b8] sm:$0xff] %v2586
      %v2595 = vpack.c.bf16 %v2564, %v2563
      %v2596 = vpack.c.bf16 %v2566, %v2565
      %v2597 = vpack.c.bf16 %v2568, %v2567
      %v2598 = vpack.c.bf16 %v2570, %v2569
      %v2599 = vpack.c.bf16 %v2572, %v2571
      %v2600 = vpack.c.bf16 %v2574, %v2573
      %v2601 = vpack.c.bf16 %v2576, %v2575
      %v2602 = vpack.c.bf16 %v2578, %v2577
      %2603 = vst [vmem:[#allocation4 + $0x1c0] sm:$0xff] %v2595
      %2604 = vst [vmem:[#allocation4 + $0x1c8] sm:$0xff] %v2596
      %2605 = vst [vmem:[#allocation4 + $0x1d0] sm:$0xff] %v2597
      %2606 = vst [vmem:[#allocation4 + $0x1d8] sm:$0xff] %v2598
      %2607 = vst [vmem:[#allocation4 + $0x1e0] sm:$0xff] %v2599
      %2608 = vst [vmem:[#allocation4 + $0x1e8] sm:$0xff] %v2600
      %2609 = vst [vmem:[#allocation4 + $0x1f0] sm:$0xff] %v2601
      %2610 = vst [vmem:[#allocation4 + $0x1f8] sm:$0xff] %v2602
      %v2611 = vld [vmem:[#allocation3] sm:$0xff]
      %v2612 = vld [vmem:[#allocation3 + $0x8] sm:$0xff]
      %v2613 = vld [vmem:[#allocation3 + $0x10] sm:$0xff]
      %v2614 = vld [vmem:[#allocation3 + $0x18] sm:$0xff]
      %v2615 = vld [vmem:[#allocation3 + $0x20] sm:$0xff]
      %v2616 = vld [vmem:[#allocation3 + $0x28] sm:$0xff]
      %v2617 = vld [vmem:[#allocation3 + $0x30] sm:$0xff]
      %v2618 = vld [vmem:[#allocation3 + $0x38] sm:$0xff]
      %v2619 = vld [vmem:[#allocation3 + $0x40] sm:$0xff]
      %v2620 = vld [vmem:[#allocation3 + $0x48] sm:$0xff]
      %v2621 = vld [vmem:[#allocation3 + $0x50] sm:$0xff]
      %v2622 = vld [vmem:[#allocation3 + $0x58] sm:$0xff]
      %v2623 = vld [vmem:[#allocation3 + $0x60] sm:$0xff]
      %v2624 = vld [vmem:[#allocation3 + $0x68] sm:$0xff]
      %v2625 = vld [vmem:[#allocation3 + $0x70] sm:$0xff]
      %v2626 = vld [vmem:[#allocation3 + $0x78] sm:$0xff]
      %v2627 = vld [vmem:[%s266] sm:$0xff]
      %v2628 = vld [vmem:[%s266 + $0x8] sm:$0xff]
      %v2629 = vld [vmem:[%s266 + $0x10] sm:$0xff]
      %v2630 = vld [vmem:[%s266 + $0x18] sm:$0xff]
      %v2631 = vld [vmem:[%s266 + $0x20] sm:$0xff]
      %v2632 = vld [vmem:[%s266 + $0x28] sm:$0xff]
      %v2633 = vld [vmem:[%s266 + $0x30] sm:$0xff]
      %v2634 = vld [vmem:[%s266 + $0x38] sm:$0xff]
      %v2635 = vld [vmem:[%s266 + $0x40] sm:$0xff]
      %v2636 = vld [vmem:[%s266 + $0x48] sm:$0xff]
      %v2637 = vld [vmem:[%s266 + $0x50] sm:$0xff]
      %v2638 = vld [vmem:[%s266 + $0x58] sm:$0xff]
      %v2639 = vld [vmem:[%s266 + $0x60] sm:$0xff]
      %v2640 = vld [vmem:[%s266 + $0x68] sm:$0xff]
      %v2641 = vld [vmem:[%s266 + $0x70] sm:$0xff]
      %v2642 = vld [vmem:[%s266 + $0x78] sm:$0xff]
      %v2643 = vpack.c.bf16 %v2612, %v2611
      %v2644 = vpack.c.bf16 %v2614, %v2613
      %v2645 = vpack.c.bf16 %v2616, %v2615
      %v2646 = vpack.c.bf16 %v2618, %v2617
      %v2647 = vpack.c.bf16 %v2620, %v2619
      %v2648 = vpack.c.bf16 %v2622, %v2621
      %v2649 = vpack.c.bf16 %v2624, %v2623
      %v2650 = vpack.c.bf16 %v2626, %v2625
      %2651 = vst [vmem:[#allocation4 + $0x200] sm:$0xff] %v2643
      %2652 = vst [vmem:[#allocation4 + $0x208] sm:$0xff] %v2644
      %2653 = vst [vmem:[#allocation4 + $0x210] sm:$0xff] %v2645
      %2654 = vst [vmem:[#allocation4 + $0x218] sm:$0xff] %v2646
      %2655 = vst [vmem:[#allocation4 + $0x220] sm:$0xff] %v2647
      %2656 = vst [vmem:[#allocation4 + $0x228] sm:$0xff] %v2648
      %2657 = vst [vmem:[#allocation4 + $0x230] sm:$0xff] %v2649
      %2658 = vst [vmem:[#allocation4 + $0x238] sm:$0xff] %v2650
      %v2659 = vpack.c.bf16 %v2628, %v2627
      %v2660 = vpack.c.bf16 %v2630, %v2629
      %v2661 = vpack.c.bf16 %v2632, %v2631
      %v2662 = vpack.c.bf16 %v2634, %v2633
      %v2663 = vpack.c.bf16 %v2636, %v2635
      %v2664 = vpack.c.bf16 %v2638, %v2637
      %v2665 = vpack.c.bf16 %v2640, %v2639
      %v2666 = vpack.c.bf16 %v2642, %v2641
      %2667 = vst [vmem:[#allocation4 + $0x240] sm:$0xff] %v2659
      %2668 = vst [vmem:[#allocation4 + $0x248] sm:$0xff] %v2660
      %2669 = vst [vmem:[#allocation4 + $0x250] sm:$0xff] %v2661
      %2670 = vst [vmem:[#allocation4 + $0x258] sm:$0xff] %v2662
      %2671 = vst [vmem:[#allocation4 + $0x260] sm:$0xff] %v2663
      %2672 = vst [vmem:[#allocation4 + $0x268] sm:$0xff] %v2664
      %2673 = vst [vmem:[#allocation4 + $0x270] sm:$0xff] %v2665
      %2674 = vst [vmem:[#allocation4 + $0x278] sm:$0xff] %v2666
      %v2675 = vld [vmem:[#allocation3] sm:$0xff]
      %v2676 = vld [vmem:[#allocation3 + $0x8] sm:$0xff]
      %v2677 = vld [vmem:[#allocation3 + $0x10] sm:$0xff]
      %v2678 = vld [vmem:[#allocation3 + $0x18] sm:$0xff]
      %v2679 = vld [vmem:[#allocation3 + $0x20] sm:$0xff]
      %v2680 = vld [vmem:[#allocation3 + $0x28] sm:$0xff]
      %v2681 = vld [vmem:[#allocation3 + $0x30] sm:$0xff]
      %v2682 = vld [vmem:[#allocation3 + $0x38] sm:$0xff]
      %v2683 = vld [vmem:[#allocation3 + $0x40] sm:$0xff]
      %v2684 = vld [vmem:[#allocation3 + $0x48] sm:$0xff]
      %v2685 = vld [vmem:[#allocation3 + $0x50] sm:$0xff]
      %v2686 = vld [vmem:[#allocation3 + $0x58] sm:$0xff]
      %v2687 = vld [vmem:[#allocation3 + $0x60] sm:$0xff]
      %v2688 = vld [vmem:[#allocation3 + $0x68] sm:$0xff]
      %v2689 = vld [vmem:[#allocation3 + $0x70] sm:$0xff]
      %v2690 = vld [vmem:[#allocation3 + $0x78] sm:$0xff]
      %v2691 = vld [vmem:[%s266] sm:$0xff]
      %v2692 = vld [vmem:[%s266 + $0x8] sm:$0xff]
      %v2693 = vld [vmem:[%s266 + $0x10] sm:$0xff]
      %v2694 = vld [vmem:[%s266 + $0x18] sm:$0xff]
      %v2695 = vld [vmem:[%s266 + $0x20] sm:$0xff]
      %v2696 = vld [vmem:[%s266 + $0x28] sm:$0xff]
      %v2697 = vld [vmem:[%s266 + $0x30] sm:$0xff]
      %v2698 = vld [vmem:[%s266 + $0x38] sm:$0xff]
      %v2699 = vld [vmem:[%s266 + $0x40] sm:$0xff]
      %v2700 = vld [vmem:[%s266 + $0x48] sm:$0xff]
      %v2701 = vld [vmem:[%s266 + $0x50] sm:$0xff]
      %v2702 = vld [vmem:[%s266 + $0x58] sm:$0xff]
      %v2703 = vld [vmem:[%s266 + $0x60] sm:$0xff]
      %v2704 = vld [vmem:[%s266 + $0x68] sm:$0xff]
      %v2705 = vld [vmem:[%s266 + $0x70] sm:$0xff]
      %v2706 = vld [vmem:[%s266 + $0x78] sm:$0xff]
      %2707 = vrot.lane.b32.xlu0 %v2675, 127
      %v2708 = vpop.permute.xlu0 %2707
      %2709 = vrot.lane.b32.xlu0 %v2683, 127
      %v2710 = vpop.permute.xlu0 %2709
      %2711 = vrot.lane.b32.xlu0 %v2676, 127
      %v2712 = vpop.permute.xlu0 %2711
      %2713 = vrot.lane.b32.xlu0 %v2684, 127
      %v2714 = vpop.permute.xlu0 %2713
      %2715 = vrot.lane.b32.xlu0 %v2677, 127
      %v2716 = vpop.permute.xlu0 %2715
      %2717 = vrot.lane.b32.xlu0 %v2685, 127
      %v2718 = vpop.permute.xlu0 %2717
      %2719 = vrot.lane.b32.xlu0 %v2678, 127
      %v2720 = vpop.permute.xlu0 %2719
      %2721 = vrot.lane.b32.xlu0 %v2686, 127
      %v2722 = vpop.permute.xlu0 %2721
      %2723 = vrot.lane.b32.xlu0 %v2679, 127
      %v2724 = vpop.permute.xlu0 %2723
      %2725 = vrot.lane.b32.xlu0 %v2687, 127
      %v2726 = vpop.permute.xlu0 %2725
      %2727 = vrot.lane.b32.xlu0 %v2680, 127
      %v2728 = vpop.permute.xlu0 %2727
      %2729 = vrot.lane.b32.xlu0 %v2688, 127
      %v2730 = vpop.permute.xlu0 %2729
      %2731 = vrot.lane.b32.xlu0 %v2681, 127
      %v2732 = vpop.permute.xlu0 %2731
      %2733 = vrot.lane.b32.xlu0 %v2689, 127
      %v2734 = vpop.permute.xlu0 %2733
      %2735 = vrot.lane.b32.xlu0 %v2682, 127
      %v2736 = vpop.permute.xlu0 %2735
      %2737 = vrot.lane.b32.xlu0 %v2690, 127
      %v2738 = vpop.permute.xlu0 %2737
      %vm2739 = vcmp.lt.s32.totalorder %v274, 127
      %v2740 = vsel %vm2739, %v2732, %v2736
      %v2741 = vsel %vm2739, %v2734, %v2738
      %v2742 = vsel %vm2739, %v2728, %v2732
      %v2743 = vsel %vm2739, %v2730, %v2734
      %v2744 = vsel %vm2739, %v2724, %v2728
      %v2745 = vsel %vm2739, %v2726, %v2730
      %v2746 = vsel %vm2739, %v2720, %v2724
      %v2747 = vsel %vm2739, %v2722, %v2726
      %v2748 = vsel %vm2739, %v2716, %v2720
      %v2749 = vsel %vm2739, %v2718, %v2722
      %v2750 = vsel %vm2739, %v2712, %v2716
      %v2751 = vsel %vm2739, %v2714, %v2718
      %v2752 = vsel %vm2739, %v2708, %v2712
      %v2753 = vsel %vm2739, %v2710, %v2714
      %v2754 = vsel %vm2739, %v2736, %v2708
      %v2755 = vsel %vm2739, %v2738, %v2710
      %2756 = vrot.lane.b32.xlu0 %v2691, 127
      %v2757 = vpop.permute.xlu0 %2756
      %2758 = vrot.lane.b32.xlu0 %v2699, 127
      %v2759 = vpop.permute.xlu0 %2758
      %2760 = vrot.lane.b32.xlu0 %v2692, 127
      %v2761 = vpop.permute.xlu0 %2760
      %2762 = vrot.lane.b32.xlu0 %v2700, 127
      %v2763 = vpop.permute.xlu0 %2762
      %2764 = vrot.lane.b32.xlu0 %v2693, 127
      %v2765 = vpop.permute.xlu0 %2764
      %2766 = vrot.lane.b32.xlu0 %v2701, 127
      %v2767 = vpop.permute.xlu0 %2766
      %2768 = vrot.lane.b32.xlu0 %v2694, 127
      %v2769 = vpop.permute.xlu0 %2768
      %2770 = vrot.lane.b32.xlu0 %v2702, 127
      %v2771 = vpop.permute.xlu0 %2770
      %2772 = vrot.lane.b32.xlu0 %v2695, 127
      %v2773 = vpop.permute.xlu0 %2772
      %2774 = vrot.lane.b32.xlu0 %v2703, 127
      %v2775 = vpop.permute.xlu0 %2774
      %2776 = vrot.lane.b32.xlu0 %v2696, 127
      %v2777 = vpop.permute.xlu0 %2776
      %2778 = vrot.lane.b32.xlu0 %v2704, 127
      %v2779 = vpop.permute.xlu0 %2778
      %2780 = vrot.lane.b32.xlu0 %v2697, 127
      %v2781 = vpop.permute.xlu0 %2780
      %2782 = vrot.lane.b32.xlu0 %v2705, 127
      %v2783 = vpop.permute.xlu0 %2782
      %2784 = vrot.lane.b32.xlu0 %v2698, 127
      %v2785 = vpop.permute.xlu0 %2784
      %2786 = vrot.lane.b32.xlu0 %v2706, 127
      %v2787 = vpop.permute.xlu0 %2786
      %v2788 = vsel %vm2739, %v2781, %v2785
      %v2789 = vsel %vm2739, %v2783, %v2787
      %v2790 = vsel %vm2739, %v2777, %v2781
      %v2791 = vsel %vm2739, %v2779, %v2783
      %v2792 = vsel %vm2739, %v2773, %v2777
      %v2793 = vsel %vm2739, %v2775, %v2779
      %v2794 = vsel %vm2739, %v2769, %v2773
      %v2795 = vsel %vm2739, %v2771, %v2775
      %v2796 = vsel %vm2739, %v2765, %v2769
      %v2797 = vsel %vm2739, %v2767, %v2771
      %v2798 = vsel %vm2739, %v2761, %v2765
      %v2799 = vsel %vm2739, %v2763, %v2767
      %v2800 = vsel %vm2739, %v2757, %v2761
      %v2801 = vsel %vm2739, %v2759, %v2763
      %v2802 = vsel %vm2739, %v2785, %v2757
      %v2803 = vsel %vm2739, %v2787, %v2759
      %v2804 = vsel %vm2177, 1, 0
      %v2805 = vsel %vm2178, 1, 0
      %v2806 = vsel %vm2179, 1, 0
      %v2807 = vsel %vm2180, 1, 0
      %v2808 = vsel %vm2181, 1, 0
      %v2809 = vsel %vm2182, 1, 0
      %v2810 = vsel %vm2183, 1, 0
      %v2811 = vsel %vm2184, 1, 0
      %vm2812 = vcmp.eq.s32.totalorder %v2804, 1
      %vm2813 = vcmp.eq.s32.totalorder %v2805, 1
      %vm2814 = vcmp.eq.s32.totalorder %v2806, 1
      %vm2815 = vcmp.eq.s32.totalorder %v2807, 1
      %vm2816 = vcmp.eq.s32.totalorder %v2808, 1
      %vm2817 = vcmp.eq.s32.totalorder %v2809, 1
      %vm2818 = vcmp.eq.s32.totalorder %v2810, 1
      %vm2819 = vcmp.eq.s32.totalorder %v2811, 1
      %v2820 = vsel %vm2812, %v2752, 0.0
      %v2821 = vsel %vm2813, %v2750, 0.0
      %v2822 = vsel %vm2814, %v2748, 0.0
      %v2823 = vsel %vm2815, %v2746, 0.0
      %v2824 = vsel %vm2816, %v2744, 0.0
      %v2825 = vsel %vm2817, %v2742, 0.0
      %v2826 = vsel %vm2818, %v2740, 0.0
      %v2827 = vsel %vm2819, %v2754, 0.0
      %v2828 = vsel %vm2812, %v2753, 0.0
      %v2829 = vsel %vm2813, %v2751, 0.0
      %v2830 = vsel %vm2814, %v2749, 0.0
      %v2831 = vsel %vm2815, %v2747, 0.0
      %v2832 = vsel %vm2816, %v2745, 0.0
      %v2833 = vsel %vm2817, %v2743, 0.0
      %v2834 = vsel %vm2818, %v2741, 0.0
      %v2835 = vsel %vm2819, %v2755, 0.0
      %v2836 = vsel %vm2812, %v2800, 0.0
      %v2837 = vsel %vm2813, %v2798, 0.0
      %v2838 = vsel %vm2814, %v2796, 0.0
      %v2839 = vsel %vm2815, %v2794, 0.0
      %v2840 = vsel %vm2816, %v2792, 0.0
      %v2841 = vsel %vm2817, %v2790, 0.0
      %v2842 = vsel %vm2818, %v2788, 0.0
      %v2843 = vsel %vm2819, %v2802, 0.0
      %v2844 = vsel %vm2812, %v2801, 0.0
      %v2845 = vsel %vm2813, %v2799, 0.0
      %v2846 = vsel %vm2814, %v2797, 0.0
      %v2847 = vsel %vm2815, %v2795, 0.0
      %v2848 = vsel %vm2816, %v2793, 0.0
      %v2849 = vsel %vm2817, %v2791, 0.0
      %v2850 = vsel %vm2818, %v2789, 0.0
      %v2851 = vsel %vm2819, %v2803, 0.0
      %v2852 = vpack.c.bf16 %v2821, %v2820
      %v2853 = vpack.c.bf16 %v2823, %v2822
      %v2854 = vpack.c.bf16 %v2825, %v2824
      %v2855 = vpack.c.bf16 %v2827, %v2826
      %v2856 = vpack.c.bf16 %v2829, %v2828
      %v2857 = vpack.c.bf16 %v2831, %v2830
      %v2858 = vpack.c.bf16 %v2833, %v2832
      %v2859 = vpack.c.bf16 %v2835, %v2834
      %2860 = vst [vmem:[#allocation4 + $0x280] sm:$0xff] %v2852
      %2861 = vst [vmem:[#allocation4 + $0x288] sm:$0xff] %v2853
      %2862 = vst [vmem:[#allocation4 + $0x290] sm:$0xff] %v2854
      %2863 = vst [vmem:[#allocation4 + $0x298] sm:$0xff] %v2855
      %2864 = vst [vmem:[#allocation4 + $0x2a0] sm:$0xff] %v2856
      %2865 = vst [vmem:[#allocation4 + $0x2a8] sm:$0xff] %v2857
      %2866 = vst [vmem:[#allocation4 + $0x2b0] sm:$0xff] %v2858
      %2867 = vst [vmem:[#allocation4 + $0x2b8] sm:$0xff] %v2859
      %v2868 = vpack.c.bf16 %v2837, %v2836
      %v2869 = vpack.c.bf16 %v2839, %v2838
      %v2870 = vpack.c.bf16 %v2841, %v2840
      %v2871 = vpack.c.bf16 %v2843, %v2842
      %v2872 = vpack.c.bf16 %v2845, %v2844
      %v2873 = vpack.c.bf16 %v2847, %v2846
      %v2874 = vpack.c.bf16 %v2849, %v2848
      %v2875 = vpack.c.bf16 %v2851, %v2850
      %2876 = vst [vmem:[#allocation4 + $0x2c0] sm:$0xff] %v2868
      %2877 = vst [vmem:[#allocation4 + $0x2c8] sm:$0xff] %v2869
      %2878 = vst [vmem:[#allocation4 + $0x2d0] sm:$0xff] %v2870
      %2879 = vst [vmem:[#allocation4 + $0x2d8] sm:$0xff] %v2871
      %2880 = vst [vmem:[#allocation4 + $0x2e0] sm:$0xff] %v2872
      %2881 = vst [vmem:[#allocation4 + $0x2e8] sm:$0xff] %v2873
      %2882 = vst [vmem:[#allocation4 + $0x2f0] sm:$0xff] %v2874
      %2883 = vst [vmem:[#allocation4 + $0x2f8] sm:$0xff] %v2875
      %vm2884 = vcmp.lt.s32.totalorder %v274, 992
      %vm2885 = vcmp.lt.s32.totalorder %v275, 992
      %vm2886 = vcmp.lt.s32.totalorder %v276, 992
      %vm2887 = vcmp.lt.s32.totalorder %v277, 992
      %vm2888 = vcmp.lt.s32.totalorder %v278, 992
      %vm2889 = vcmp.lt.s32.totalorder %v279, 992
      %vm2890 = vcmp.lt.s32.totalorder %v280, 992
      %vm2891 = vcmp.lt.s32.totalorder %v281, 992
      %vm2892 = vmand %vm2884, %vm1751
      %vm2893 = vmand %vm2885, %vm1752
      %vm2894 = vmand %vm2886, %vm1753
      %vm2895 = vmand %vm2887, %vm1754
      %vm2896 = vmand %vm2888, %vm1755
      %vm2897 = vmand %vm2889, %vm1756
      %vm2898 = vmand %vm2890, %vm1757
      %vm2899 = vmand %vm2891, %vm1758
      %v2900 = vld [vmem:[#allocation3] sm:$0xff]
      %v2901 = vld [vmem:[#allocation3 + $0x8] sm:$0xff]
      %v2902 = vld [vmem:[#allocation3 + $0x10] sm:$0xff]
      %v2903 = vld [vmem:[#allocation3 + $0x18] sm:$0xff]
      %v2904 = vld [vmem:[#allocation3 + $0x20] sm:$0xff]
      %v2905 = vld [vmem:[#allocation3 + $0x28] sm:$0xff]
      %v2906 = vld [vmem:[#allocation3 + $0x30] sm:$0xff]
      %v2907 = vld [vmem:[#allocation3 + $0x38] sm:$0xff]
      %v2908 = vld [vmem:[#allocation3 + $0x40] sm:$0xff]
      %v2909 = vld [vmem:[#allocation3 + $0x48] sm:$0xff]
      %v2910 = vld [vmem:[#allocation3 + $0x50] sm:$0xff]
      %v2911 = vld [vmem:[#allocation3 + $0x58] sm:$0xff]
      %v2912 = vld [vmem:[#allocation3 + $0x60] sm:$0xff]
      %v2913 = vld [vmem:[#allocation3 + $0x68] sm:$0xff]
      %v2914 = vld [vmem:[#allocation3 + $0x70] sm:$0xff]
      %v2915 = vld [vmem:[#allocation3 + $0x78] sm:$0xff]
      %v2916 = vld [vmem:[%s266] sm:$0xff]
      %v2917 = vld [vmem:[%s266 + $0x8] sm:$0xff]
      %v2918 = vld [vmem:[%s266 + $0x10] sm:$0xff]
      %v2919 = vld [vmem:[%s266 + $0x18] sm:$0xff]
      %v2920 = vld [vmem:[%s266 + $0x20] sm:$0xff]
      %v2921 = vld [vmem:[%s266 + $0x28] sm:$0xff]
      %v2922 = vld [vmem:[%s266 + $0x30] sm:$0xff]
      %v2923 = vld [vmem:[%s266 + $0x38] sm:$0xff]
      %v2924 = vld [vmem:[%s266 + $0x40] sm:$0xff]
      %v2925 = vld [vmem:[%s266 + $0x48] sm:$0xff]
      %v2926 = vld [vmem:[%s266 + $0x50] sm:$0xff]
      %v2927 = vld [vmem:[%s266 + $0x58] sm:$0xff]
      %v2928 = vld [vmem:[%s266 + $0x60] sm:$0xff]
      %v2929 = vld [vmem:[%s266 + $0x68] sm:$0xff]
      %v2930 = vld [vmem:[%s266 + $0x70] sm:$0xff]
      %v2931 = vld [vmem:[%s266 + $0x78] sm:$0xff]
      %2932 = vrot.lane.b32.xlu0 %v2900, 97
      %v2933 = vpop.permute.xlu0 %2932
      %2934 = vrot.lane.b32.xlu0 %v2908, 97
      %v2935 = vpop.permute.xlu0 %2934
      %2936 = vrot.lane.b32.xlu0 %v2901, 97
      %v2937 = vpop.permute.xlu0 %2936
      %2938 = vrot.lane.b32.xlu0 %v2909, 97
      %v2939 = vpop.permute.xlu0 %2938
      %2940 = vrot.lane.b32.xlu0 %v2902, 97
      %v2941 = vpop.permute.xlu0 %2940
      %2942 = vrot.lane.b32.xlu0 %v2910, 97
      %v2943 = vpop.permute.xlu0 %2942
      %2944 = vrot.lane.b32.xlu0 %v2903, 97
      %v2945 = vpop.permute.xlu0 %2944
      %2946 = vrot.lane.b32.xlu0 %v2911, 97
      %v2947 = vpop.permute.xlu0 %2946
      %2948 = vrot.lane.b32.xlu0 %v2904, 97
      %v2949 = vpop.permute.xlu0 %2948
      %2950 = vrot.lane.b32.xlu0 %v2912, 97
      %v2951 = vpop.permute.xlu0 %2950
      %2952 = vrot.lane.b32.xlu0 %v2905, 97
      %v2953 = vpop.permute.xlu0 %2952
      %2954 = vrot.lane.b32.xlu0 %v2913, 97
      %v2955 = vpop.permute.xlu0 %2954
      %2956 = vrot.lane.b32.xlu0 %v2906, 97
      %v2957 = vpop.permute.xlu0 %2956
      %2958 = vrot.lane.b32.xlu0 %v2914, 97
      %v2959 = vpop.permute.xlu0 %2958
      %2960 = vrot.lane.b32.xlu0 %v2907, 97
      %v2961 = vpop.permute.xlu0 %2960
      %2962 = vrot.lane.b32.xlu0 %v2915, 97
      %v2963 = vpop.permute.xlu0 %2962
      %vm2964 = vcmp.lt.s32.totalorder %v274, 97
      %v2965 = vsel %vm2964, %v2957, %v2961
      %v2966 = vsel %vm2964, %v2959, %v2963
      %v2967 = vsel %vm2964, %v2953, %v2957
      %v2968 = vsel %vm2964, %v2955, %v2959
      %v2969 = vsel %vm2964, %v2949, %v2953
      %v2970 = vsel %vm2964, %v2951, %v2955
      %v2971 = vsel %vm2964, %v2945, %v2949
      %v2972 = vsel %vm2964, %v2947, %v2951
      %v2973 = vsel %vm2964, %v2941, %v2945
      %v2974 = vsel %vm2964, %v2943, %v2947
      %v2975 = vsel %vm2964, %v2937, %v2941
      %v2976 = vsel %vm2964, %v2939, %v2943
      %v2977 = vsel %vm2964, %v2933, %v2937
      %v2978 = vsel %vm2964, %v2935, %v2939
      %v2979 = vsel %vm2964, %v2961, %v2933
      %v2980 = vsel %vm2964, %v2963, %v2935
      %2981 = vrot.lane.b32.xlu0 %v2916, 97
      %v2982 = vpop.permute.xlu0 %2981
      %2983 = vrot.lane.b32.xlu0 %v2924, 97
      %v2984 = vpop.permute.xlu0 %2983
      %2985 = vrot.lane.b32.xlu0 %v2917, 97
      %v2986 = vpop.permute.xlu0 %2985
      %2987 = vrot.lane.b32.xlu0 %v2925, 97
      %v2988 = vpop.permute.xlu0 %2987
      %2989 = vrot.lane.b32.xlu0 %v2918, 97
      %v2990 = vpop.permute.xlu0 %2989
      %2991 = vrot.lane.b32.xlu0 %v2926, 97
      %v2992 = vpop.permute.xlu0 %2991
      %2993 = vrot.lane.b32.xlu0 %v2919, 97
      %v2994 = vpop.permute.xlu0 %2993
      %2995 = vrot.lane.b32.xlu0 %v2927, 97
      %v2996 = vpop.permute.xlu0 %2995
      %2997 = vrot.lane.b32.xlu0 %v2920, 97
      %v2998 = vpop.permute.xlu0 %2997
      %2999 = vrot.lane.b32.xlu0 %v2928, 97
      %v3000 = vpop.permute.xlu0 %2999
      %3001 = vrot.lane.b32.xlu0 %v2921, 97
      %v3002 = vpop.permute.xlu0 %3001
      %3003 = vrot.lane.b32.xlu0 %v2929, 97
      %v3004 = vpop.permute.xlu0 %3003
      %3005 = vrot.lane.b32.xlu0 %v2922, 97
      %v3006 = vpop.permute.xlu0 %3005
      %3007 = vrot.lane.b32.xlu0 %v2930, 97
      %v3008 = vpop.permute.xlu0 %3007
      %3009 = vrot.lane.b32.xlu0 %v2923, 97
      %v3010 = vpop.permute.xlu0 %3009
      %3011 = vrot.lane.b32.xlu0 %v2931, 97
      %v3012 = vpop.permute.xlu0 %3011
      %v3013 = vsel %vm2964, %v3006, %v3010
      %v3014 = vsel %vm2964, %v3008, %v3012
      %v3015 = vsel %vm2964, %v3002, %v3006
      %v3016 = vsel %vm2964, %v3004, %v3008
      %v3017 = vsel %vm2964, %v2998, %v3002
      %v3018 = vsel %vm2964, %v3000, %v3004
      %v3019 = vsel %vm2964, %v2994, %v2998
      %v3020 = vsel %vm2964, %v2996, %v3000
      %v3021 = vsel %vm2964, %v2990, %v2994
      %v3022 = vsel %vm2964, %v2992, %v2996
      %v3023 = vsel %vm2964, %v2986, %v2990
      %v3024 = vsel %vm2964, %v2988, %v2992
      %v3025 = vsel %vm2964, %v2982, %v2986
      %v3026 = vsel %vm2964, %v2984, %v2988
      %v3027 = vsel %vm2964, %v3010, %v2982
      %v3028 = vsel %vm2964, %v3012, %v2984
      %v3029 = vsel %vm2892, 1, 0
      %v3030 = vsel %vm2893, 1, 0
      %v3031 = vsel %vm2894, 1, 0
      %v3032 = vsel %vm2895, 1, 0
      %v3033 = vsel %vm2896, 1, 0
      %v3034 = vsel %vm2897, 1, 0
      %v3035 = vsel %vm2898, 1, 0
      %v3036 = vsel %vm2899, 1, 0
      %vm3037 = vcmp.eq.s32.totalorder %v3029, 1
      %vm3038 = vcmp.eq.s32.totalorder %v3030, 1
      %vm3039 = vcmp.eq.s32.totalorder %v3031, 1
      %vm3040 = vcmp.eq.s32.totalorder %v3032, 1
      %vm3041 = vcmp.eq.s32.totalorder %v3033, 1
      %vm3042 = vcmp.eq.s32.totalorder %v3034, 1
      %vm3043 = vcmp.eq.s32.totalorder %v3035, 1
      %vm3044 = vcmp.eq.s32.totalorder %v3036, 1
      %v3045 = vsel %vm3037, %v2977, 0.0
      %v3046 = vsel %vm3038, %v2975, 0.0
      %v3047 = vsel %vm3039, %v2973, 0.0
      %v3048 = vsel %vm3040, %v2971, 0.0
      %v3049 = vsel %vm3041, %v2969, 0.0
      %v3050 = vsel %vm3042, %v2967, 0.0
      %v3051 = vsel %vm3043, %v2965, 0.0
      %v3052 = vsel %vm3044, %v2979, 0.0
      %v3053 = vsel %vm3037, %v2978, 0.0
      %v3054 = vsel %vm3038, %v2976, 0.0
      %v3055 = vsel %vm3039, %v2974, 0.0
      %v3056 = vsel %vm3040, %v2972, 0.0
      %v3057 = vsel %vm3041, %v2970, 0.0
      %v3058 = vsel %vm3042, %v2968, 0.0
      %v3059 = vsel %vm3043, %v2966, 0.0
      %v3060 = vsel %vm3044, %v2980, 0.0
      %v3061 = vsel %vm3037, %v3025, 0.0
      %v3062 = vsel %vm3038, %v3023, 0.0
      %v3063 = vsel %vm3039, %v3021, 0.0
      %v3064 = vsel %vm3040, %v3019, 0.0
      %v3065 = vsel %vm3041, %v3017, 0.0
      %v3066 = vsel %vm3042, %v3015, 0.0
      %v3067 = vsel %vm3043, %v3013, 0.0
      %v3068 = vsel %vm3044, %v3027, 0.0
      %v3069 = vsel %vm3037, %v3026, 0.0
      %v3070 = vsel %vm3038, %v3024, 0.0
      %v3071 = vsel %vm3039, %v3022, 0.0
      %v3072 = vsel %vm3040, %v3020, 0.0
      %v3073 = vsel %vm3041, %v3018, 0.0
      %v3074 = vsel %vm3042, %v3016, 0.0
      %v3075 = vsel %vm3043, %v3014, 0.0
      %v3076 = vsel %vm3044, %v3028, 0.0
      %v3077 = vpack.c.bf16 %v3046, %v3045
      %v3078 = vpack.c.bf16 %v3048, %v3047
      %v3079 = vpack.c.bf16 %v3050, %v3049
      %v3080 = vpack.c.bf16 %v3052, %v3051
      %v3081 = vpack.c.bf16 %v3054, %v3053
      %v3082 = vpack.c.bf16 %v3056, %v3055
      %v3083 = vpack.c.bf16 %v3058, %v3057
      %v3084 = vpack.c.bf16 %v3060, %v3059
      %3085 = vst [vmem:[#allocation4 + $0x300] sm:$0xff] %v3077
      %3086 = vst [vmem:[#allocation4 + $0x308] sm:$0xff] %v3078
      %3087 = vst [vmem:[#allocation4 + $0x310] sm:$0xff] %v3079
      %3088 = vst [vmem:[#allocation4 + $0x318] sm:$0xff] %v3080
      %3089 = vst [vmem:[#allocation4 + $0x320] sm:$0xff] %v3081
      %3090 = vst [vmem:[#allocation4 + $0x328] sm:$0xff] %v3082
      %3091 = vst [vmem:[#allocation4 + $0x330] sm:$0xff] %v3083
      %3092 = vst [vmem:[#allocation4 + $0x338] sm:$0xff] %v3084
      %v3093 = vpack.c.bf16 %v3062, %v3061
      %v3094 = vpack.c.bf16 %v3064, %v3063
      %v3095 = vpack.c.bf16 %v3066, %v3065
      %v3096 = vpack.c.bf16 %v3068, %v3067
      %v3097 = vpack.c.bf16 %v3070, %v3069
      %v3098 = vpack.c.bf16 %v3072, %v3071
      %v3099 = vpack.c.bf16 %v3074, %v3073
      %v3100 = vpack.c.bf16 %v3076, %v3075
      %3101 = vst [vmem:[#allocation4 + $0x340] sm:$0xff] %v3093
      %3102 = vst [vmem:[#allocation4 + $0x348] sm:$0xff] %v3094
      %3103 = vst [vmem:[#allocation4 + $0x350] sm:$0xff] %v3095
      %3104 = vst [vmem:[#allocation4 + $0x358] sm:$0xff] %v3096
      %3105 = vst [vmem:[#allocation4 + $0x360] sm:$0xff] %v3097
      %3106 = vst [vmem:[#allocation4 + $0x368] sm:$0xff] %v3098
      %3107 = vst [vmem:[#allocation4 + $0x370] sm:$0xff] %v3099
      %3108 = vst [vmem:[#allocation4 + $0x378] sm:$0xff] %v3100
      %v3109 = vld [vmem:[#allocation3] sm:$0xff]
      %v3110 = vld [vmem:[#allocation3 + $0x8] sm:$0xff]
      %v3111 = vld [vmem:[#allocation3 + $0x10] sm:$0xff]
      %v3112 = vld [vmem:[#allocation3 + $0x18] sm:$0xff]
      %v3113 = vld [vmem:[#allocation3 + $0x20] sm:$0xff]
      %v3114 = vld [vmem:[#allocation3 + $0x28] sm:$0xff]
      %v3115 = vld [vmem:[#allocation3 + $0x30] sm:$0xff]
      %v3116 = vld [vmem:[#allocation3 + $0x38] sm:$0xff]
      %v3117 = vld [vmem:[#allocation3 + $0x40] sm:$0xff]
      %v3118 = vld [vmem:[#allocation3 + $0x48] sm:$0xff]
      %v3119 = vld [vmem:[#allocation3 + $0x50] sm:$0xff]
      %v3120 = vld [vmem:[#allocation3 + $0x58] sm:$0xff]
      %v3121 = vld [vmem:[#allocation3 + $0x60] sm:$0xff]
      %v3122 = vld [vmem:[#allocation3 + $0x68] sm:$0xff]
      %v3123 = vld [vmem:[#allocation3 + $0x70] sm:$0xff]
      %v3124 = vld [vmem:[#allocation3 + $0x78] sm:$0xff]
      %v3125 = vld [vmem:[%s266] sm:$0xff]
      %v3126 = vld [vmem:[%s266 + $0x8] sm:$0xff]
      %v3127 = vld [vmem:[%s266 + $0x10] sm:$0xff]
      %v3128 = vld [vmem:[%s266 + $0x18] sm:$0xff]
      %v3129 = vld [vmem:[%s266 + $0x20] sm:$0xff]
      %v3130 = vld [vmem:[%s266 + $0x28] sm:$0xff]
      %v3131 = vld [vmem:[%s266 + $0x30] sm:$0xff]
      %v3132 = vld [vmem:[%s266 + $0x38] sm:$0xff]
      %v3133 = vld [vmem:[%s266 + $0x40] sm:$0xff]
      %v3134 = vld [vmem:[%s266 + $0x48] sm:$0xff]
      %v3135 = vld [vmem:[%s266 + $0x50] sm:$0xff]
      %v3136 = vld [vmem:[%s266 + $0x58] sm:$0xff]
      %v3137 = vld [vmem:[%s266 + $0x60] sm:$0xff]
      %v3138 = vld [vmem:[%s266 + $0x68] sm:$0xff]
      %v3139 = vld [vmem:[%s266 + $0x70] sm:$0xff]
      %v3140 = vld [vmem:[%s266 + $0x78] sm:$0xff]
      %3141 = vrot.lane.b32.xlu0 %v3109, 96
      %v3142 = vpop.permute.xlu0 %3141
      %3143 = vrot.lane.b32.xlu0 %v3117, 96
      %v3144 = vpop.permute.xlu0 %3143
      %3145 = vrot.lane.b32.xlu0 %v3110, 96
      %v3146 = vpop.permute.xlu0 %3145
      %3147 = vrot.lane.b32.xlu0 %v3118, 96
      %v3148 = vpop.permute.xlu0 %3147
      %3149 = vrot.lane.b32.xlu0 %v3111, 96
      %v3150 = vpop.permute.xlu0 %3149
      %3151 = vrot.lane.b32.xlu0 %v3119, 96
      %v3152 = vpop.permute.xlu0 %3151
      %3153 = vrot.lane.b32.xlu0 %v3112, 96
      %v3154 = vpop.permute.xlu0 %3153
      %3155 = vrot.lane.b32.xlu0 %v3120, 96
      %v3156 = vpop.permute.xlu0 %3155
      %3157 = vrot.lane.b32.xlu0 %v3113, 96
      %v3158 = vpop.permute.xlu0 %3157
      %3159 = vrot.lane.b32.xlu0 %v3121, 96
      %v3160 = vpop.permute.xlu0 %3159
      %3161 = vrot.lane.b32.xlu0 %v3114, 96
      %v3162 = vpop.permute.xlu0 %3161
      %3163 = vrot.lane.b32.xlu0 %v3122, 96
      %v3164 = vpop.permute.xlu0 %3163
      %3165 = vrot.lane.b32.xlu0 %v3115, 96
      %v3166 = vpop.permute.xlu0 %3165
      %3167 = vrot.lane.b32.xlu0 %v3123, 96
      %v3168 = vpop.permute.xlu0 %3167
      %3169 = vrot.lane.b32.xlu0 %v3116, 96
      %v3170 = vpop.permute.xlu0 %3169
      %3171 = vrot.lane.b32.xlu0 %v3124, 96
      %v3172 = vpop.permute.xlu0 %3171
      %vm3173 = vcmp.lt.s32.totalorder %v274, 96
      %v3174 = vsel %vm3173, %v3166, %v3170
      %v3175 = vsel %vm3173, %v3168, %v3172
      %v3176 = vsel %vm3173, %v3162, %v3166
      %v3177 = vsel %vm3173, %v3164, %v3168
      %v3178 = vsel %vm3173, %v3158, %v3162
      %v3179 = vsel %vm3173, %v3160, %v3164
      %v3180 = vsel %vm3173, %v3154, %v3158
      %v3181 = vsel %vm3173, %v3156, %v3160
      %v3182 = vsel %vm3173, %v3150, %v3154
      %v3183 = vsel %vm3173, %v3152, %v3156
      %v3184 = vsel %vm3173, %v3146, %v3150
      %v3185 = vsel %vm3173, %v3148, %v3152
      %v3186 = vsel %vm3173, %v3142, %v3146
      %v3187 = vsel %vm3173, %v3144, %v3148
      %v3188 = vsel %vm3173, %v3170, %v3142
      %v3189 = vsel %vm3173, %v3172, %v3144
      %3190 = vrot.lane.b32.xlu0 %v3125, 96
      %v3191 = vpop.permute.xlu0 %3190
      %3192 = vrot.lane.b32.xlu0 %v3133, 96
      %v3193 = vpop.permute.xlu0 %3192
      %3194 = vrot.lane.b32.xlu0 %v3126, 96
      %v3195 = vpop.permute.xlu0 %3194
      %3196 = vrot.lane.b32.xlu0 %v3134, 96
      %v3197 = vpop.permute.xlu0 %3196
      %3198 = vrot.lane.b32.xlu0 %v3127, 96
      %v3199 = vpop.permute.xlu0 %3198
      %3200 = vrot.lane.b32.xlu0 %v3135, 96
      %v3201 = vpop.permute.xlu0 %3200
      %3202 = vrot.lane.b32.xlu0 %v3128, 96
      %v3203 = vpop.permute.xlu0 %3202
      %3204 = vrot.lane.b32.xlu0 %v3136, 96
      %v3205 = vpop.permute.xlu0 %3204
      %3206 = vrot.lane.b32.xlu0 %v3129, 96
      %v3207 = vpop.permute.xlu0 %3206
      %3208 = vrot.lane.b32.xlu0 %v3137, 96
      %v3209 = vpop.permute.xlu0 %3208
      %3210 = vrot.lane.b32.xlu0 %v3130, 96
      %v3211 = vpop.permute.xlu0 %3210
      %3212 = vrot.lane.b32.xlu0 %v3138, 96
      %v3213 = vpop.permute.xlu0 %3212
      %3214 = vrot.lane.b32.xlu0 %v3131, 96
      %v3215 = vpop.permute.xlu0 %3214
      %3216 = vrot.lane.b32.xlu0 %v3139, 96
      %v3217 = vpop.permute.xlu0 %3216
      %3218 = vrot.lane.b32.xlu0 %v3132, 96
      %v3219 = vpop.permute.xlu0 %3218
      %3220 = vrot.lane.b32.xlu0 %v3140, 96
      %v3221 = vpop.permute.xlu0 %3220
      %v3222 = vsel %vm3173, %v3215, %v3219
      %v3223 = vsel %vm3173, %v3217, %v3221
      %v3224 = vsel %vm3173, %v3211, %v3215
      %v3225 = vsel %vm3173, %v3213, %v3217
      %v3226 = vsel %vm3173, %v3207, %v3211
      %v3227 = vsel %vm3173, %v3209, %v3213
      %v3228 = vsel %vm3173, %v3203, %v3207
      %v3229 = vsel %vm3173, %v3205, %v3209
      %v3230 = vsel %vm3173, %v3199, %v3203
      %v3231 = vsel %vm3173, %v3201, %v3205
      %v3232 = vsel %vm3173, %v3195, %v3199
      %v3233 = vsel %vm3173, %v3197, %v3201
      %v3234 = vsel %vm3173, %v3191, %v3195
      %v3235 = vsel %vm3173, %v3193, %v3197
      %v3236 = vsel %vm3173, %v3219, %v3191
      %v3237 = vsel %vm3173, %v3221, %v3193
      %v3238 = vsel %vm2884, 1, 0
      %v3239 = vsel %vm2885, 1, 0
      %v3240 = vsel %vm2886, 1, 0
      %v3241 = vsel %vm2887, 1, 0
      %v3242 = vsel %vm2888, 1, 0
      %v3243 = vsel %vm2889, 1, 0
      %v3244 = vsel %vm2890, 1, 0
      %v3245 = vsel %vm2891, 1, 0
      %vm3246 = vcmp.eq.s32.totalorder %v3238, 1
      %vm3247 = vcmp.eq.s32.totalorder %v3239, 1
      %vm3248 = vcmp.eq.s32.totalorder %v3240, 1
      %vm3249 = vcmp.eq.s32.totalorder %v3241, 1
      %vm3250 = vcmp.eq.s32.totalorder %v3242, 1
      %vm3251 = vcmp.eq.s32.totalorder %v3243, 1
      %vm3252 = vcmp.eq.s32.totalorder %v3244, 1
      %vm3253 = vcmp.eq.s32.totalorder %v3245, 1
      %v3254 = vsel %vm3246, %v3186, 0.0
      %v3255 = vsel %vm3247, %v3184, 0.0
      %v3256 = vsel %vm3248, %v3182, 0.0
      %v3257 = vsel %vm3249, %v3180, 0.0
      %v3258 = vsel %vm3250, %v3178, 0.0
      %v3259 = vsel %vm3251, %v3176, 0.0
      %v3260 = vsel %vm3252, %v3174, 0.0
      %v3261 = vsel %vm3253, %v3188, 0.0
      %v3262 = vsel %vm3246, %v3187, 0.0
      %v3263 = vsel %vm3247, %v3185, 0.0
      %v3264 = vsel %vm3248, %v3183, 0.0
      %v3265 = vsel %vm3249, %v3181, 0.0
      %v3266 = vsel %vm3250, %v3179, 0.0
      %v3267 = vsel %vm3251, %v3177, 0.0
      %v3268 = vsel %vm3252, %v3175, 0.0
      %v3269 = vsel %vm3253, %v3189, 0.0
      %v3270 = vsel %vm3246, %v3234, 0.0
      %v3271 = vsel %vm3247, %v3232, 0.0
      %v3272 = vsel %vm3248, %v3230, 0.0
      %v3273 = vsel %vm3249, %v3228, 0.0
      %v3274 = vsel %vm3250, %v3226, 0.0
      %v3275 = vsel %vm3251, %v3224, 0.0
      %v3276 = vsel %vm3252, %v3222, 0.0
      %v3277 = vsel %vm3253, %v3236, 0.0
      %v3278 = vsel %vm3246, %v3235, 0.0
      %v3279 = vsel %vm3247, %v3233, 0.0
      %v3280 = vsel %vm3248, %v3231, 0.0
      %v3281 = vsel %vm3249, %v3229, 0.0
      %v3282 = vsel %vm3250, %v3227, 0.0
      %v3283 = vsel %vm3251, %v3225, 0.0
      %v3284 = vsel %vm3252, %v3223, 0.0
      %v3285 = vsel %vm3253, %v3237, 0.0
      %v3286 = vpack.c.bf16 %v3255, %v3254
      %v3287 = vpack.c.bf16 %v3257, %v3256
      %v3288 = vpack.c.bf16 %v3259, %v3258
      %v3289 = vpack.c.bf16 %v3261, %v3260
      %v3290 = vpack.c.bf16 %v3263, %v3262
      %v3291 = vpack.c.bf16 %v3265, %v3264
      %v3292 = vpack.c.bf16 %v3267, %v3266
      %v3293 = vpack.c.bf16 %v3269, %v3268
      %3294 = vst [vmem:[#allocation4 + $0x380] sm:$0xff] %v3286
      %3295 = vst [vmem:[#allocation4 + $0x388] sm:$0xff] %v3287
      %3296 = vst [vmem:[#allocation4 + $0x390] sm:$0xff] %v3288
      %3297 = vst [vmem:[#allocation4 + $0x398] sm:$0xff] %v3289
      %3298 = vst [vmem:[#allocation4 + $0x3a0] sm:$0xff] %v3290
      %3299 = vst [vmem:[#allocation4 + $0x3a8] sm:$0xff] %v3291
      %3300 = vst [vmem:[#allocation4 + $0x3b0] sm:$0xff] %v3292
      %3301 = vst [vmem:[#allocation4 + $0x3b8] sm:$0xff] %v3293
      %v3302 = vpack.c.bf16 %v3271, %v3270
      %v3303 = vpack.c.bf16 %v3273, %v3272
      %v3304 = vpack.c.bf16 %v3275, %v3274
      %v3305 = vpack.c.bf16 %v3277, %v3276
      %v3306 = vpack.c.bf16 %v3279, %v3278
      %v3307 = vpack.c.bf16 %v3281, %v3280
      %v3308 = vpack.c.bf16 %v3283, %v3282
      %v3309 = vpack.c.bf16 %v3285, %v3284
      %3310 = vst [vmem:[#allocation4 + $0x3c0] sm:$0xff] %v3302
      %3311 = vst [vmem:[#allocation4 + $0x3c8] sm:$0xff] %v3303
      %3312 = vst [vmem:[#allocation4 + $0x3d0] sm:$0xff] %v3304
      %3313 = vst [vmem:[#allocation4 + $0x3d8] sm:$0xff] %v3305
      %3314 = vst [vmem:[#allocation4 + $0x3e0] sm:$0xff] %v3306
      %3315 = vst [vmem:[#allocation4 + $0x3e8] sm:$0xff] %v3307
      %3316 = vst [vmem:[#allocation4 + $0x3f0] sm:$0xff] %v3308
      %3317 = vst [vmem:[#allocation4 + $0x3f8] sm:$0xff] %v3309
      %vm3318 = vmand %vm2884, %vm2177
      %vm3319 = vmand %vm2885, %vm2178
      %vm3320 = vmand %vm2886, %vm2179
      %vm3321 = vmand %vm2887, %vm2180
      %vm3322 = vmand %vm2888, %vm2181
      %vm3323 = vmand %vm2889, %vm2182
      %vm3324 = vmand %vm2890, %vm2183
      %vm3325 = vmand %vm2891, %vm2184
      %v3326 = vld [vmem:[#allocation3] sm:$0xff]
      %v3327 = vld [vmem:[#allocation3 + $0x8] sm:$0xff]
      %v3328 = vld [vmem:[#allocation3 + $0x10] sm:$0xff]
      %v3329 = vld [vmem:[#allocation3 + $0x18] sm:$0xff]
      %v3330 = vld [vmem:[#allocation3 + $0x20] sm:$0xff]
      %v3331 = vld [vmem:[#allocation3 + $0x28] sm:$0xff]
      %v3332 = vld [vmem:[#allocation3 + $0x30] sm:$0xff]
      %v3333 = vld [vmem:[#allocation3 + $0x38] sm:$0xff]
      %v3334 = vld [vmem:[#allocation3 + $0x40] sm:$0xff]
      %v3335 = vld [vmem:[#allocation3 + $0x48] sm:$0xff]
      %v3336 = vld [vmem:[#allocation3 + $0x50] sm:$0xff]
      %v3337 = vld [vmem:[#allocation3 + $0x58] sm:$0xff]
      %v3338 = vld [vmem:[#allocation3 + $0x60] sm:$0xff]
      %v3339 = vld [vmem:[#allocation3 + $0x68] sm:$0xff]
      %v3340 = vld [vmem:[#allocation3 + $0x70] sm:$0xff]
      %v3341 = vld [vmem:[#allocation3 + $0x78] sm:$0xff]
      %v3342 = vld [vmem:[%s266] sm:$0xff]
      %v3343 = vld [vmem:[%s266 + $0x8] sm:$0xff]
      %v3344 = vld [vmem:[%s266 + $0x10] sm:$0xff]
      %v3345 = vld [vmem:[%s266 + $0x18] sm:$0xff]
      %v3346 = vld [vmem:[%s266 + $0x20] sm:$0xff]
      %v3347 = vld [vmem:[%s266 + $0x28] sm:$0xff]
      %v3348 = vld [vmem:[%s266 + $0x30] sm:$0xff]
      %v3349 = vld [vmem:[%s266 + $0x38] sm:$0xff]
      %v3350 = vld [vmem:[%s266 + $0x40] sm:$0xff]
      %v3351 = vld [vmem:[%s266 + $0x48] sm:$0xff]
      %v3352 = vld [vmem:[%s266 + $0x50] sm:$0xff]
      %v3353 = vld [vmem:[%s266 + $0x58] sm:$0xff]
      %v3354 = vld [vmem:[%s266 + $0x60] sm:$0xff]
      %v3355 = vld [vmem:[%s266 + $0x68] sm:$0xff]
      %v3356 = vld [vmem:[%s266 + $0x70] sm:$0xff]
      %v3357 = vld [vmem:[%s266 + $0x78] sm:$0xff]
      %3358 = vrot.lane.b32.xlu0 %v3326, 95
      %v3359 = vpop.permute.xlu0 %3358
      %3360 = vrot.lane.b32.xlu0 %v3334, 95
      %v3361 = vpop.permute.xlu0 %3360
      %3362 = vrot.lane.b32.xlu0 %v3327, 95
      %v3363 = vpop.permute.xlu0 %3362
      %3364 = vrot.lane.b32.xlu0 %v3335, 95
      %v3365 = vpop.permute.xlu0 %3364
      %3366 = vrot.lane.b32.xlu0 %v3328, 95
      %v3367 = vpop.permute.xlu0 %3366
      %3368 = vrot.lane.b32.xlu0 %v3336, 95
      %v3369 = vpop.permute.xlu0 %3368
      %3370 = vrot.lane.b32.xlu0 %v3329, 95
      %v3371 = vpop.permute.xlu0 %3370
      %3372 = vrot.lane.b32.xlu0 %v3337, 95
      %v3373 = vpop.permute.xlu0 %3372
      %3374 = vrot.lane.b32.xlu0 %v3330, 95
      %v3375 = vpop.permute.xlu0 %3374
      %3376 = vrot.lane.b32.xlu0 %v3338, 95
      %v3377 = vpop.permute.xlu0 %3376
      %3378 = vrot.lane.b32.xlu0 %v3331, 95
      %v3379 = vpop.permute.xlu0 %3378
      %3380 = vrot.lane.b32.xlu0 %v3339, 95
      %v3381 = vpop.permute.xlu0 %3380
      %3382 = vrot.lane.b32.xlu0 %v3332, 95
      %v3383 = vpop.permute.xlu0 %3382
      %3384 = vrot.lane.b32.xlu0 %v3340, 95
      %v3385 = vpop.permute.xlu0 %3384
      %3386 = vrot.lane.b32.xlu0 %v3333, 95
      %v3387 = vpop.permute.xlu0 %3386
      %3388 = vrot.lane.b32.xlu0 %v3341, 95
      %v3389 = vpop.permute.xlu0 %3388
      %vm3390 = vcmp.lt.s32.totalorder %v274, 95
      %v3391 = vsel %vm3390, %v3383, %v3387
      %v3392 = vsel %vm3390, %v3385, %v3389
      %v3393 = vsel %vm3390, %v3379, %v3383
      %v3394 = vsel %vm3390, %v3381, %v3385
      %v3395 = vsel %vm3390, %v3375, %v3379
      %v3396 = vsel %vm3390, %v3377, %v3381
      %v3397 = vsel %vm3390, %v3371, %v3375
      %v3398 = vsel %vm3390, %v3373, %v3377
      %v3399 = vsel %vm3390, %v3367, %v3371
      %v3400 = vsel %vm3390, %v3369, %v3373
      %v3401 = vsel %vm3390, %v3363, %v3367
      %v3402 = vsel %vm3390, %v3365, %v3369
      %v3403 = vsel %vm3390, %v3359, %v3363
      %v3404 = vsel %vm3390, %v3361, %v3365
      %v3405 = vsel %vm3390, %v3387, %v3359
      %v3406 = vsel %vm3390, %v3389, %v3361
      %3407 = vrot.lane.b32.xlu0 %v3342, 95
      %v3408 = vpop.permute.xlu0 %3407
      %3409 = vrot.lane.b32.xlu0 %v3350, 95
      %v3410 = vpop.permute.xlu0 %3409
      %3411 = vrot.lane.b32.xlu0 %v3343, 95
      %v3412 = vpop.permute.xlu0 %3411
      %3413 = vrot.lane.b32.xlu0 %v3351, 95
      %v3414 = vpop.permute.xlu0 %3413
      %3415 = vrot.lane.b32.xlu0 %v3344, 95
      %v3416 = vpop.permute.xlu0 %3415
      %3417 = vrot.lane.b32.xlu0 %v3352, 95
      %v3418 = vpop.permute.xlu0 %3417
      %3419 = vrot.lane.b32.xlu0 %v3345, 95
      %v3420 = vpop.permute.xlu0 %3419
      %3421 = vrot.lane.b32.xlu0 %v3353, 95
      %v3422 = vpop.permute.xlu0 %3421
      %3423 = vrot.lane.b32.xlu0 %v3346, 95
      %v3424 = vpop.permute.xlu0 %3423
      %3425 = vrot.lane.b32.xlu0 %v3354, 95
      %v3426 = vpop.permute.xlu0 %3425
      %3427 = vrot.lane.b32.xlu0 %v3347, 95
      %v3428 = vpop.permute.xlu0 %3427
      %3429 = vrot.lane.b32.xlu0 %v3355, 95
      %v3430 = vpop.permute.xlu0 %3429
      %3431 = vrot.lane.b32.xlu0 %v3348, 95
      %v3432 = vpop.permute.xlu0 %3431
      %3433 = vrot.lane.b32.xlu0 %v3356, 95
      %v3434 = vpop.permute.xlu0 %3433
      %3435 = vrot.lane.b32.xlu0 %v3349, 95
      %v3436 = vpop.permute.xlu0 %3435
      %3437 = vrot.lane.b32.xlu0 %v3357, 95
      %v3438 = vpop.permute.xlu0 %3437
      %v3439 = vsel %vm3390, %v3432, %v3436
      %v3440 = vsel %vm3390, %v3434, %v3438
      %v3441 = vsel %vm3390, %v3428, %v3432
      %v3442 = vsel %vm3390, %v3430, %v3434
      %v3443 = vsel %vm3390, %v3424, %v3428
      %v3444 = vsel %vm3390, %v3426, %v3430
      %v3445 = vsel %vm3390, %v3420, %v3424
      %v3446 = vsel %vm3390, %v3422, %v3426
      %v3447 = vsel %vm3390, %v3416, %v3420
      %v3448 = vsel %vm3390, %v3418, %v3422
      %v3449 = vsel %vm3390, %v3412, %v3416
      %v3450 = vsel %vm3390, %v3414, %v3418
      %v3451 = vsel %vm3390, %v3408, %v3412
      %v3452 = vsel %vm3390, %v3410, %v3414
      %v3453 = vsel %vm3390, %v3436, %v3408
      %v3454 = vsel %vm3390, %v3438, %v3410
      %v3455 = vsel %vm3318, 1, 0
      %v3456 = vsel %vm3319, 1, 0
      %v3457 = vsel %vm3320, 1, 0
      %v3458 = vsel %vm3321, 1, 0
      %v3459 = vsel %vm3322, 1, 0
      %v3460 = vsel %vm3323, 1, 0
      %v3461 = vsel %vm3324, 1, 0
      %v3462 = vsel %vm3325, 1, 0
      %vm3463 = vcmp.eq.s32.totalorder %v3455, 1
      %vm3464 = vcmp.eq.s32.totalorder %v3456, 1
      %vm3465 = vcmp.eq.s32.totalorder %v3457, 1
      %vm3466 = vcmp.eq.s32.totalorder %v3458, 1
      %vm3467 = vcmp.eq.s32.totalorder %v3459, 1
      %vm3468 = vcmp.eq.s32.totalorder %v3460, 1
      %vm3469 = vcmp.eq.s32.totalorder %v3461, 1
      %vm3470 = vcmp.eq.s32.totalorder %v3462, 1
      %v3471 = vsel %vm3463, %v3403, 0.0
      %v3472 = vsel %vm3464, %v3401, 0.0
      %v3473 = vsel %vm3465, %v3399, 0.0
      %v3474 = vsel %vm3466, %v3397, 0.0
      %v3475 = vsel %vm3467, %v3395, 0.0
      %v3476 = vsel %vm3468, %v3393, 0.0
      %v3477 = vsel %vm3469, %v3391, 0.0
      %v3478 = vsel %vm3470, %v3405, 0.0
      %v3479 = vsel %vm3463, %v3404, 0.0
      %v3480 = vsel %vm3464, %v3402, 0.0
      %v3481 = vsel %vm3465, %v3400, 0.0
      %v3482 = vsel %vm3466, %v3398, 0.0
      %v3483 = vsel %vm3467, %v3396, 0.0
      %v3484 = vsel %vm3468, %v3394, 0.0
      %v3485 = vsel %vm3469, %v3392, 0.0
      %v3486 = vsel %vm3470, %v3406, 0.0
      %v3487 = vsel %vm3463, %v3451, 0.0
      %v3488 = vsel %vm3464, %v3449, 0.0
      %v3489 = vsel %vm3465, %v3447, 0.0
      %v3490 = vsel %vm3466, %v3445, 0.0
      %v3491 = vsel %vm3467, %v3443, 0.0
      %v3492 = vsel %vm3468, %v3441, 0.0
      %v3493 = vsel %vm3469, %v3439, 0.0
      %v3494 = vsel %vm3470, %v3453, 0.0
      %v3495 = vsel %vm3463, %v3452, 0.0
      %v3496 = vsel %vm3464, %v3450, 0.0
      %v3497 = vsel %vm3465, %v3448, 0.0
      %v3498 = vsel %vm3466, %v3446, 0.0
      %v3499 = vsel %vm3467, %v3444, 0.0
      %v3500 = vsel %vm3468, %v3442, 0.0
      %v3501 = vsel %vm3469, %v3440, 0.0
      %v3502 = vsel %vm3470, %v3454, 0.0
      %v3503 = vpack.c.bf16 %v3472, %v3471
      %v3504 = vpack.c.bf16 %v3474, %v3473
      %v3505 = vpack.c.bf16 %v3476, %v3475
      %v3506 = vpack.c.bf16 %v3478, %v3477
      %v3507 = vpack.c.bf16 %v3480, %v3479
      %v3508 = vpack.c.bf16 %v3482, %v3481
      %v3509 = vpack.c.bf16 %v3484, %v3483
      %v3510 = vpack.c.bf16 %v3486, %v3485
      %3511 = vst [vmem:[#allocation4 + $0x400] sm:$0xff] %v3503
      %3512 = vst [vmem:[#allocation4 + $0x408] sm:$0xff] %v3504
      %3513 = vst [vmem:[#allocation4 + $0x410] sm:$0xff] %v3505
      %3514 = vst [vmem:[#allocation4 + $0x418] sm:$0xff] %v3506
      %3515 = vst [vmem:[#allocation4 + $0x420] sm:$0xff] %v3507
      %3516 = vst [vmem:[#allocation4 + $0x428] sm:$0xff] %v3508
      %3517 = vst [vmem:[#allocation4 + $0x430] sm:$0xff] %v3509
      %3518 = vst [vmem:[#allocation4 + $0x438] sm:$0xff] %v3510
      %v3519 = vpack.c.bf16 %v3488, %v3487
      %v3520 = vpack.c.bf16 %v3490, %v3489
      %v3521 = vpack.c.bf16 %v3492, %v3491
      %v3522 = vpack.c.bf16 %v3494, %v3493
      %v3523 = vpack.c.bf16 %v3496, %v3495
      %v3524 = vpack.c.bf16 %v3498, %v3497
      %v3525 = vpack.c.bf16 %v3500, %v3499
      %v3526 = vpack.c.bf16 %v3502, %v3501
      %3527 = vst [vmem:[#allocation4 + $0x440] sm:$0xff] %v3519
      %3528 = vst [vmem:[#allocation4 + $0x448] sm:$0xff] %v3520
      %3529 = vst [vmem:[#allocation4 + $0x450] sm:$0xff] %v3521
      %3530 = vst [vmem:[#allocation4 + $0x458] sm:$0xff] %v3522
      %3531 = vst [vmem:[#allocation4 + $0x460] sm:$0xff] %v3523
      %3532 = vst [vmem:[#allocation4 + $0x468] sm:$0xff] %v3524
      %3533 = vst [vmem:[#allocation4 + $0x470] sm:$0xff] %v3525
      %3534 = vst [vmem:[#allocation4 + $0x478] sm:$0xff] %v3526
      %v3535 = vld [vmem:[%s4] sm:$0xff]
      %v3536 = vld [vmem:[%s4 + $0x8] sm:$0xf]
      %v3537 = vld [vmem:[%s4 + $0xc] sm:$0xff]
      %v3538 = vld [vmem:[%s4 + $0x14] sm:$0xf]
      %v3539 = vld [vmem:[#allocation4] sm:$0xff]
      %v3540 = vld [vmem:[#allocation4 + $0x8] sm:$0xff]
      %v3541 = vld [vmem:[#allocation4 + $0x10] sm:$0xff]
      %v3542 = vld [vmem:[#allocation4 + $0x18] sm:$0xff]
      %v3543 = vld [vmem:[#allocation4 + $0x20] sm:$0xff]
      %v3544 = vld [vmem:[#allocation4 + $0x28] sm:$0xff]
      %v3545 = vld [vmem:[#allocation4 + $0x30] sm:$0xff]
      %v3546 = vld [vmem:[#allocation4 + $0x38] sm:$0xff]
      %v3547 = vld [vmem:[#allocation4 + $0x40] sm:$0xff]
      %v3548 = vld [vmem:[#allocation4 + $0x48] sm:$0xff]
      %v3549 = vld [vmem:[#allocation4 + $0x50] sm:$0xff]
      %v3550 = vld [vmem:[#allocation4 + $0x58] sm:$0xff]
      %v3551 = vld [vmem:[#allocation4 + $0x60] sm:$0xff]
      %v3552 = vld [vmem:[#allocation4 + $0x68] sm:$0xff]
      %v3553 = vld [vmem:[#allocation4 + $0x70] sm:$0xff]
      %v3554 = vld [vmem:[#allocation4 + $0x78] sm:$0xff]
      %v3555 = vld [vmem:[#allocation4 + $0x80] sm:$0xff]
      %v3556 = vld [vmem:[#allocation4 + $0x88] sm:$0xff]
      %v3557 = vld [vmem:[#allocation4 + $0x90] sm:$0xff]
      %v3558 = vld [vmem:[#allocation4 + $0x98] sm:$0xff]
      %v3559 = vld [vmem:[#allocation4 + $0xa0] sm:$0xff]
      %v3560 = vld [vmem:[#allocation4 + $0xa8] sm:$0xff]
      %v3561 = vld [vmem:[#allocation4 + $0xb0] sm:$0xff]
      %v3562 = vld [vmem:[#allocation4 + $0xb8] sm:$0xff]
      %v3563 = vld [vmem:[#allocation4 + $0xc0] sm:$0xff]
      %v3564 = vld [vmem:[#allocation4 + $0xc8] sm:$0xff]
      %v3565 = vld [vmem:[#allocation4 + $0xd0] sm:$0xff]
      %v3566 = vld [vmem:[#allocation4 + $0xd8] sm:$0xff]
      %v3567 = vld [vmem:[#allocation4 + $0xe0] sm:$0xff]
      %v3568 = vld [vmem:[#allocation4 + $0xe8] sm:$0xff]
      %v3569 = vld [vmem:[#allocation4 + $0xf0] sm:$0xff]
      %v3570 = vld [vmem:[#allocation4 + $0xf8] sm:$0xff]
      %v3571 = vld [vmem:[#allocation4 + $0x100] sm:$0xff]
      %v3572 = vld [vmem:[#allocation4 + $0x108] sm:$0xff]
      %v3573 = vld [vmem:[#allocation4 + $0x110] sm:$0xff]
      %v3574 = vld [vmem:[#allocation4 + $0x118] sm:$0xff]
      %v3575 = vld [vmem:[#allocation4 + $0x120] sm:$0xff]
      %v3576 = vld [vmem:[#allocation4 + $0x128] sm:$0xff]
      %v3577 = vld [vmem:[#allocation4 + $0x130] sm:$0xff]
      %v3578 = vld [vmem:[#allocation4 + $0x138] sm:$0xff]
      %v3579 = vld [vmem:[#allocation4 + $0x140] sm:$0xff]
      %v3580 = vld [vmem:[#allocation4 + $0x148] sm:$0xff]
      %v3581 = vld [vmem:[#allocation4 + $0x150] sm:$0xff]
      %v3582 = vld [vmem:[#allocation4 + $0x158] sm:$0xff]
      %v3583 = vld [vmem:[#allocation4 + $0x160] sm:$0xff]
      %v3584 = vld [vmem:[#allocation4 + $0x168] sm:$0xff]
      %v3585 = vld [vmem:[#allocation4 + $0x170] sm:$0xff]
      %v3586 = vld [vmem:[#allocation4 + $0x178] sm:$0xff]
      %v3587 = vld [vmem:[#allocation4 + $0x180] sm:$0xff]
      %v3588 = vld [vmem:[#allocation4 + $0x188] sm:$0xff]
      %v3589 = vld [vmem:[#allocation4 + $0x190] sm:$0xff]
      %v3590 = vld [vmem:[#allocation4 + $0x198] sm:$0xff]
      %v3591 = vld [vmem:[#allocation4 + $0x1a0] sm:$0xff]
      %v3592 = vld [vmem:[#allocation4 + $0x1a8] sm:$0xff]
      %v3593 = vld [vmem:[#allocation4 + $0x1b0] sm:$0xff]
      %v3594 = vld [vmem:[#allocation4 + $0x1b8] sm:$0xff]
      %v3595 = vld [vmem:[#allocation4 + $0x1c0] sm:$0xff]
      %v3596 = vld [vmem:[#allocation4 + $0x1c8] sm:$0xff]
      %v3597 = vld [vmem:[#allocation4 + $0x1d0] sm:$0xff]
      %v3598 = vld [vmem:[#allocation4 + $0x1d8] sm:$0xff]
      %v3599 = vld [vmem:[#allocation4 + $0x1e0] sm:$0xff]
      %v3600 = vld [vmem:[#allocation4 + $0x1e8] sm:$0xff]
      %v3601 = vld [vmem:[#allocation4 + $0x1f0] sm:$0xff]
      %v3602 = vld [vmem:[#allocation4 + $0x1f8] sm:$0xff]
      %v3603 = vld [vmem:[#allocation4 + $0x200] sm:$0xff]
      %v3604 = vld [vmem:[#allocation4 + $0x208] sm:$0xff]
      %v3605 = vld [vmem:[#allocation4 + $0x210] sm:$0xff]
      %v3606 = vld [vmem:[#allocation4 + $0x218] sm:$0xff]
      %v3607 = vld [vmem:[#allocation4 + $0x220] sm:$0xff]
      %v3608 = vld [vmem:[#allocation4 + $0x228] sm:$0xff]
      %v3609 = vld [vmem:[#allocation4 + $0x230] sm:$0xff]
      %v3610 = vld [vmem:[#allocation4 + $0x238] sm:$0xff]
      %v3611 = vld [vmem:[#allocation4 + $0x240] sm:$0xff]
      %v3612 = vld [vmem:[#allocation4 + $0x248] sm:$0xff]
      %v3613 = vld [vmem:[#allocation4 + $0x250] sm:$0xff]
      %v3614 = vld [vmem:[#allocation4 + $0x258] sm:$0xff]
      %v3615 = vld [vmem:[#allocation4 + $0x260] sm:$0xff]
      %v3616 = vld [vmem:[#allocation4 + $0x268] sm:$0xff]
      %v3617 = vld [vmem:[#allocation4 + $0x270] sm:$0xff]
      %v3618 = vld [vmem:[#allocation4 + $0x278] sm:$0xff]
      %v3619 = vld [vmem:[#allocation4 + $0x280] sm:$0xff]
      %v3620 = vld [vmem:[#allocation4 + $0x288] sm:$0xff]
      %v3621 = vld [vmem:[#allocation4 + $0x290] sm:$0xff]
      %v3622 = vld [vmem:[#allocation4 + $0x298] sm:$0xff]
      %v3623 = vld [vmem:[#allocation4 + $0x2a0] sm:$0xff]
      %v3624 = vld [vmem:[#allocation4 + $0x2a8] sm:$0xff]
      %v3625 = vld [vmem:[#allocation4 + $0x2b0] sm:$0xff]
      %v3626 = vld [vmem:[#allocation4 + $0x2b8] sm:$0xff]
      %v3627 = vld [vmem:[#allocation4 + $0x2c0] sm:$0xff]
      %v3628 = vld [vmem:[#allocation4 + $0x2c8] sm:$0xff]
      %v3629 = vld [vmem:[#allocation4 + $0x2d0] sm:$0xff]
      %v3630 = vld [vmem:[#allocation4 + $0x2d8] sm:$0xff]
      %v3631 = vld [vmem:[#allocation4 + $0x2e0] sm:$0xff]
      %v3632 = vld [vmem:[#allocation4 + $0x2e8] sm:$0xff]
      %v3633 = vld [vmem:[#allocation4 + $0x2f0] sm:$0xff]
      %v3634 = vld [vmem:[#allocation4 + $0x2f8] sm:$0xff]
      %v3635 = vld [vmem:[#allocation4 + $0x300] sm:$0xff]
      %v3636 = vld [vmem:[#allocation4 + $0x308] sm:$0xff]
      %v3637 = vld [vmem:[#allocation4 + $0x310] sm:$0xff]
      %v3638 = vld [vmem:[#allocation4 + $0x318] sm:$0xff]
      %v3639 = vld [vmem:[#allocation4 + $0x320] sm:$0xff]
      %v3640 = vld [vmem:[#allocation4 + $0x328] sm:$0xff]
      %v3641 = vld [vmem:[#allocation4 + $0x330] sm:$0xff]
      %v3642 = vld [vmem:[#allocation4 + $0x338] sm:$0xff]
      %v3643 = vld [vmem:[#allocation4 + $0x340] sm:$0xff]
      %v3644 = vld [vmem:[#allocation4 + $0x348] sm:$0xff]
      %v3645 = vld [vmem:[#allocation4 + $0x350] sm:$0xff]
      %v3646 = vld [vmem:[#allocation4 + $0x358] sm:$0xff]
      %v3647 = vld [vmem:[#allocation4 + $0x360] sm:$0xff]
      %v3648 = vld [vmem:[#allocation4 + $0x368] sm:$0xff]
      %v3649 = vld [vmem:[#allocation4 + $0x370] sm:$0xff]
      %v3650 = vld [vmem:[#allocation4 + $0x378] sm:$0xff]
      %v3651 = vld [vmem:[#allocation4 + $0x380] sm:$0xff]
      %v3652 = vld [vmem:[#allocation4 + $0x388] sm:$0xff]
      %v3653 = vld [vmem:[#allocation4 + $0x390] sm:$0xff]
      %v3654 = vld [vmem:[#allocation4 + $0x398] sm:$0xff]
      %v3655 = vld [vmem:[#allocation4 + $0x3a0] sm:$0xff]
      %v3656 = vld [vmem:[#allocation4 + $0x3a8] sm:$0xff]
      %v3657 = vld [vmem:[#allocation4 + $0x3b0] sm:$0xff]
      %v3658 = vld [vmem:[#allocation4 + $0x3b8] sm:$0xff]
      %v3659 = vld [vmem:[#allocation4 + $0x3c0] sm:$0xff]
      %v3660 = vld [vmem:[#allocation4 + $0x3c8] sm:$0xff]
      %v3661 = vld [vmem:[#allocation4 + $0x3d0] sm:$0xff]
      %v3662 = vld [vmem:[#allocation4 + $0x3d8] sm:$0xff]
      %v3663 = vld [vmem:[#allocation4 + $0x3e0] sm:$0xff]
      %v3664 = vld [vmem:[#allocation4 + $0x3e8] sm:$0xff]
      %v3665 = vld [vmem:[#allocation4 + $0x3f0] sm:$0xff]
      %v3666 = vld [vmem:[#allocation4 + $0x3f8] sm:$0xff]
      %v3667 = vld [vmem:[#allocation4 + $0x400] sm:$0xff]
      %v3668 = vld [vmem:[#allocation4 + $0x408] sm:$0xff]
      %v3669 = vld [vmem:[#allocation4 + $0x410] sm:$0xff]
      %v3670 = vld [vmem:[#allocation4 + $0x418] sm:$0xff]
      %v3671 = vld [vmem:[#allocation4 + $0x420] sm:$0xff]
      %v3672 = vld [vmem:[#allocation4 + $0x428] sm:$0xff]
      %v3673 = vld [vmem:[#allocation4 + $0x430] sm:$0xff]
      %v3674 = vld [vmem:[#allocation4 + $0x438] sm:$0xff]
      %v3675 = vld [vmem:[#allocation4 + $0x440] sm:$0xff]
      %v3676 = vld [vmem:[#allocation4 + $0x448] sm:$0xff]
      %v3677 = vld [vmem:[#allocation4 + $0x450] sm:$0xff]
      %v3678 = vld [vmem:[#allocation4 + $0x458] sm:$0xff]
      %v3679 = vld [vmem:[#allocation4 + $0x460] sm:$0xff]
      %v3680 = vld [vmem:[#allocation4 + $0x468] sm:$0xff]
      %v3681 = vld [vmem:[#allocation4 + $0x470] sm:$0xff]
      %v3682 = vld [vmem:[#allocation4 + $0x478] sm:$0xff]
      %v3683 = vld [vmem:[%s5] sm:$0xff]
      %v3684 = vld [vmem:[%s5 + $0x8] sm:$0xff]
      %3686 = vset.pattern.permute.xlu0 0
      %3687 = vperm.xlu0 %3686, %v3683
      %v3688 = vpop.permute.xlu0 %3687
      %3691 = vset.pattern.permute.xlu0 0
      %3692 = vperm.xlu0 %3691, %v3684
      %v3693 = vpop.permute.xlu0 %3692
      %v3699 = vunpack.c.l.b16 %v3535
      %v3700 = vunpack.c.h.b16 %v3535
      %v3701 = vunpack.c.l.b16 %v3536
      %v3702 = vunpack.c.l.b16 %v3537
      %v3703 = vunpack.c.h.b16 %v3537
      %v3704 = vunpack.c.l.b16 %v3538
      %v3705 = vpack.c.b16 %v3702, %v3699
      %v3706 = vpack.c.b16 %v3703, %v3700
      %v3707 = vpack.c.b16 %v3704, %v3701
      %v3854 = vunpack.c.l.b16 %v3539
      %v3855 = vunpack.c.h.b16 %v3539
      %v3856 = vunpack.c.l.b16 %v3540
      %v3857 = vunpack.c.h.b16 %v3540
      %v3858 = vunpack.c.l.b16 %v3541
      %v3859 = vunpack.c.h.b16 %v3541
      %v3860 = vunpack.c.l.b16 %v3542
      %v3861 = vunpack.c.h.b16 %v3542
      %v3862 = vunpack.c.l.b16 %v3543
      %v3863 = vunpack.c.h.b16 %v3543
      %v3864 = vunpack.c.l.b16 %v3544
      %v3865 = vunpack.c.h.b16 %v3544
      %v3866 = vunpack.c.l.b16 %v3545
      %v3867 = vunpack.c.h.b16 %v3545
      %v3868 = vunpack.c.l.b16 %v3546
      %v3869 = vunpack.c.h.b16 %v3546
      %v3870 = vunpack.c.l.b16 %v3547
      %v3871 = vunpack.c.h.b16 %v3547
      %v3872 = vunpack.c.l.b16 %v3548
      %v3873 = vunpack.c.h.b16 %v3548
      %v3874 = vunpack.c.l.b16 %v3549
      %v3875 = vunpack.c.h.b16 %v3549
      %v3876 = vunpack.c.l.b16 %v3550
      %v3877 = vunpack.c.h.b16 %v3550
      %v3878 = vunpack.c.l.b16 %v3551
      %v3879 = vunpack.c.h.b16 %v3551
      %v3880 = vunpack.c.l.b16 %v3552
      %v3881 = vunpack.c.h.b16 %v3552
      %v3882 = vunpack.c.l.b16 %v3553
      %v3883 = vunpack.c.h.b16 %v3553
      %v3884 = vunpack.c.l.b16 %v3554
      %v3885 = vunpack.c.h.b16 %v3554
      %v3886 = vunpack.c.l.b16 %v3555
      %v3887 = vunpack.c.h.b16 %v3555
      %v3888 = vunpack.c.l.b16 %v3556
      %v3889 = vunpack.c.h.b16 %v3556
      %v3890 = vunpack.c.l.b16 %v3557
      %v3891 = vunpack.c.h.b16 %v3557
      %v3892 = vunpack.c.l.b16 %v3558
      %v3893 = vunpack.c.h.b16 %v3558
      %v3894 = vunpack.c.l.b16 %v3559
      %v3895 = vunpack.c.h.b16 %v3559
      %v3896 = vunpack.c.l.b16 %v3560
      %v3897 = vunpack.c.h.b16 %v3560
      %v3898 = vunpack.c.l.b16 %v3561
      %v3899 = vunpack.c.h.b16 %v3561
      %v3900 = vunpack.c.l.b16 %v3562
      %v3901 = vunpack.c.h.b16 %v3562
      %v3902 = vunpack.c.l.b16 %v3563
      %v3903 = vunpack.c.h.b16 %v3563
      %v3904 = vunpack.c.l.b16 %v3564
      %v3905 = vunpack.c.h.b16 %v3564
      %v3906 = vunpack.c.l.b16 %v3565
      %v3907 = vunpack.c.h.b16 %v3565
      %v3908 = vunpack.c.l.b16 %v3566
      %v3909 = vunpack.c.h.b16 %v3566
      %v3910 = vunpack.c.l.b16 %v3567
      %v3911 = vunpack.c.h.b16 %v3567
      %v3912 = vunpack.c.l.b16 %v3568
      %v3913 = vunpack.c.h.b16 %v3568
      %v3914 = vunpack.c.l.b16 %v3569
      %v3915 = vunpack.c.h.b16 %v3569
      %v3916 = vunpack.c.l.b16 %v3570
      %v3917 = vunpack.c.h.b16 %v3570
      %v3918 = vunpack.c.l.b16 %v3571
      %v3919 = vunpack.c.h.b16 %v3571
      %v3920 = vunpack.c.l.b16 %v3572
      %v3921 = vunpack.c.h.b16 %v3572
      %v3922 = vunpack.c.l.b16 %v3573
      %v3923 = vunpack.c.h.b16 %v3573
      %v3924 = vunpack.c.l.b16 %v3574
      %v3925 = vunpack.c.h.b16 %v3574
      %v3926 = vunpack.c.l.b16 %v3575
      %v3927 = vunpack.c.h.b16 %v3575
      %v3928 = vunpack.c.l.b16 %v3576
      %v3929 = vunpack.c.h.b16 %v3576
      %v3930 = vunpack.c.l.b16 %v3577
      %v3931 = vunpack.c.h.b16 %v3577
      %v3932 = vunpack.c.l.b16 %v3578
      %v3933 = vunpack.c.h.b16 %v3578
      %v3934 = vunpack.c.l.b16 %v3579
      %v3935 = vunpack.c.h.b16 %v3579
      %v3936 = vunpack.c.l.b16 %v3580
      %v3937 = vunpack.c.h.b16 %v3580
      %v3938 = vunpack.c.l.b16 %v3581
      %v3939 = vunpack.c.h.b16 %v3581
      %v3940 = vunpack.c.l.b16 %v3582
      %v3941 = vunpack.c.h.b16 %v3582
      %v3942 = vunpack.c.l.b16 %v3583
      %v3943 = vunpack.c.h.b16 %v3583
      %v3944 = vunpack.c.l.b16 %v3584
      %v3945 = vunpack.c.h.b16 %v3584
      %v3946 = vunpack.c.l.b16 %v3585
      %v3947 = vunpack.c.h.b16 %v3585
      %v3948 = vunpack.c.l.b16 %v3586
      %v3949 = vunpack.c.h.b16 %v3586
      %v3950 = vunpack.c.l.b16 %v3587
      %v3951 = vunpack.c.h.b16 %v3587
      %v3952 = vunpack.c.l.b16 %v3588
      %v3953 = vunpack.c.h.b16 %v3588
      %v3954 = vunpack.c.l.b16 %v3589
      %v3955 = vunpack.c.h.b16 %v3589
      %v3956 = vunpack.c.l.b16 %v3590
      %v3957 = vunpack.c.h.b16 %v3590
      %v3958 = vunpack.c.l.b16 %v3591
      %v3959 = vunpack.c.h.b16 %v3591
      %v3960 = vunpack.c.l.b16 %v3592
      %v3961 = vunpack.c.h.b16 %v3592
      %v3962 = vunpack.c.l.b16 %v3593
      %v3963 = vunpack.c.h.b16 %v3593
      %v3964 = vunpack.c.l.b16 %v3594
      %v3965 = vunpack.c.h.b16 %v3594
      %v3966 = vunpack.c.l.b16 %v3595
      %v3967 = vunpack.c.h.b16 %v3595
      %v3968 = vunpack.c.l.b16 %v3596
      %v3969 = vunpack.c.h.b16 %v3596
      %v3970 = vunpack.c.l.b16 %v3597
      %v3971 = vunpack.c.h.b16 %v3597
      %v3972 = vunpack.c.l.b16 %v3598
      %v3973 = vunpack.c.h.b16 %v3598
      %v3974 = vunpack.c.l.b16 %v3599
      %v3975 = vunpack.c.h.b16 %v3599
      %v3976 = vunpack.c.l.b16 %v3600
      %v3977 = vunpack.c.h.b16 %v3600
      %v3978 = vunpack.c.l.b16 %v3601
      %v3979 = vunpack.c.h.b16 %v3601
      %v3980 = vunpack.c.l.b16 %v3602
      %v3981 = vunpack.c.h.b16 %v3602
      %v3982 = vunpack.c.l.b16 %v3603
      %v3983 = vunpack.c.h.b16 %v3603
      %v3984 = vunpack.c.l.b16 %v3604
      %v3985 = vunpack.c.h.b16 %v3604
      %v3986 = vunpack.c.l.b16 %v3605
      %v3987 = vunpack.c.h.b16 %v3605
      %v3988 = vunpack.c.l.b16 %v3606
      %v3989 = vunpack.c.h.b16 %v3606
      %v3990 = vunpack.c.l.b16 %v3607
      %v3991 = vunpack.c.h.b16 %v3607
      %v3992 = vunpack.c.l.b16 %v3608
      %v3993 = vunpack.c.h.b16 %v3608
      %v3994 = vunpack.c.l.b16 %v3609
      %v3995 = vunpack.c.h.b16 %v3609
      %v3996 = vunpack.c.l.b16 %v3610
      %v3997 = vunpack.c.h.b16 %v3610
      %v3998 = vunpack.c.l.b16 %v3611
      %v3999 = vunpack.c.h.b16 %v3611
      %v4000 = vunpack.c.l.b16 %v3612
      %v4001 = vunpack.c.h.b16 %v3612
      %v4002 = vunpack.c.l.b16 %v3613
      %v4003 = vunpack.c.h.b16 %v3613
      %v4004 = vunpack.c.l.b16 %v3614
      %v4005 = vunpack.c.h.b16 %v3614
      %v4006 = vunpack.c.l.b16 %v3615
      %v4007 = vunpack.c.h.b16 %v3615
      %v4008 = vunpack.c.l.b16 %v3616
      %v4009 = vunpack.c.h.b16 %v3616
      %v4010 = vunpack.c.l.b16 %v3617
      %v4011 = vunpack.c.h.b16 %v3617
      %v4012 = vunpack.c.l.b16 %v3618
      %v4013 = vunpack.c.h.b16 %v3618
      %v4014 = vunpack.c.l.b16 %v3619
      %v4015 = vunpack.c.h.b16 %v3619
      %v4016 = vunpack.c.l.b16 %v3620
      %v4017 = vunpack.c.h.b16 %v3620
      %v4018 = vunpack.c.l.b16 %v3621
      %v4019 = vunpack.c.h.b16 %v3621
      %v4020 = vunpack.c.l.b16 %v3622
      %v4021 = vunpack.c.h.b16 %v3622
      %v4022 = vunpack.c.l.b16 %v3623
      %v4023 = vunpack.c.h.b16 %v3623
      %v4024 = vunpack.c.l.b16 %v3624
      %v4025 = vunpack.c.h.b16 %v3624
      %v4026 = vunpack.c.l.b16 %v3625
      %v4027 = vunpack.c.h.b16 %v3625
      %v4028 = vunpack.c.l.b16 %v3626
      %v4029 = vunpack.c.h.b16 %v3626
      %v4030 = vunpack.c.l.b16 %v3627
      %v4031 = vunpack.c.h.b16 %v3627
      %v4032 = vunpack.c.l.b16 %v3628
      %v4033 = vunpack.c.h.b16 %v3628
      %v4034 = vunpack.c.l.b16 %v3629
      %v4035 = vunpack.c.h.b16 %v3629
      %v4036 = vunpack.c.l.b16 %v3630
      %v4037 = vunpack.c.h.b16 %v3630
      %v4038 = vunpack.c.l.b16 %v3631
      %v4039 = vunpack.c.h.b16 %v3631
      %v4040 = vunpack.c.l.b16 %v3632
      %v4041 = vunpack.c.h.b16 %v3632
      %v4042 = vunpack.c.l.b16 %v3633
      %v4043 = vunpack.c.h.b16 %v3633
      %v4044 = vunpack.c.l.b16 %v3634
      %v4045 = vunpack.c.h.b16 %v3634
      %v4046 = vunpack.c.l.b16 %v3635
      %v4047 = vunpack.c.h.b16 %v3635
      %v4048 = vunpack.c.l.b16 %v3636
      %v4049 = vunpack.c.h.b16 %v3636
      %v4050 = vunpack.c.l.b16 %v3637
      %v4051 = vunpack.c.h.b16 %v3637
      %v4052 = vunpack.c.l.b16 %v3638
      %v4053 = vunpack.c.h.b16 %v3638
      %v4054 = vunpack.c.l.b16 %v3639
      %v4055 = vunpack.c.h.b16 %v3639
      %v4056 = vunpack.c.l.b16 %v3640
      %v4057 = vunpack.c.h.b16 %v3640
      %v4058 = vunpack.c.l.b16 %v3641
      %v4059 = vunpack.c.h.b16 %v3641
      %v4060 = vunpack.c.l.b16 %v3642
      %v4061 = vunpack.c.h.b16 %v3642
      %v4062 = vunpack.c.l.b16 %v3643
      %v4063 = vunpack.c.h.b16 %v3643
      %v4064 = vunpack.c.l.b16 %v3644
      %v4065 = vunpack.c.h.b16 %v3644
      %v4066 = vunpack.c.l.b16 %v3645
      %v4067 = vunpack.c.h.b16 %v3645
      %v4068 = vunpack.c.l.b16 %v3646
      %v4069 = vunpack.c.h.b16 %v3646
      %v4070 = vunpack.c.l.b16 %v3647
      %v4071 = vunpack.c.h.b16 %v3647
      %v4072 = vunpack.c.l.b16 %v3648
      %v4073 = vunpack.c.h.b16 %v3648
      %v4074 = vunpack.c.l.b16 %v3649
      %v4075 = vunpack.c.h.b16 %v3649
      %v4076 = vunpack.c.l.b16 %v3650
      %v4077 = vunpack.c.h.b16 %v3650
      %v4078 = vunpack.c.l.b16 %v3651
      %v4079 = vunpack.c.h.b16 %v3651
      %v4080 = vunpack.c.l.b16 %v3652
      %v4081 = vunpack.c.h.b16 %v3652
      %v4082 = vunpack.c.l.b16 %v3653
      %v4083 = vunpack.c.h.b16 %v3653
      %v4084 = vunpack.c.l.b16 %v3654
      %v4085 = vunpack.c.h.b16 %v3654
      %v4086 = vunpack.c.l.b16 %v3655
      %v4087 = vunpack.c.h.b16 %v3655
      %v4088 = vunpack.c.l.b16 %v3656
      %v4089 = vunpack.c.h.b16 %v3656
      %v4090 = vunpack.c.l.b16 %v3657
      %v4091 = vunpack.c.h.b16 %v3657
      %v4092 = vunpack.c.l.b16 %v3658
      %v4093 = vunpack.c.h.b16 %v3658
      %v4094 = vunpack.c.l.b16 %v3659
      %v4095 = vunpack.c.h.b16 %v3659
      %v4096 = vunpack.c.l.b16 %v3660
      %v4097 = vunpack.c.h.b16 %v3660
      %v4098 = vunpack.c.l.b16 %v3661
      %v4099 = vunpack.c.h.b16 %v3661
      %v4100 = vunpack.c.l.b16 %v3662
      %v4101 = vunpack.c.h.b16 %v3662
      %v4102 = vunpack.c.l.b16 %v3663
      %v4103 = vunpack.c.h.b16 %v3663
      %v4104 = vunpack.c.l.b16 %v3664
      %v4105 = vunpack.c.h.b16 %v3664
      %v4106 = vunpack.c.l.b16 %v3665
      %v4107 = vunpack.c.h.b16 %v3665
      %v4108 = vunpack.c.l.b16 %v3666
      %v4109 = vunpack.c.h.b16 %v3666
      %v4110 = vunpack.c.l.b16 %v3667
      %v4111 = vunpack.c.h.b16 %v3667
      %v4112 = vunpack.c.l.b16 %v3668
      %v4113 = vunpack.c.h.b16 %v3668
      %v4114 = vunpack.c.l.b16 %v3669
      %v4115 = vunpack.c.h.b16 %v3669
      %v4116 = vunpack.c.l.b16 %v3670
      %v4117 = vunpack.c.h.b16 %v3670
      %v4118 = vunpack.c.l.b16 %v3671
      %v4119 = vunpack.c.h.b16 %v3671
      %v4120 = vunpack.c.l.b16 %v3672
      %v4121 = vunpack.c.h.b16 %v3672
      %v4122 = vunpack.c.l.b16 %v3673
      %v4123 = vunpack.c.h.b16 %v3673
      %v4124 = vunpack.c.l.b16 %v3674
      %v4125 = vunpack.c.h.b16 %v3674
      %v4126 = vunpack.c.l.b16 %v3675
      %v4127 = vunpack.c.h.b16 %v3675
      %v4128 = vunpack.c.l.b16 %v3676
      %v4129 = vunpack.c.h.b16 %v3676
      %v4130 = vunpack.c.l.b16 %v3677
      %v4131 = vunpack.c.h.b16 %v3677
      %v4132 = vunpack.c.l.b16 %v3678
      %v4133 = vunpack.c.h.b16 %v3678
      %v4134 = vunpack.c.l.b16 %v3679
      %v4135 = vunpack.c.h.b16 %v3679
      %v4136 = vunpack.c.l.b16 %v3680
      %v4137 = vunpack.c.h.b16 %v3680
      %v4138 = vunpack.c.l.b16 %v3681
      %v4139 = vunpack.c.h.b16 %v3681
      %v4140 = vunpack.c.l.b16 %v3682
      %v4141 = vunpack.c.h.b16 %v3682
      %v4142 = vpack.c.b16 %v3862, %v3854
      %v4143 = vpack.c.b16 %v3863, %v3855
      %v4144 = vpack.c.b16 %v3864, %v3856
      %v4145 = vpack.c.b16 %v3865, %v3857
      %v4146 = vpack.c.b16 %v3866, %v3858
      %v4147 = vpack.c.b16 %v3867, %v3859
      %v4148 = vpack.c.b16 %v3868, %v3860
      %v4149 = vpack.c.b16 %v3869, %v3861
      %v4150 = vpack.c.b16 %v3878, %v3870
      %v4151 = vpack.c.b16 %v3879, %v3871
      %v4152 = vpack.c.b16 %v3880, %v3872
      %v4153 = vpack.c.b16 %v3881, %v3873
      %v4154 = vpack.c.b16 %v3882, %v3874
      %v4155 = vpack.c.b16 %v3883, %v3875
      %v4156 = vpack.c.b16 %v3884, %v3876
      %v4157 = vpack.c.b16 %v3885, %v3877
      %v4158 = vpack.c.b16 %v3894, %v3886
      %v4159 = vpack.c.b16 %v3895, %v3887
      %v4160 = vpack.c.b16 %v3896, %v3888
      %v4161 = vpack.c.b16 %v3897, %v3889
      %v4162 = vpack.c.b16 %v3898, %v3890
      %v4163 = vpack.c.b16 %v3899, %v3891
      %v4164 = vpack.c.b16 %v3900, %v3892
      %v4165 = vpack.c.b16 %v3901, %v3893
      %v4166 = vpack.c.b16 %v3910, %v3902
      %v4167 = vpack.c.b16 %v3911, %v3903
      %v4168 = vpack.c.b16 %v3912, %v3904
      %v4169 = vpack.c.b16 %v3913, %v3905
      %v4170 = vpack.c.b16 %v3914, %v3906
      %v4171 = vpack.c.b16 %v3915, %v3907
      %v4172 = vpack.c.b16 %v3916, %v3908
      %v4173 = vpack.c.b16 %v3917, %v3909
      %v4174 = vpack.c.b16 %v3926, %v3918
      %v4175 = vpack.c.b16 %v3927, %v3919
      %v4176 = vpack.c.b16 %v3928, %v3920
      %v4177 = vpack.c.b16 %v3929, %v3921
      %v4178 = vpack.c.b16 %v3930, %v3922
      %v4179 = vpack.c.b16 %v3931, %v3923
      %v4180 = vpack.c.b16 %v3932, %v3924
      %v4181 = vpack.c.b16 %v3933, %v3925
      %v4182 = vpack.c.b16 %v3942, %v3934
      %v4183 = vpack.c.b16 %v3943, %v3935
      %v4184 = vpack.c.b16 %v3944, %v3936
      %v4185 = vpack.c.b16 %v3945, %v3937
      %v4186 = vpack.c.b16 %v3946, %v3938
      %v4187 = vpack.c.b16 %v3947, %v3939
      %v4188 = vpack.c.b16 %v3948, %v3940
      %v4189 = vpack.c.b16 %v3949, %v3941
      %v4190 = vpack.c.b16 %v3958, %v3950
      %v4191 = vpack.c.b16 %v3959, %v3951
      %v4192 = vpack.c.b16 %v3960, %v3952
      %v4193 = vpack.c.b16 %v3961, %v3953
      %v4194 = vpack.c.b16 %v3962, %v3954
      %v4195 = vpack.c.b16 %v3963, %v3955
      %v4196 = vpack.c.b16 %v3964, %v3956
      %v4197 = vpack.c.b16 %v3965, %v3957
      %v4198 = vpack.c.b16 %v3974, %v3966
      %v4199 = vpack.c.b16 %v3975, %v3967
      %v4200 = vpack.c.b16 %v3976, %v3968
      %v4201 = vpack.c.b16 %v3977, %v3969
      %v4202 = vpack.c.b16 %v3978, %v3970
      %v4203 = vpack.c.b16 %v3979, %v3971
      %v4204 = vpack.c.b16 %v3980, %v3972
      %v4205 = vpack.c.b16 %v3981, %v3973
      %v4206 = vpack.c.b16 %v3990, %v3982
      %v4207 = vpack.c.b16 %v3991, %v3983
      %v4208 = vpack.c.b16 %v3992, %v3984
      %v4209 = vpack.c.b16 %v3993, %v3985
      %v4210 = vpack.c.b16 %v3994, %v3986
      %v4211 = vpack.c.b16 %v3995, %v3987
      %v4212 = vpack.c.b16 %v3996, %v3988
      %v4213 = vpack.c.b16 %v3997, %v3989
      %v4214 = vpack.c.b16 %v4006, %v3998
      %v4215 = vpack.c.b16 %v4007, %v3999
      %v4216 = vpack.c.b16 %v4008, %v4000
      %v4217 = vpack.c.b16 %v4009, %v4001
      %v4218 = vpack.c.b16 %v4010, %v4002
      %v4219 = vpack.c.b16 %v4011, %v4003
      %v4220 = vpack.c.b16 %v4012, %v4004
      %v4221 = vpack.c.b16 %v4013, %v4005
      %v4222 = vpack.c.b16 %v4022, %v4014
      %v4223 = vpack.c.b16 %v4023, %v4015
      %v4224 = vpack.c.b16 %v4024, %v4016
      %v4225 = vpack.c.b16 %v4025, %v4017
      %v4226 = vpack.c.b16 %v4026, %v4018
      %v4227 = vpack.c.b16 %v4027, %v4019
      %v4228 = vpack.c.b16 %v4028, %v4020
      %v4229 = vpack.c.b16 %v4029, %v4021
      %v4230 = vpack.c.b16 %v4038, %v4030
      %v4231 = vpack.c.b16 %v4039, %v4031
      %v4232 = vpack.c.b16 %v4040, %v4032
      %v4233 = vpack.c.b16 %v4041, %v4033
      %v4234 = vpack.c.b16 %v4042, %v4034
      %v4235 = vpack.c.b16 %v4043, %v4035
      %v4236 = vpack.c.b16 %v4044, %v4036
      %v4237 = vpack.c.b16 %v4045, %v4037
      %v4238 = vpack.c.b16 %v4054, %v4046
      %v4239 = vpack.c.b16 %v4055, %v4047
      %v4240 = vpack.c.b16 %v4056, %v4048
      %v4241 = vpack.c.b16 %v4057, %v4049
      %v4242 = vpack.c.b16 %v4058, %v4050
      %v4243 = vpack.c.b16 %v4059, %v4051
      %v4244 = vpack.c.b16 %v4060, %v4052
      %v4245 = vpack.c.b16 %v4061, %v4053
      %v4246 = vpack.c.b16 %v4070, %v4062
      %v4247 = vpack.c.b16 %v4071, %v4063
      %v4248 = vpack.c.b16 %v4072, %v4064
      %v4249 = vpack.c.b16 %v4073, %v4065
      %v4250 = vpack.c.b16 %v4074, %v4066
      %v4251 = vpack.c.b16 %v4075, %v4067
      %v4252 = vpack.c.b16 %v4076, %v4068
      %v4253 = vpack.c.b16 %v4077, %v4069
      %v4254 = vpack.c.b16 %v4086, %v4078
      %v4255 = vpack.c.b16 %v4087, %v4079
      %v4256 = vpack.c.b16 %v4088, %v4080
      %v4257 = vpack.c.b16 %v4089, %v4081
      %v4258 = vpack.c.b16 %v4090, %v4082
      %v4259 = vpack.c.b16 %v4091, %v4083
      %v4260 = vpack.c.b16 %v4092, %v4084
      %v4261 = vpack.c.b16 %v4093, %v4085
      %v4262 = vpack.c.b16 %v4102, %v4094
      %v4263 = vpack.c.b16 %v4103, %v4095
      %v4264 = vpack.c.b16 %v4104, %v4096
      %v4265 = vpack.c.b16 %v4105, %v4097
      %v4266 = vpack.c.b16 %v4106, %v4098
      %v4267 = vpack.c.b16 %v4107, %v4099
      %v4268 = vpack.c.b16 %v4108, %v4100
      %v4269 = vpack.c.b16 %v4109, %v4101
      %v4270 = vpack.c.b16 %v4118, %v4110
      %v4271 = vpack.c.b16 %v4119, %v4111
      %v4272 = vpack.c.b16 %v4120, %v4112
      %v4273 = vpack.c.b16 %v4121, %v4113
      %v4274 = vpack.c.b16 %v4122, %v4114
      %v4275 = vpack.c.b16 %v4123, %v4115
      %v4276 = vpack.c.b16 %v4124, %v4116
      %v4277 = vpack.c.b16 %v4125, %v4117
      %v4278 = vpack.c.b16 %v4134, %v4126
      %v4279 = vpack.c.b16 %v4135, %v4127
      %v4280 = vpack.c.b16 %v4136, %v4128
      %v4281 = vpack.c.b16 %v4137, %v4129
      %v4282 = vpack.c.b16 %v4138, %v4130
      %v4283 = vpack.c.b16 %v4139, %v4131
      %v4284 = vpack.c.b16 %v4140, %v4132
      %v4285 = vpack.c.b16 %v4141, %v4133
      %v4431 = vsel %vm1254, %v3707, 0
      %4433 = vmatpush.bf16.msra.mxu0 %v4198
      %4434 = vmatpush.bf16.msra.mxu0 %v4190
      %4435 = vmatpush.bf16.msra.mxu0 %v4182
      %4436 = vmatpush.bf16.msra.mxu0 %v4174
      %4437 = vmatpush.bf16.msra.mxu0 %v4166
      %4438 = vmatpush.bf16.msra.mxu0 %v4158
      %4439 = vmatpush.bf16.msra.mxu0 %v4150
      %4440 = vmatpush.bf16.msra.mxu0 %v4142
      %4441 = vmatmul.bf16.gmra.mxu0 %v3705
      %v4442 = vpop.f32.mrf.mxu0
      %v4443 = vadd.f32 %v3688, %v4442
      %v4444 = vpop.f32.mrf.mxu0
      %v4445 = vadd.f32 %v3693, %v4444
      %4446 = vdwg.mxu0
      %4447 = vmatpush.bf16.msra.mxu0 %v4262
      %4448 = vmatpush.bf16.msra.mxu0 %v4254
      %4449 = vmatpush.bf16.msra.mxu0 %v4246
      %4450 = vmatpush.bf16.msra.mxu0 %v4238
      %4451 = vmatpush.bf16.msra.mxu0 %v4230
      %4452 = vmatpush.bf16.msra.mxu0 %v4222
      %4453 = vmatpush.bf16.msra.mxu0 %v4214
      %4454 = vmatpush.bf16.msra.mxu0 %v4206
      %4455 = vmatmul.bf16.gmra.mxu0 %v3706
      %v4456 = vpop.f32.mrf.mxu0
      %v4457 = vadd.f32 %v4443, %v4456
      %v4458 = vpop.f32.mrf.mxu0
      %v4459 = vadd.f32 %v4445, %v4458
      %4460 = vdwg.mxu0
      %4461 = vmatpush.bf16.msra.mxu0 0
      %4462 = vmatpush.bf16.msra.mxu0 0
      %4463 = vmatpush.bf16.msra.mxu0 0
      %4464 = vmatpush.bf16.msra.mxu0 0
      %4465 = vmatpush.bf16.msra.mxu0 0
      %4466 = vmatpush.bf16.msra.mxu0 0
      %4467 = vmatpush.bf16.msra.mxu0 %v4278
      %4468 = vmatpush.bf16.msra.mxu0 %v4270
      %4469 = vmatmul.bf16.gmra.mxu0 %v4431
      %v4470 = vpop.f32.mrf.mxu0
      %v4471 = vadd.f32 %v4457, %v4470
      %v4472 = vpop.f32.mrf.mxu0
      %v4473 = vadd.f32 %v4459, %v4472
      %4474 = vdwg.mxu0
      %4475 = vmatpush.bf16.msra.mxu0 %v4199
      %4476 = vmatpush.bf16.msra.mxu0 %v4191
      %4477 = vmatpush.bf16.msra.mxu0 %v4183
      %4478 = vmatpush.bf16.msra.mxu0 %v4175
      %4479 = vmatpush.bf16.msra.mxu0 %v4167
      %4480 = vmatpush.bf16.msra.mxu0 %v4159
      %4481 = vmatpush.bf16.msra.mxu0 %v4151
      %4482 = vmatpush.bf16.msra.mxu0 %v4143
      %4483 = vmatmul.bf16.gmra.mxu0 %v3705
      %v4484 = vpop.f32.mrf.mxu0
      %v4485 = vadd.f32 %v3688, %v4484
      %v4486 = vpop.f32.mrf.mxu0
      %v4487 = vadd.f32 %v3693, %v4486
      %4488 = vdwg.mxu0
      %4489 = vmatpush.bf16.msra.mxu0 %v4263
      %4490 = vmatpush.bf16.msra.mxu0 %v4255
      %4491 = vmatpush.bf16.msra.mxu0 %v4247
      %4492 = vmatpush.bf16.msra.mxu0 %v4239
      %4493 = vmatpush.bf16.msra.mxu0 %v4231
      %4494 = vmatpush.bf16.msra.mxu0 %v4223
      %4495 = vmatpush.bf16.msra.mxu0 %v4215
      %4496 = vmatpush.bf16.msra.mxu0 %v4207
      %4497 = vmatmul.bf16.gmra.mxu0 %v3706
      %v4498 = vpop.f32.mrf.mxu0
      %v4499 = vadd.f32 %v4485, %v4498
      %v4500 = vpop.f32.mrf.mxu0
      %v4501 = vadd.f32 %v4487, %v4500
      %4502 = vdwg.mxu0
      %4503 = vmatpush.bf16.msra.mxu0 0
      %4504 = vmatpush.bf16.msra.mxu0 0
      %4505 = vmatpush.bf16.msra.mxu0 0
      %4506 = vmatpush.bf16.msra.mxu0 0
      %4507 = vmatpush.bf16.msra.mxu0 0
      %4508 = vmatpush.bf16.msra.mxu0 0
      %4509 = vmatpush.bf16.msra.mxu0 %v4279
      %4510 = vmatpush.bf16.msra.mxu0 %v4271
      %4511 = vmatmul.bf16.gmra.mxu0 %v4431
      %v4512 = vpop.f32.mrf.mxu0
      %v4513 = vadd.f32 %v4499, %v4512
      %v4514 = vpop.f32.mrf.mxu0
      %v4515 = vadd.f32 %v4501, %v4514
      %4516 = vdwg.mxu0
      %4517 = vmatpush.bf16.msra.mxu0 %v4200
      %4518 = vmatpush.bf16.msra.mxu0 %v4192
      %4519 = vmatpush.bf16.msra.mxu0 %v4184
      %4520 = vmatpush.bf16.msra.mxu0 %v4176
      %4521 = vmatpush.bf16.msra.mxu0 %v4168
      %4522 = vmatpush.bf16.msra.mxu0 %v4160
      %4523 = vmatpush.bf16.msra.mxu0 %v4152
      %4524 = vmatpush.bf16.msra.mxu0 %v4144
      %4525 = vmatmul.bf16.gmra.mxu0 %v3705
      %v4526 = vpop.f32.mrf.mxu0
      %v4527 = vadd.f32 %v3688, %v4526
      %v4528 = vpop.f32.mrf.mxu0
      %v4529 = vadd.f32 %v3693, %v4528
      %4530 = vdwg.mxu0
      %4531 = vmatpush.bf16.msra.mxu0 %v4264
      %4532 = vmatpush.bf16.msra.mxu0 %v4256
      %4533 = vmatpush.bf16.msra.mxu0 %v4248
      %4534 = vmatpush.bf16.msra.mxu0 %v4240
      %4535 = vmatpush.bf16.msra.mxu0 %v4232
      %4536 = vmatpush.bf16.msra.mxu0 %v4224
      %4537 = vmatpush.bf16.msra.mxu0 %v4216
      %4538 = vmatpush.bf16.msra.mxu0 %v4208
      %4539 = vmatmul.bf16.gmra.mxu0 %v3706
      %v4540 = vpop.f32.mrf.mxu0
      %v4541 = vadd.f32 %v4527, %v4540
      %v4542 = vpop.f32.mrf.mxu0
      %v4543 = vadd.f32 %v4529, %v4542
      %4544 = vdwg.mxu0
      %4545 = vmatpush.bf16.msra.mxu0 0
      %4546 = vmatpush.bf16.msra.mxu0 0
      %4547 = vmatpush.bf16.msra.mxu0 0
      %4548 = vmatpush.bf16.msra.mxu0 0
      %4549 = vmatpush.bf16.msra.mxu0 0
      %4550 = vmatpush.bf16.msra.mxu0 0
      %4551 = vmatpush.bf16.msra.mxu0 %v4280
      %4552 = vmatpush.bf16.msra.mxu0 %v4272
      %4553 = vmatmul.bf16.gmra.mxu0 %v4431
      %v4554 = vpop.f32.mrf.mxu0
      %v4555 = vadd.f32 %v4541, %v4554
      %v4556 = vpop.f32.mrf.mxu0
      %v4557 = vadd.f32 %v4543, %v4556
      %4558 = vdwg.mxu0
      %4559 = vmatpush.bf16.msra.mxu0 %v4201
      %4560 = vmatpush.bf16.msra.mxu0 %v4193
      %4561 = vmatpush.bf16.msra.mxu0 %v4185
      %4562 = vmatpush.bf16.msra.mxu0 %v4177
      %4563 = vmatpush.bf16.msra.mxu0 %v4169
      %4564 = vmatpush.bf16.msra.mxu0 %v4161
      %4565 = vmatpush.bf16.msra.mxu0 %v4153
      %4566 = vmatpush.bf16.msra.mxu0 %v4145
      %4567 = vmatmul.bf16.gmra.mxu0 %v3705
      %v4568 = vpop.f32.mrf.mxu0
      %v4569 = vadd.f32 %v3688, %v4568
      %v4570 = vpop.f32.mrf.mxu0
      %v4571 = vadd.f32 %v3693, %v4570
      %4572 = vdwg.mxu0
      %4573 = vmatpush.bf16.msra.mxu0 %v4265
      %4574 = vmatpush.bf16.msra.mxu0 %v4257
      %4575 = vmatpush.bf16.msra.mxu0 %v4249
      %4576 = vmatpush.bf16.msra.mxu0 %v4241
      %4577 = vmatpush.bf16.msra.mxu0 %v4233
      %4578 = vmatpush.bf16.msra.mxu0 %v4225
      %4579 = vmatpush.bf16.msra.mxu0 %v4217
      %4580 = vmatpush.bf16.msra.mxu0 %v4209
      %4581 = vmatmul.bf16.gmra.mxu0 %v3706
      %v4582 = vpop.f32.mrf.mxu0
      %v4583 = vadd.f32 %v4569, %v4582
      %v4584 = vpop.f32.mrf.mxu0
      %v4585 = vadd.f32 %v4571, %v4584
      %4586 = vdwg.mxu0
      %4587 = vmatpush.bf16.msra.mxu0 0
      %4588 = vmatpush.bf16.msra.mxu0 0
      %4589 = vmatpush.bf16.msra.mxu0 0
      %4590 = vmatpush.bf16.msra.mxu0 0
      %4591 = vmatpush.bf16.msra.mxu0 0
      %4592 = vmatpush.bf16.msra.mxu0 0
      %4593 = vmatpush.bf16.msra.mxu0 %v4281
      %4594 = vmatpush.bf16.msra.mxu0 %v4273
      %4595 = vmatmul.bf16.gmra.mxu0 %v4431
      %v4596 = vpop.f32.mrf.mxu0
      %v4597 = vadd.f32 %v4583, %v4596
      %v4598 = vpop.f32.mrf.mxu0
      %v4599 = vadd.f32 %v4585, %v4598
      %4600 = vdwg.mxu0
      %4601 = vmatpush.bf16.msra.mxu0 %v4202
      %4602 = vmatpush.bf16.msra.mxu0 %v4194
      %4603 = vmatpush.bf16.msra.mxu0 %v4186
      %4604 = vmatpush.bf16.msra.mxu0 %v4178
      %4605 = vmatpush.bf16.msra.mxu0 %v4170
      %4606 = vmatpush.bf16.msra.mxu0 %v4162
      %4607 = vmatpush.bf16.msra.mxu0 %v4154
      %4608 = vmatpush.bf16.msra.mxu0 %v4146
      %4609 = vmatmul.bf16.gmra.mxu0 %v3705
      %v4610 = vpop.f32.mrf.mxu0
      %v4611 = vadd.f32 %v3688, %v4610
      %v4612 = vpop.f32.mrf.mxu0
      %v4613 = vadd.f32 %v3693, %v4612
      %4614 = vdwg.mxu0
      %4615 = vmatpush.bf16.msra.mxu0 %v4266
      %4616 = vmatpush.bf16.msra.mxu0 %v4258
      %4617 = vmatpush.bf16.msra.mxu0 %v4250
      %4618 = vmatpush.bf16.msra.mxu0 %v4242
      %4619 = vmatpush.bf16.msra.mxu0 %v4234
      %4620 = vmatpush.bf16.msra.mxu0 %v4226
      %4621 = vmatpush.bf16.msra.mxu0 %v4218
      %4622 = vmatpush.bf16.msra.mxu0 %v4210
      %4623 = vmatmul.bf16.gmra.mxu0 %v3706
      %v4624 = vpop.f32.mrf.mxu0
      %v4625 = vadd.f32 %v4611, %v4624
      %v4626 = vpop.f32.mrf.mxu0
      %v4627 = vadd.f32 %v4613, %v4626
      %4628 = vdwg.mxu0
      %4629 = vmatpush.bf16.msra.mxu0 0
      %4630 = vmatpush.bf16.msra.mxu0 0
      %4631 = vmatpush.bf16.msra.mxu0 0
      %4632 = vmatpush.bf16.msra.mxu0 0
      %4633 = vmatpush.bf16.msra.mxu0 0
      %4634 = vmatpush.bf16.msra.mxu0 0
      %4635 = vmatpush.bf16.msra.mxu0 %v4282
      %4636 = vmatpush.bf16.msra.mxu0 %v4274
      %4637 = vmatmul.bf16.gmra.mxu0 %v4431
      %v4638 = vpop.f32.mrf.mxu0
      %v4639 = vadd.f32 %v4625, %v4638
      %v4640 = vpop.f32.mrf.mxu0
      %v4641 = vadd.f32 %v4627, %v4640
      %4642 = vdwg.mxu0
      %4643 = vmatpush.bf16.msra.mxu0 %v4203
      %4644 = vmatpush.bf16.msra.mxu0 %v4195
      %4645 = vmatpush.bf16.msra.mxu0 %v4187
      %4646 = vmatpush.bf16.msra.mxu0 %v4179
      %4647 = vmatpush.bf16.msra.mxu0 %v4171
      %4648 = vmatpush.bf16.msra.mxu0 %v4163
      %4649 = vmatpush.bf16.msra.mxu0 %v4155
      %4650 = vmatpush.bf16.msra.mxu0 %v4147
      %4651 = vmatmul.bf16.gmra.mxu0 %v3705
      %v4652 = vpop.f32.mrf.mxu0
      %v4653 = vadd.f32 %v3688, %v4652
      %v4654 = vpop.f32.mrf.mxu0
      %v4655 = vadd.f32 %v3693, %v4654
      %4656 = vdwg.mxu0
      %4657 = vmatpush.bf16.msra.mxu0 %v4267
      %4658 = vmatpush.bf16.msra.mxu0 %v4259
      %4659 = vmatpush.bf16.msra.mxu0 %v4251
      %4660 = vmatpush.bf16.msra.mxu0 %v4243
      %4661 = vmatpush.bf16.msra.mxu0 %v4235
      %4662 = vmatpush.bf16.msra.mxu0 %v4227
      %4663 = vmatpush.bf16.msra.mxu0 %v4219
      %4664 = vmatpush.bf16.msra.mxu0 %v4211
      %4665 = vmatmul.bf16.gmra.mxu0 %v3706
      %v4666 = vpop.f32.mrf.mxu0
      %v4667 = vadd.f32 %v4653, %v4666
      %v4668 = vpop.f32.mrf.mxu0
      %v4669 = vadd.f32 %v4655, %v4668
      %4670 = vdwg.mxu0
      %4671 = vmatpush.bf16.msra.mxu0 0
      %4672 = vmatpush.bf16.msra.mxu0 0
      %4673 = vmatpush.bf16.msra.mxu0 0
      %4674 = vmatpush.bf16.msra.mxu0 0
      %4675 = vmatpush.bf16.msra.mxu0 0
      %4676 = vmatpush.bf16.msra.mxu0 0
      %4677 = vmatpush.bf16.msra.mxu0 %v4283
      %4678 = vmatpush.bf16.msra.mxu0 %v4275
      %4679 = vmatmul.bf16.gmra.mxu0 %v4431
      %v4680 = vpop.f32.mrf.mxu0
      %v4681 = vadd.f32 %v4667, %v4680
      %v4682 = vpop.f32.mrf.mxu0
      %v4683 = vadd.f32 %v4669, %v4682
      %4684 = vdwg.mxu0
      %4685 = vmatpush.bf16.msra.mxu0 %v4204
      %4686 = vmatpush.bf16.msra.mxu0 %v4196
      %4687 = vmatpush.bf16.msra.mxu0 %v4188
      %4688 = vmatpush.bf16.msra.mxu0 %v4180
      %4689 = vmatpush.bf16.msra.mxu0 %v4172
      %4690 = vmatpush.bf16.msra.mxu0 %v4164
      %4691 = vmatpush.bf16.msra.mxu0 %v4156
      %4692 = vmatpush.bf16.msra.mxu0 %v4148
      %4693 = vmatmul.bf16.gmra.mxu0 %v3705
      %v4694 = vpop.f32.mrf.mxu0
      %v4695 = vadd.f32 %v3688, %v4694
      %v4696 = vpop.f32.mrf.mxu0
      %v4697 = vadd.f32 %v3693, %v4696
      %4698 = vdwg.mxu0
      %4699 = vmatpush.bf16.msra.mxu0 %v4268
      %4700 = vmatpush.bf16.msra.mxu0 %v4260
      %4701 = vmatpush.bf16.msra.mxu0 %v4252
      %4702 = vmatpush.bf16.msra.mxu0 %v4244
      %4703 = vmatpush.bf16.msra.mxu0 %v4236
      %4704 = vmatpush.bf16.msra.mxu0 %v4228
      %4705 = vmatpush.bf16.msra.mxu0 %v4220
      %4706 = vmatpush.bf16.msra.mxu0 %v4212
      %4707 = vmatmul.bf16.gmra.mxu0 %v3706
      %v4708 = vpop.f32.mrf.mxu0
      %v4709 = vadd.f32 %v4695, %v4708
      %v4710 = vpop.f32.mrf.mxu0
      %v4711 = vadd.f32 %v4697, %v4710
      %4712 = vdwg.mxu0
      %4713 = vmatpush.bf16.msra.mxu0 0
      %4714 = vmatpush.bf16.msra.mxu0 0
      %4715 = vmatpush.bf16.msra.mxu0 0
      %4716 = vmatpush.bf16.msra.mxu0 0
      %4717 = vmatpush.bf16.msra.mxu0 0
      %4718 = vmatpush.bf16.msra.mxu0 0
      %4719 = vmatpush.bf16.msra.mxu0 %v4284
      %4720 = vmatpush.bf16.msra.mxu0 %v4276
      %4721 = vmatmul.bf16.gmra.mxu0 %v4431
      %v4722 = vpop.f32.mrf.mxu0
      %v4723 = vadd.f32 %v4709, %v4722
      %v4724 = vpop.f32.mrf.mxu0
      %v4725 = vadd.f32 %v4711, %v4724
      %4726 = vdwg.mxu0
      %4727 = vmatpush.bf16.msra.mxu0 %v4205
      %4728 = vmatpush.bf16.msra.mxu0 %v4197
      %4729 = vmatpush.bf16.msra.mxu0 %v4189
      %4730 = vmatpush.bf16.msra.mxu0 %v4181
      %4731 = vmatpush.bf16.msra.mxu0 %v4173
      %4732 = vmatpush.bf16.msra.mxu0 %v4165
      %4733 = vmatpush.bf16.msra.mxu0 %v4157
      %4734 = vmatpush.bf16.msra.mxu0 %v4149
      %4735 = vmatmul.bf16.gmra.mxu0 %v3705
      %v4736 = vpop.f32.mrf.mxu0
      %v4737 = vadd.f32 %v3688, %v4736
      %v4738 = vpop.f32.mrf.mxu0
      %v4739 = vadd.f32 %v3693, %v4738
      %4740 = vdwg.mxu0
      %4741 = vmatpush.bf16.msra.mxu0 %v4269
      %4742 = vmatpush.bf16.msra.mxu0 %v4261
      %4743 = vmatpush.bf16.msra.mxu0 %v4253
      %4744 = vmatpush.bf16.msra.mxu0 %v4245
      %4745 = vmatpush.bf16.msra.mxu0 %v4237
      %4746 = vmatpush.bf16.msra.mxu0 %v4229
      %4747 = vmatpush.bf16.msra.mxu0 %v4221
      %4748 = vmatpush.bf16.msra.mxu0 %v4213
      %4749 = vmatmul.bf16.gmra.mxu0 %v3706
      %v4750 = vpop.f32.mrf.mxu0
      %v4751 = vadd.f32 %v4737, %v4750
      %v4752 = vpop.f32.mrf.mxu0
      %v4753 = vadd.f32 %v4739, %v4752
      %4754 = vdwg.mxu0
      %4755 = vmatpush.bf16.msra.mxu0 0
      %4756 = vmatpush.bf16.msra.mxu0 0
      %4757 = vmatpush.bf16.msra.mxu0 0
      %4758 = vmatpush.bf16.msra.mxu0 0
      %4759 = vmatpush.bf16.msra.mxu0 0
      %4760 = vmatpush.bf16.msra.mxu0 0
      %4761 = vmatpush.bf16.msra.mxu0 %v4285
      %4762 = vmatpush.bf16.msra.mxu0 %v4277
      %4763 = vmatmul.bf16.gmra.mxu0 %v4431
      %v4764 = vpop.f32.mrf.mxu0
      %v4765 = vadd.f32 %v4751, %v4764
      %v4766 = vpop.f32.mrf.mxu0
      %v4767 = vadd.f32 %v4753, %v4766
      %4768 = vdwg.mxu0
      %v4769 = vmul.f32 %v4471, 0.5
      %v4770 = vmul.f32 %v4513, 0.5
      %v4771 = vmul.f32 %v4555, 0.5
      %v4772 = vmul.f32 %v4597, 0.5
      %v4773 = vmul.f32 %v4639, 0.5
      %v4774 = vmul.f32 %v4681, 0.5
      %v4775 = vmul.f32 %v4723, 0.5
      %v4776 = vmul.f32 %v4765, 0.5
      %v4777 = vmul.f32 %v4473, 0.5
      %v4778 = vmul.f32 %v4515, 0.5
      %v4779 = vmul.f32 %v4557, 0.5
      %v4780 = vmul.f32 %v4599, 0.5
      %v4781 = vmul.f32 %v4641, 0.5
      %v4782 = vmul.f32 %v4683, 0.5
      %v4783 = vmul.f32 %v4725, 0.5
      %v4784 = vmul.f32 %v4767, 0.5
      %v4785 = vmul.f32 %v4471, 0.044715
      %v4786 = vmul.f32 %v4513, 0.044715
      %v4787 = vmul.f32 %v4555, 0.044715
      %v4788 = vmul.f32 %v4597, 0.044715
      %v4789 = vmul.f32 %v4639, 0.044715
      %v4790 = vmul.f32 %v4681, 0.044715
      %v4791 = vmul.f32 %v4723, 0.044715
      %v4792 = vmul.f32 %v4765, 0.044715
      %v4793 = vmul.f32 %v4473, 0.044715
      %v4794 = vmul.f32 %v4515, 0.044715
      %v4795 = vmul.f32 %v4557, 0.044715
      %v4796 = vmul.f32 %v4599, 0.044715
      %v4797 = vmul.f32 %v4641, 0.044715
      %v4798 = vmul.f32 %v4683, 0.044715
      %v4799 = vmul.f32 %v4725, 0.044715
      %v4800 = vmul.f32 %v4767, 0.044715
      %v4801 = vmul.f32 %v4785, %v4471
      %v4802 = vmul.f32 %v4786, %v4513
      %v4803 = vmul.f32 %v4787, %v4555
      %v4804 = vmul.f32 %v4788, %v4597
      %v4805 = vmul.f32 %v4789, %v4639
      %v4806 = vmul.f32 %v4790, %v4681
      %v4807 = vmul.f32 %v4791, %v4723
      %v4808 = vmul.f32 %v4792, %v4765
      %v4809 = vmul.f32 %v4793, %v4473
      %v4810 = vmul.f32 %v4794, %v4515
      %v4811 = vmul.f32 %v4795, %v4557
      %v4812 = vmul.f32 %v4796, %v4599
      %v4813 = vmul.f32 %v4797, %v4641
      %v4814 = vmul.f32 %v4798, %v4683
      %v4815 = vmul.f32 %v4799, %v4725
      %v4816 = vmul.f32 %v4800, %v4767
      %v4817 = vmul.f32 %v4801, %v4471
      %v4818 = vmul.f32 %v4802, %v4513
      %v4819 = vmul.f32 %v4803, %v4555
      %v4820 = vmul.f32 %v4804, %v4597
      %v4821 = vmul.f32 %v4805, %v4639
      %v4822 = vmul.f32 %v4806, %v4681
      %v4823 = vmul.f32 %v4807, %v4723
      %v4824 = vmul.f32 %v4808, %v4765
      %v4825 = vmul.f32 %v4809, %v4473
      %v4826 = vmul.f32 %v4810, %v4515
      %v4827 = vmul.f32 %v4811, %v4557
      %v4828 = vmul.f32 %v4812, %v4599
      %v4829 = vmul.f32 %v4813, %v4641
      %v4830 = vmul.f32 %v4814, %v4683
      %v4831 = vmul.f32 %v4815, %v4725
      %v4832 = vmul.f32 %v4816, %v4767
      %v4833 = vadd.f32 %v4471, %v4817
      %v4834 = vadd.f32 %v4513, %v4818
      %v4835 = vadd.f32 %v4555, %v4819
      %v4836 = vadd.f32 %v4597, %v4820
      %v4837 = vadd.f32 %v4639, %v4821
      %v4838 = vadd.f32 %v4681, %v4822
      %v4839 = vadd.f32 %v4723, %v4823
      %v4840 = vadd.f32 %v4765, %v4824
      %v4841 = vadd.f32 %v4473, %v4825
      %v4842 = vadd.f32 %v4515, %v4826
      %v4843 = vadd.f32 %v4557, %v4827
      %v4844 = vadd.f32 %v4599, %v4828
      %v4845 = vadd.f32 %v4641, %v4829
      %v4846 = vadd.f32 %v4683, %v4830
      %v4847 = vadd.f32 %v4725, %v4831
      %v4848 = vadd.f32 %v4767, %v4832
      %v4849 = vmul.f32 %v4833, 0.7978846
      %v4850 = vmul.f32 %v4834, 0.7978846
      %v4851 = vmul.f32 %v4835, 0.7978846
      %v4852 = vmul.f32 %v4836, 0.7978846
      %v4853 = vmul.f32 %v4837, 0.7978846
      %v4854 = vmul.f32 %v4838, 0.7978846
      %v4855 = vmul.f32 %v4839, 0.7978846
      %v4856 = vmul.f32 %v4840, 0.7978846
      %v4857 = vmul.f32 %v4841, 0.7978846
      %v4858 = vmul.f32 %v4842, 0.7978846
      %v4859 = vmul.f32 %v4843, 0.7978846
      %v4860 = vmul.f32 %v4844, 0.7978846
      %v4861 = vmul.f32 %v4845, 0.7978846
      %v4862 = vmul.f32 %v4846, 0.7978846
      %v4863 = vmul.f32 %v4847, 0.7978846
      %v4864 = vmul.f32 %v4848, 0.7978846
      %v4865 = vtanh.pop %v4849
      %v4866 = vtanh.pop %v4850
      %v4867 = vtanh.pop %v4851
      %v4868 = vtanh.pop %v4852
      %v4869 = vtanh.pop %v4853
      %v4870 = vtanh.pop %v4854
      %v4871 = vtanh.pop %v4855
      %v4872 = vtanh.pop %v4856
      %v4873 = vtanh.pop %v4857
      %v4874 = vtanh.pop %v4858
      %v4875 = vtanh.pop %v4859
      %v4876 = vtanh.pop %v4860
      %v4877 = vtanh.pop %v4861
      %v4878 = vtanh.pop %v4862
      %v4879 = vtanh.pop %v4863
      %v4880 = vtanh.pop %v4864
      %v4881 = vadd.f32 %v4865, 1.0
      %v4882 = vadd.f32 %v4866, 1.0
      %v4883 = vadd.f32 %v4867, 1.0
      %v4884 = vadd.f32 %v4868, 1.0
      %v4885 = vadd.f32 %v4869, 1.0
      %v4886 = vadd.f32 %v4870, 1.0
      %v4887 = vadd.f32 %v4871, 1.0
      %v4888 = vadd.f32 %v4872, 1.0
      %v4889 = vadd.f32 %v4873, 1.0
      %v4890 = vadd.f32 %v4874, 1.0
      %v4891 = vadd.f32 %v4875, 1.0
      %v4892 = vadd.f32 %v4876, 1.0
      %v4893 = vadd.f32 %v4877, 1.0
      %v4894 = vadd.f32 %v4878, 1.0
      %v4895 = vadd.f32 %v4879, 1.0
      %v4896 = vadd.f32 %v4880, 1.0
      %v4897 = vmul.f32 %v4769, %v4881
      %v4898 = vmul.f32 %v4770, %v4882
      %v4899 = vmul.f32 %v4771, %v4883
      %v4900 = vmul.f32 %v4772, %v4884
      %v4901 = vmul.f32 %v4773, %v4885
      %v4902 = vmul.f32 %v4774, %v4886
      %v4903 = vmul.f32 %v4775, %v4887
      %v4904 = vmul.f32 %v4776, %v4888
      %v4905 = vmul.f32 %v4777, %v4889
      %v4906 = vmul.f32 %v4778, %v4890
      %v4907 = vmul.f32 %v4779, %v4891
      %v4908 = vmul.f32 %v4780, %v4892
      %v4909 = vmul.f32 %v4781, %v4893
      %v4910 = vmul.f32 %v4782, %v4894
      %v4911 = vmul.f32 %v4783, %v4895
      %v4912 = vmul.f32 %v4784, %v4896
      %4913 = vst [vmem:[%s271] sm:$0xff] %v4897
      %4914 = vst [vmem:[%s271 + $0x8] sm:$0xff] %v4898
      %4915 = vst [vmem:[%s271 + $0x10] sm:$0xff] %v4899
      %4916 = vst [vmem:[%s271 + $0x18] sm:$0xff] %v4900
      %4917 = vst [vmem:[%s271 + $0x20] sm:$0xff] %v4901
      %4918 = vst [vmem:[%s271 + $0x28] sm:$0xff] %v4902
      %4919 = vst [vmem:[%s271 + $0x30] sm:$0xff] %v4903
      %4920 = vst [vmem:[%s271 + $0x38] sm:$0xff] %v4904
      %4921 = vst [vmem:[%s271 + $0x40] sm:$0xff] %v4905
      %4922 = vst [vmem:[%s271 + $0x48] sm:$0xff] %v4906
      %4923 = vst [vmem:[%s271 + $0x50] sm:$0xff] %v4907
      %4924 = vst [vmem:[%s271 + $0x58] sm:$0xff] %v4908
      %4925 = vst [vmem:[%s271 + $0x60] sm:$0xff] %v4909
      %4926 = vst [vmem:[%s271 + $0x68] sm:$0xff] %v4910
      %4927 = vst [vmem:[%s271 + $0x70] sm:$0xff] %v4911
      %4928 = vst [vmem:[%s271 + $0x78] sm:$0xff] %v4912
      %p4929 = scmp.lt.s32.totalorder %s17, 1
      %s4930 = scalar_select %p4929, %s17, 1
      %s4931 = smul.addr %s4930, 16
      %s4932 = smul.addr %s4931, 8
      %s4933 = scalar_lea.vmem %s6, %s4932
      // Predicated region
      $region45: #{upblock_forward.1} parent=43 // pred_check
        %p4934 = pneg %p171
      $region46: #{upblock_forward.1} parent=43 // pred_check_branch
        %4936 = sbr.rel (%p4934) target = $region48
      $region47: #{upblock_forward.1} parent=43 // pred_region
        _
      $region48: #{upblock_forward.1} parent=43 // pred_fallthru
        _
    $region44: #{upblock_forward.1} parent=5 // pred_fallthru
      _
    %p4937 = scmp.le.s32.totalorder 2, %s12
    // Predicated region
    $region49: #{upblock_forward.1} parent=5 // pred_check
      %p4938 = pneg %p4937
    $region50: #{upblock_forward.1} parent=5 // pred_check_branch
      %4940 = sbr.rel (%p4938) target = $region52
    $region51: #{upblock_forward.1} parent=5 // pred_region
      %s4941 = ssub.s32 %s12, 2
      // Predicated region
      $region53: #{upblock_forward.1} parent=51 // pred_check
        %p4942 = pneg %p177
      $region54: #{upblock_forward.1} parent=51 // pred_check_branch
        %4944 = sbr.rel (%p4942) target = $region56
      $region55: #{upblock_forward.1} parent=51 // pred_region
        %p4945 = scmp.lt.s32.totalorder %s18, 1
        %s4946 = scalar_select %p4945, %s18, 1
        %s4947 = smul.addr %s4946, 16
        %s4948 = smul.addr %s4947, 8
        %s4949 = scalar_lea.vmem %s6, %s4948
      $region56: #{upblock_forward.1} parent=51 // pred_fallthru
        _
    $region52: #{upblock_forward.1} parent=5 // pred_fallthru
      _
  $region6: #{upblock_forward.1} parent=0 // loop_footer
    %s16 = sadd.s32 1, %s12
  $region7: #{upblock_forward.1} parent=0 // loop_footer_branch
    %11 = sbr.rel target = $region3
  $region8: #{upblock_forward.1} parent=0 // loop_exit
    _

</llo_original>
